<compile_context>
chip_gen: v7x
topology: tpu7x:2x2x1
jax: 0.10.0
libtpu: 0.0.40
codegen_flags: <defaults>
</compile_context>

<pallas_src>
import functools

import jax
import jax.numpy as jnp
from jax.experimental import pallas as pl
from jax.experimental.pallas import tpu as pltpu


_EPS = 1e-5


# ----------------------------- fused Pallas kernel -----------------------------

def _ms_tcn_kernel(x_ref, wpw_ref, vec_ref, woff_ref, o_ref, ypad_ref,
                   *, T, V, pad, offsets):
    """One grid step = one sample (T*V rows); all six branches fused.

    x_ref    : (T*V, Cin)        input rows (channels-last, one sample)
    wpw_ref  : (Cin, C)          fused 1x1 weights for all branches, BN1 folded
    vec_ref  : (8, C)            packed per-column vectors:
                                 row0 bias(pw+BN1), row1 relu_mask, row2 bt(BN2),
                                 row3 mp_scale, row4 mp_shift, row5 plain_mask
    woff_ref : (n_off, C, C)     block-diag temporal weights per temporal offset
                                 (dilated branches only), BN2 folded
    o_ref    : (T*V, C)          concatenated output rows (lane-dense slab)
    ypad_ref : ((T+2*pad)*V, C)  VMEM scratch: T-zero-padded stage-1 output
    """
    TV = T * V
    C = o_ref.shape[-1]

    vecs = vec_ref[...]                                    # (8, C), loaded once
    bpw, rmask, bt = vecs[0:1], vecs[1:2], vecs[2:3]
    mps, mpsh, pmask = vecs[3:4], vecs[4:5], vecs[5:6]

    # ---- stage 1: fused 1x1 conv (+bias, BN1 folded) for all branches ----
    y = jnp.dot(x_ref[...], wpw_ref[...], preferred_element_type=jnp.float32) + bpw
    # masked ReLU: relu(y) = y - min(y, 0); rmask selects branches with a ReLU
    y = y - rmask * jnp.minimum(y, 0.0)

    # ---- stash into T-zero-padded VMEM scratch (one T step == V rows) ----
    ypad_ref[pl.ds(0, pad * V), :] = jnp.zeros((pad * V, C), jnp.float32)
    ypad_ref[pl.ds((pad + T) * V, pad * V), :] = jnp.zeros((pad * V, C), jnp.float32)
    ypad_ref[pl.ds(pad * V, TV), :] = y

    # ---- stage 2a: dilated temporal convs, regrouped per distinct offset into
    #      block-diagonal matmuls over the full channel width (no lane slicing) ----
    acc = jnp.zeros((TV, C), jnp.float32)
    for oi, off in enumerate(offsets):                     # static loop, static slices
        view = y if off == 0 else ypad_ref[pl.ds((pad + off) * V, TV), :]
        acc = acc + jnp.dot(view, woff_ref[oi], preferred_element_type=jnp.float32)

    # ---- stage 2b: maxpool branch: temporal max over {-1, 0, +1} ----
    # zero padding == -inf padding here because stage-1 output is post-ReLU (>= 0)
    v0 = ypad_ref[pl.ds((pad - 1) * V, TV), :]
    v2 = ypad_ref[pl.ds((pad + 1) * V, TV), :]
    mp = jnp.maximum(jnp.maximum(v0, y), v2)

    # ---- assemble: dilated(+bias) | maxpool (masked BN2 affine) | plain passthrough ----
    out = acc + bt + mp * mps + mpsh + y * pmask
    o_ref[...] = out.astype(o_ref.dtype)


def _full_spec(shape):
    nd = len(shape)
    return pl.BlockSpec(shape, lambda i, _nd=nd: (0,) * _nd)


def ms_tcn_fused_call(x2d, fused, *, N, T, V):
    """x2d: (N*T*V, Cin) channels-last rows -> (N*T*V, 6*bc)."""
    TV = T * V
    Cin = x2d.shape[1]
    C = fused["Wpw"].shape[1]
    pad = fused["pad"]
    offsets = fused["offsets"]

    kernel = functools.partial(_ms_tcn_kernel, T=T, V=V, pad=pad, offsets=offsets)

    return pl.pallas_call(
        kernel,
        grid=(N,),
        in_specs=[
            pl.BlockSpec((TV, Cin), lambda i: (i, 0)),     # tiled over samples
            _full_spec(fused["Wpw"].shape),
            _full_spec(fused["vecs"].shape),
            _full_spec(fused["Woff"].shape),
        ],
        out_specs=pl.BlockSpec((TV, C), lambda i: (i, 0)),
        out_shape=jax.ShapeDtypeStruct((N * TV, C), jnp.float32),
        scratch_shapes=[pltpu.VMEM(((T + 2 * pad) * V, C), jnp.float32)],
        compiler_params=pltpu.CompilerParams(dimension_semantics=("parallel",)),
    )(x2d, fused["Wpw"], fused["vecs"], fused["Woff"])


# ------------------------------ params & folding ------------------------------

def init_params(key, in_channels, out_channels, kernel_size=3, dilations=(1, 2, 3, 4)):
    num_branches = len(dilations) + 2
    assert out_channels % num_branches == 0, "# out channels should be multiples of # branches"
    bc = out_channels // num_branches
    keys = iter(jax.random.split(key, 64))

    def kaiming(k, shape, fan_out):
        return jax.random.normal(k, shape, jnp.float32) * jnp.sqrt(2.0 / fan_out)

    def bn_gamma(k, n):
        return 1.0 + 0.02 * jax.random.normal(k, (n,), jnp.float32)

    branches = []
    for _d in dilations:  # dilated temporal-conv branches
        branches.append(dict(
            pw_w=kaiming(next(keys), (in_channels, bc), bc * 1 * 1),
            pw_b=jnp.zeros((bc,), jnp.float32),
            bn1_g=bn_gamma(next(keys), bc), bn1_b=jnp.zeros((bc,), jnp.float32),
            t_w=kaiming(next(keys), (kernel_size, bc, bc), bc * kernel_size * 1),
            t_b=jnp.zeros((bc,), jnp.float32),
            bn2_g=bn_gamma(next(keys), bc), bn2_b=jnp.zeros((bc,), jnp.float32),
        ))
    branches.append(dict(  # max-pool branch
        pw_w=kaiming(next(keys), (in_channels, bc), bc),
        pw_b=jnp.zeros((bc,), jnp.float32),
        bn1_g=bn_gamma(next(keys), bc), bn1_b=jnp.zeros((bc,), jnp.float32),
        bn2_g=bn_gamma(next(keys), bc), bn2_b=jnp.zeros((bc,), jnp.float32),
    ))
    branches.append(dict(  # plain 1x1 branch
        pw_w=kaiming(next(keys), (in_channels, bc), bc),
        pw_b=jnp.zeros((bc,), jnp.float32),
        bn1_g=bn_gamma(next(keys), bc), bn1_b=jnp.zeros((bc,), jnp.float32),
    ))
    return dict(bc=bc, kernel_size=kernel_size, dilations=tuple(dilations), branches=branches)


def _bn_affine(gamma, beta):
    """Eval-mode BatchNorm with running_mean=0, running_var=1 -> (scale, shift)."""
    return gamma / jnp.sqrt(1.0 + _EPS), beta


def fold_params(params):
    """Host-side folding of BN affines / biases into fused kernel weights."""
    bc = params["bc"]
    K = params["kernel_size"]
    dil = params["dilations"]
    nb = len(dil) + 2
    C = nb * bc
    branches = params["branches"]

    # fused pointwise weights/bias (BN1 folded)
    wpw_cols, bpw_cols = [], []
    for bi in range(nb):
        p = branches[bi]
        s1, t1 = _bn_affine(p["bn1_g"], p["bn1_b"])
        wpw_cols.append(p["pw_w"] * s1[None, :])
        bpw_cols.append(p["pw_b"] * s1 + t1)
    Wpw = jnp.concatenate(wpw_cols, axis=1)                       # (Cin, C)
    bpw = jnp.concatenate(bpw_cols)                               # (C,)

    # ReLU applies to branches 0..nb-2 (dilated + maxpool), not the plain 1x1 (last)
    relu_mask = jnp.concatenate([jnp.ones(((nb - 1) * bc,), jnp.float32),
                                 jnp.zeros((bc,), jnp.float32)])
    plain_mask = jnp.concatenate([jnp.zeros(((nb - 1) * bc,), jnp.float32),
                                  jnp.ones((bc,), jnp.float32)])

    # temporal second stage: per-offset block-diagonal weights (BN2 folded),
    # dilated branches only (plain branch is a masked passthrough in-kernel)
    offsets = tuple(sorted({(k - 1) * d for d in dil for k in range(K)}))
    Woff = jnp.zeros((len(offsets), C, C), jnp.float32)
    bt = jnp.zeros((C,), jnp.float32)
    for bi, d in enumerate(dil):
        p = branches[bi]
        s2, t2 = _bn_affine(p["bn2_g"], p["bn2_b"])
        for k in range(K):
            oi = offsets.index((k - 1) * d)
            Woff = Woff.at[oi, bi * bc:(bi + 1) * bc, bi * bc:(bi + 1) * bc].set(
                p["t_w"][k] * s2[None, :])
        bt = bt.at[bi * bc:(bi + 1) * bc].set(p["t_b"] * s2 + t2)

    # maxpool branch BN2 affine (masked to its columns)
    pmp = branches[len(dil)]
    s2m, t2m = _bn_affine(pmp["bn2_g"], pmp["bn2_b"])
    mps = jnp.zeros((C,), jnp.float32).at[len(dil) * bc:(len(dil) + 1) * bc].set(s2m)
    mpsh = jnp.zeros((C,), jnp.float32).at[len(dil) * bc:(len(dil) + 1) * bc].set(t2m)

    # pack all per-column vectors into one sublane-aligned (8, C) slab
    vecs = jnp.zeros((8, C), jnp.float32)
    for row, v in enumerate((bpw, relu_mask, bt, mps, mpsh, plain_mask)):
        vecs = vecs.at[row].set(v)

    return dict(Wpw=Wpw, vecs=vecs, Woff=Woff, offsets=offsets, pad=max(dil))


# ------------------------------ model wrapper ------------------------------

def multiscale_temporal_conv(x_nchw, params):
    """Forward pass of MultiScale_TemporalConv (stride=1, residual=False)."""
    N, Cin, T, V = x_nchw.shape
    fused = fold_params(params)
    C = fused["Wpw"].shape[1]

    # glue: NCHW -> channels-last rows (interface is NCHW; kernel wants lane-dense C)
    x2d = jnp.transpose(x_nchw, (0, 2, 3, 1)).reshape(N * T * V, Cin)

    out2d = ms_tcn_fused_call(x2d, fused, N=N, T=T, V=V)          # (N*T*V, C)

    out = out2d.reshape(N, T, V, C)
    return jnp.transpose(out, (0, 3, 1, 2))                       # back to NCHW


# ------------------------------ pure-JAX reference ------------------------------

def reference_forward(x_nchw, params):
    N, Cin, T, V = x_nchw.shape
    bc, K, dil = params["bc"], params["kernel_size"], params["dilations"]
    x = jnp.transpose(x_nchw, (0, 2, 3, 1))                       # (N, T, V, Cin)

    def bn(v, g, b):
        return v * (g / jnp.sqrt(1.0 + _EPS)) + b

    outs = []
    for bi, d in enumerate(dil):
        p = params["branches"][bi]
        y = jnp.einsum("ntvc,cd->ntvd", x, p["pw_w"]) + p["pw_b"]
        y = jax.nn.relu(bn(y, p["bn1_g"], p["bn1_b"]))
        yp = jnp.pad(y, ((0, 0), (d, d), (0, 0), (0, 0)))
        o = sum(jnp.einsum("ntvc,cd->ntvd", yp[:, k * d:k * d + T], p["t_w"][k])
                for k in range(K)) + p["t_b"]
        outs.append(bn(o, p["bn2_g"], p["bn2_b"]))
    p = params["branches"][len(dil)]
    y = jnp.einsum("ntvc,cd->ntvd", x, p["pw_w"]) + p["pw_b"]
    y = jax.nn.relu(bn(y, p["bn1_g"], p["bn1_b"]))
    yp = jnp.pad(y, ((0, 0), (1, 1), (0, 0), (0, 0)), constant_values=-jnp.inf)
    m = jnp.maximum(jnp.maximum(yp[:, 0:T], yp[:, 1:T + 1]), yp[:, 2:T + 2])
    outs.append(bn(m, p["bn2_g"], p["bn2_b"]))
    p = params["branches"][len(dil) + 1]
    y = jnp.einsum("ntvc,cd->ntvd", x, p["pw_w"]) + p["pw_b"]
    outs.append(bn(y, p["bn1_g"], p["bn1_b"]))
    out = jnp.concatenate(outs, axis=-1)
    return jnp.transpose(out, (0, 3, 1, 2))


# ----------------------------------- main -----------------------------------

if __name__ == "__main__":
    key = jax.random.PRNGKey(0)
    k_x, k_p = jax.random.split(key)

    N, Cin, T, V = 2, 4, 16, 16
    Cout = 12  # 6 branches * 2 channels each

    x = jax.random.normal(k_x, (N, Cin, T, V), jnp.float32)
    params = init_params(k_p, Cin, Cout, kernel_size=3, dilations=(1, 2, 3, 4))

    out = multiscale_temporal_conv(x, params)
    out = jax.block_until_ready(out)

    assert out.shape == (N, Cout, T, V), out.shape
    assert jnp.all(jnp.isfinite(out))

    ref = reference_forward(x, params)
    assert jnp.allclose(out, ref, rtol=1e-4, atol=1e-4), float(jnp.max(jnp.abs(out - ref)))

    print("KERNEL_OK")
</pallas_src>

<mosaic_0001>
module attributes {stable_mosaic.version = 11 : i64} {
  func.func @_ms_tcn_kernel(%arg0: i32, %arg1: memref<256x4xf32, #tpu.memory_space<vmem>>, %arg2: memref<4x12xf32, #tpu.memory_space<vmem>>, %arg3: memref<8x12xf32, #tpu.memory_space<vmem>>, %arg4: memref<9x12x12xf32, #tpu.memory_space<vmem>>, %arg5: memref<256x12xf32, #tpu.memory_space<vmem>>, %arg6: memref<384x12xf32, #tpu.memory_space<vmem>>) attributes {dimension_semantics = [#tpu.dimension_semantics<parallel>], iteration_bounds = array<i64: 2>, scalar_prefetch = 0 : i64, scratch_operands = 1 : i64, tpu.core_type = #tpu.core_type<tc>, window_params = [{transform_indices = @transform_0, window_bounds = array<i64: 256, 4>}, {pipeline_mode = #tpu.pipeline_mode<synchronous>, transform_indices = @transform_1, window_bounds = array<i64: 4, 12>}, {pipeline_mode = #tpu.pipeline_mode<synchronous>, transform_indices = @transform_2, window_bounds = array<i64: 8, 12>}, {pipeline_mode = #tpu.pipeline_mode<synchronous>, transform_indices = @transform_3, window_bounds = array<i64: 9, 12, 12>}, {transform_indices = @transform_4, window_bounds = array<i64: 256, 12>}]} {
    %c0 = arith.constant 0 : index
    %c0_0 = arith.constant 0 : index
    %0 = vector.load %arg3[%c0, %c0_0] : memref<8x12xf32, #tpu.memory_space<vmem>>, vector<8x12xf32>
    %1 = vector.extract_strided_slice %0 {offsets = [0, 0], sizes = [1, 12], strides = [1, 1]} : vector<8x12xf32> to vector<1x12xf32>
    %2 = vector.extract_strided_slice %0 {offsets = [1, 0], sizes = [1, 12], strides = [1, 1]} : vector<8x12xf32> to vector<1x12xf32>
    %3 = vector.extract_strided_slice %0 {offsets = [2, 0], sizes = [1, 12], strides = [1, 1]} : vector<8x12xf32> to vector<1x12xf32>
    %4 = vector.extract_strided_slice %0 {offsets = [3, 0], sizes = [1, 12], strides = [1, 1]} : vector<8x12xf32> to vector<1x12xf32>
    %5 = vector.extract_strided_slice %0 {offsets = [4, 0], sizes = [1, 12], strides = [1, 1]} : vector<8x12xf32> to vector<1x12xf32>
    %6 = vector.extract_strided_slice %0 {offsets = [5, 0], sizes = [1, 12], strides = [1, 1]} : vector<8x12xf32> to vector<1x12xf32>
    %c0_1 = arith.constant 0 : index
    %c0_2 = arith.constant 0 : index
    %7 = vector.load %arg1[%c0_1, %c0_2] : memref<256x4xf32, #tpu.memory_space<vmem>>, vector<256x4xf32>
    %c0_3 = arith.constant 0 : index
    %c0_4 = arith.constant 0 : index
    %8 = vector.load %arg2[%c0_3, %c0_4] : memref<4x12xf32, #tpu.memory_space<vmem>>, vector<4x12xf32>
    %cst = arith.constant dense<0.000000e+00> : vector<256x12xf32>
    %9 = tpu.matmul %7, %8, %cst {dimension_numbers = #tpu.dot_dimension_numbers<[1], [0], [0], [1], [0, 0, 1, 1], [], []>} : vector<256x4xf32>, vector<4x12xf32>, vector<256x12xf32> -> vector<256x12xf32>
    %10 = vector.broadcast %1 : vector<1x12xf32> to vector<256x12xf32>
    %11 = arith.addf %9, %10 : vector<256x12xf32>
    %cst_5 = arith.constant 0.000000e+00 : f32
    %12 = vector.broadcast %cst_5 : f32 to vector<256x12xf32>
    %13 = arith.minimumf %11, %12 : vector<256x12xf32>
    %14 = vector.broadcast %2 : vector<1x12xf32> to vector<256x12xf32>
    %15 = arith.mulf %14, %13 : vector<256x12xf32>
    %16 = arith.subf %11, %15 : vector<256x12xf32>
    %cst_6 = arith.constant 0.000000e+00 : f32
    %17 = vector.broadcast %cst_6 : f32 to vector<64x12xf32>
    %c0_7 = arith.constant 0 : index
    %c0_8 = arith.constant 0 : index
    %18 = vector.load %arg6[%c0_7, %c0_8] : memref<384x12xf32, #tpu.memory_space<vmem>>, vector<64x12xf32>
    tpu.vector_store %arg6[%c0_7, %c0_8], %17 {strides = array<i32>} : memref<384x12xf32, #tpu.memory_space<vmem>>, vector<64x12xf32>,
    %cst_9 = arith.constant 0.000000e+00 : f32
    %19 = vector.broadcast %cst_9 : f32 to vector<64x12xf32>
    %c320 = arith.constant 320 : index
    %c0_10 = arith.constant 0 : index
    %20 = vector.load %arg6[%c320, %c0_10] : memref<384x12xf32, #tpu.memory_space<vmem>>, vector<64x12xf32>
    tpu.vector_store %arg6[%c320, %c0_10], %19 {strides = array<i32>} : memref<384x12xf32, #tpu.memory_space<vmem>>, vector<64x12xf32>,
    %c64 = arith.constant 64 : index
    %c0_11 = arith.constant 0 : index
    %21 = vector.load %arg6[%c64, %c0_11] : memref<384x12xf32, #tpu.memory_space<vmem>>, vector<256x12xf32>
    tpu.vector_store %arg6[%c64, %c0_11], %16 {strides = array<i32>} : memref<384x12xf32, #tpu.memory_space<vmem>>, vector<256x12xf32>,
    %cst_12 = arith.constant 0.000000e+00 : f32
    %22 = vector.broadcast %cst_12 : f32 to vector<256x12xf32>
    %c0_13 = arith.constant 0 : index
    %c0_14 = arith.constant 0 : index
    %23 = vector.load %arg6[%c0_13, %c0_14] : memref<384x12xf32, #tpu.memory_space<vmem>>, vector<256x12xf32>
    %c0_15 = arith.constant 0 : index
    %c0_16 = arith.constant 0 : index
    %c0_17 = arith.constant 0 : index
    %24 = vector.load %arg4[%c0_15, %c0_16, %c0_17] : memref<9x12x12xf32, #tpu.memory_space<vmem>>, vector<1x12x12xf32>
    %25 = vector.shape_cast %24 : vector<1x12x12xf32> to vector<12x12xf32>
    %cst_18 = arith.constant dense<0.000000e+00> : vector<256x12xf32>
    %26 = tpu.matmul %23, %25, %cst_18 {dimension_numbers = #tpu.dot_dimension_numbers<[1], [0], [0], [1], [0, 0, 1, 1], [], []>} : vector<256x12xf32>, vector<12x12xf32>, vector<256x12xf32> -> vector<256x12xf32>
    %27 = arith.addf %22, %26 : vector<256x12xf32>
    %c16 = arith.constant 16 : index
    %c0_19 = arith.constant 0 : index
    %28 = vector.load %arg6[%c16, %c0_19] : memref<384x12xf32, #tpu.memory_space<vmem>>, vector<256x12xf32>
    %c1 = arith.constant 1 : index
    %c0_20 = arith.constant 0 : index
    %c0_21 = arith.constant 0 : index
    %29 = vector.load %arg4[%c1, %c0_20, %c0_21] : memref<9x12x12xf32, #tpu.memory_space<vmem>>, vector<1x12x12xf32>
    %30 = vector.shape_cast %29 : vector<1x12x12xf32> to vector<12x12xf32>
    %cst_22 = arith.constant dense<0.000000e+00> : vector<256x12xf32>
    %31 = tpu.matmul %28, %30, %cst_22 {dimension_numbers = #tpu.dot_dimension_numbers<[1], [0], [0], [1], [0, 0, 1, 1], [], []>} : vector<256x12xf32>, vector<12x12xf32>, vector<256x12xf32> -> vector<256x12xf32>
    %32 = arith.addf %27, %31 : vector<256x12xf32>
    %c32 = arith.constant 32 : index
    %c0_23 = arith.constant 0 : index
    %33 = vector.load %arg6[%c32, %c0_23] : memref<384x12xf32, #tpu.memory_space<vmem>>, vector<256x12xf32>
    %c2 = arith.constant 2 : index
    %c0_24 = arith.constant 0 : index
    %c0_25 = arith.constant 0 : index
    %34 = vector.load %arg4[%c2, %c0_24, %c0_25] : memref<9x12x12xf32, #tpu.memory_space<vmem>>, vector<1x12x12xf32>
    %35 = vector.shape_cast %34 : vector<1x12x12xf32> to vector<12x12xf32>
    %cst_26 = arith.constant dense<0.000000e+00> : vector<256x12xf32>
    %36 = tpu.matmul %33, %35, %cst_26 {dimension_numbers = #tpu.dot_dimension_numbers<[1], [0], [0], [1], [0, 0, 1, 1], [], []>} : vector<256x12xf32>, vector<12x12xf32>, vector<256x12xf32> -> vector<256x12xf32>
    %37 = arith.addf %32, %36 : vector<256x12xf32>
    %c48 = arith.constant 48 : index
    %c0_27 = arith.constant 0 : index
    %38 = vector.load %arg6[%c48, %c0_27] : memref<384x12xf32, #tpu.memory_space<vmem>>, vector<256x12xf32>
    %c3 = arith.constant 3 : index
    %c0_28 = arith.constant 0 : index
    %c0_29 = arith.constant 0 : index
    %39 = vector.load %arg4[%c3, %c0_28, %c0_29] : memref<9x12x12xf32, #tpu.memory_space<vmem>>, vector<1x12x12xf32>
    %40 = vector.shape_cast %39 : vector<1x12x12xf32> to vector<12x12xf32>
    %cst_30 = arith.constant dense<0.000000e+00> : vector<256x12xf32>
    %41 = tpu.matmul %38, %40, %cst_30 {dimension_numbers = #tpu.dot_dimension_numbers<[1], [0], [0], [1], [0, 0, 1, 1], [], []>} : vector<256x12xf32>, vector<12x12xf32>, vector<256x12xf32> -> vector<256x12xf32>
    %42 = arith.addf %37, %41 : vector<256x12xf32>
    %c4 = arith.constant 4 : index
    %c0_31 = arith.constant 0 : index
    %c0_32 = arith.constant 0 : index
    %43 = vector.load %arg4[%c4, %c0_31, %c0_32] : memref<9x12x12xf32, #tpu.memory_space<vmem>>, vector<1x12x12xf32>
    %44 = vector.shape_cast %43 : vector<1x12x12xf32> to vector<12x12xf32>
    %cst_33 = arith.constant dense<0.000000e+00> : vector<256x12xf32>
    %45 = tpu.matmul %16, %44, %cst_33 {dimension_numbers = #tpu.dot_dimension_numbers<[1], [0], [0], [1], [0, 0, 1, 1], [], []>} : vector<256x12xf32>, vector<12x12xf32>, vector<256x12xf32> -> vector<256x12xf32>
    %46 = arith.addf %42, %45 : vector<256x12xf32>
    %c80 = arith.constant 80 : index
    %c0_34 = arith.constant 0 : index
    %47 = vector.load %arg6[%c80, %c0_34] : memref<384x12xf32, #tpu.memory_space<vmem>>, vector<256x12xf32>
    %c5 = arith.constant 5 : index
    %c0_35 = arith.constant 0 : index
    %c0_36 = arith.constant 0 : index
    %48 = vector.load %arg4[%c5, %c0_35, %c0_36] : memref<9x12x12xf32, #tpu.memory_space<vmem>>, vector<1x12x12xf32>
    %49 = vector.shape_cast %48 : vector<1x12x12xf32> to vector<12x12xf32>
    %cst_37 = arith.constant dense<0.000000e+00> : vector<256x12xf32>
    %50 = tpu.matmul %47, %49, %cst_37 {dimension_numbers = #tpu.dot_dimension_numbers<[1], [0], [0], [1], [0, 0, 1, 1], [], []>} : vector<256x12xf32>, vector<12x12xf32>, vector<256x12xf32> -> vector<256x12xf32>
    %51 = arith.addf %46, %50 : vector<256x12xf32>
    %c96 = arith.constant 96 : index
    %c0_38 = arith.constant 0 : index
    %52 = vector.load %arg6[%c96, %c0_38] : memref<384x12xf32, #tpu.memory_space<vmem>>, vector<256x12xf32>
    %c6 = arith.constant 6 : index
    %c0_39 = arith.constant 0 : index
    %c0_40 = arith.constant 0 : index
    %53 = vector.load %arg4[%c6, %c0_39, %c0_40] : memref<9x12x12xf32, #tpu.memory_space<vmem>>, vector<1x12x12xf32>
    %54 = vector.shape_cast %53 : vector<1x12x12xf32> to vector<12x12xf32>
    %cst_41 = arith.constant dense<0.000000e+00> : vector<256x12xf32>
    %55 = tpu.matmul %52, %54, %cst_41 {dimension_numbers = #tpu.dot_dimension_numbers<[1], [0], [0], [1], [0, 0, 1, 1], [], []>} : vector<256x12xf32>, vector<12x12xf32>, vector<256x12xf32> -> vector<256x12xf32>
    %56 = arith.addf %51, %55 : vector<256x12xf32>
    %c112 = arith.constant 112 : index
    %c0_42 = arith.constant 0 : index
    %57 = vector.load %arg6[%c112, %c0_42] : memref<384x12xf32, #tpu.memory_space<vmem>>, vector<256x12xf32>
    %c7 = arith.constant 7 : index
    %c0_43 = arith.constant 0 : index
    %c0_44 = arith.constant 0 : index
    %58 = vector.load %arg4[%c7, %c0_43, %c0_44] : memref<9x12x12xf32, #tpu.memory_space<vmem>>, vector<1x12x12xf32>
    %59 = vector.shape_cast %58 : vector<1x12x12xf32> to vector<12x12xf32>
    %cst_45 = arith.constant dense<0.000000e+00> : vector<256x12xf32>
    %60 = tpu.matmul %57, %59, %cst_45 {dimension_numbers = #tpu.dot_dimension_numbers<[1], [0], [0], [1], [0, 0, 1, 1], [], []>} : vector<256x12xf32>, vector<12x12xf32>, vector<256x12xf32> -> vector<256x12xf32>
    %61 = arith.addf %56, %60 : vector<256x12xf32>
    %c128 = arith.constant 128 : index
    %c0_46 = arith.constant 0 : index
    %62 = vector.load %arg6[%c128, %c0_46] : memref<384x12xf32, #tpu.memory_space<vmem>>, vector<256x12xf32>
    %c8 = arith.constant 8 : index
    %c0_47 = arith.constant 0 : index
    %c0_48 = arith.constant 0 : index
    %63 = vector.load %arg4[%c8, %c0_47, %c0_48] : memref<9x12x12xf32, #tpu.memory_space<vmem>>, vector<1x12x12xf32>
    %64 = vector.shape_cast %63 : vector<1x12x12xf32> to vector<12x12xf32>
    %cst_49 = arith.constant dense<0.000000e+00> : vector<256x12xf32>
    %65 = tpu.matmul %62, %64, %cst_49 {dimension_numbers = #tpu.dot_dimension_numbers<[1], [0], [0], [1], [0, 0, 1, 1], [], []>} : vector<256x12xf32>, vector<12x12xf32>, vector<256x12xf32> -> vector<256x12xf32>
    %66 = arith.addf %61, %65 : vector<256x12xf32>
    %c48_50 = arith.constant 48 : index
    %c0_51 = arith.constant 0 : index
    %67 = vector.load %arg6[%c48_50, %c0_51] : memref<384x12xf32, #tpu.memory_space<vmem>>, vector<256x12xf32>
    %c80_52 = arith.constant 80 : index
    %c0_53 = arith.constant 0 : index
    %68 = vector.load %arg6[%c80_52, %c0_53] : memref<384x12xf32, #tpu.memory_space<vmem>>, vector<256x12xf32>
    %69 = arith.maximumf %67, %16 : vector<256x12xf32>
    %70 = arith.maximumf %69, %68 : vector<256x12xf32>
    %71 = vector.broadcast %3 : vector<1x12xf32> to vector<256x12xf32>
    %72 = arith.addf %66, %71 : vector<256x12xf32>
    %73 = vector.broadcast %4 : vector<1x12xf32> to vector<256x12xf32>
    %74 = arith.mulf %70, %73 : vector<256x12xf32>
    %75 = arith.addf %72, %74 : vector<256x12xf32>
    %76 = vector.broadcast %5 : vector<1x12xf32> to vector<256x12xf32>
    %77 = arith.addf %75, %76 : vector<256x12xf32>
    %78 = vector.broadcast %6 : vector<1x12xf32> to vector<256x12xf32>
    %79 = arith.mulf %16, %78 : vector<256x12xf32>
    %80 = arith.addf %77, %79 : vector<256x12xf32>
    %c0_54 = arith.constant 0 : index
    %c0_55 = arith.constant 0 : index
    %81 = vector.load %arg5[%c0_54, %c0_55] : memref<256x12xf32, #tpu.memory_space<vmem>>, vector<256x12xf32>
    tpu.vector_store %arg5[%c0_54, %c0_55], %80 {strides = array<i32>} : memref<256x12xf32, #tpu.memory_space<vmem>>, vector<256x12xf32>,
    return
  }
  func.func @transform_0(%arg0: i32) -> (i32, i32) {
    %c0_i32 = arith.constant 0 : i32
    %c0_i32_0 = arith.constant 0 : i32
    return %arg0, %c0_i32 : i32, i32
  }
  func.func @transform_1(%arg0: i32) -> (i32, i32) {
    %c0_i32 = arith.constant 0 : i32
    %c0_i32_0 = arith.constant 0 : i32
    %c0_i32_1 = arith.constant 0 : i32
    return %c0_i32, %c0_i32_0 : i32, i32
  }
  func.func @transform_2(%arg0: i32) -> (i32, i32) {
    %c0_i32 = arith.constant 0 : i32
    %c0_i32_0 = arith.constant 0 : i32
    %c0_i32_1 = arith.constant 0 : i32
    return %c0_i32, %c0_i32_0 : i32, i32
  }
  func.func @transform_3(%arg0: i32) -> (i32, i32, i32) {
    %c0_i32 = arith.constant 0 : i32
    %c0_i32_0 = arith.constant 0 : i32
    %c0_i32_1 = arith.constant 0 : i32
    %c0_i32_2 = arith.constant 0 : i32
    return %c0_i32, %c0_i32_0, %c0_i32_1 : i32, i32, i32
  }
  func.func @transform_4(%arg0: i32) -> (i32, i32) {
    %c0_i32 = arith.constant 0 : i32
    %c0_i32_0 = arith.constant 0 : i32
    return %arg0, %c0_i32 : i32, i32
  }
}

</mosaic_0001>

<llo_original>
// kernel: tpu_custom_call.1
$region0: #{tpu_custom_call.1}
  #allocation0 [shape = 'u32[]', space=smem, size = 0x4, offset = 0x4, fixed_abs, tag = 'smem constant byte address 0x4 - core index']
  #allocation1 [shape = 'u32[144,128]{1,0:T(1,128)}', space=vmem, size = 0x12000, scoped, tag = 'internal scratch']
  #allocation2 [shape = 'f32[384,12]{1,0:T(8,128)}', space=vmem, size = 0x30000, scoped, tag = 'scratch operand']
  %s0 = inlined_call_operand.vmem [shape: f32[512,4], index: 0, kind: input, shape index: {}]
  %s1 = inlined_call_operand.vmem [shape: f32[4,12], index: 1, kind: input, shape index: {}]
  %s2 = inlined_call_operand.vmem [shape: f32[8,12], index: 2, kind: input, shape index: {}]
  %s3 = inlined_call_operand.vmem [shape: f32[9,12,12], index: 3, kind: input, shape index: {}]
  %s4 = inlined_call_operand.vmem [shape: f32[512,12], index: 4, kind: output, shape index: {}]
  %s5 = sld [smem:[#allocation0]]
  $region49: #{tpu_custom_call.1} parent=0
    _
  %s7 = ssub.s32 1, %s5
  %s8 = scalar_select 0, %s7, %s5
  loop: start=0, step=1, limit=4
  $region2: #{tpu_custom_call.1} parent=0 // loop_pre_header
    _
  $region3: #{tpu_custom_call.1} parent=0 // loop_header
    %s10 = sphi 0, %s14
    %p11 = scmp.ge.s32.totalorder %s10, 4
    %s20 = sphi 0, %s22
    %s23 = sphi 0, %s20
    %s24 = sphi 0, %s23
    %s40 = sphi 0, %s24
    %s44 = sphi 0, %s44
    %s46 = sphi 0, %s44
    %s47 = sphi 0, %s46
    %s61 = sphi 0, %s47
    %s65 = sphi 0, %s65
    %s67 = sphi 0, %s65
    %s68 = sphi 0, %s67
    %s82 = sphi 0, %s68
    %s86 = sphi 0, %s86
    %s88 = sphi 0, %s86
    %s89 = sphi 0, %s88
    %s103 = sphi 0, %s89
    %s109 = sphi 0, %s111
    %s112 = sphi 0, %s109
    %s113 = sphi 0, %s112
    %s129 = sphi 0, %s113
  $region4: #{tpu_custom_call.1} parent=0 // loop_header_branch
    %13 = sbr.rel (%p11) target = $region8
  $region5: #{tpu_custom_call.1} parent=0 // loop_body
    %s15 = ssub.s32 %s10, 1
    %s16 = ssub.s32 %s10, 2
    %s17 = sadd.s32 %s10, 1
    %s18 = ssub.s32 %s10, %s17
    %p19 = scmp.eq.s32.totalorder %s18, 0
    %s21 = sadd.s32 %s20, 1
    %s22 = scalar_select %p19, %s20, %s21
    %p25 = pneg %p19
    %p26 = scmp.eq.s32.totalorder %s10, 1
    %p27 = por %p25, %p26
    %p28 = scmp.ne.s32.totalorder %s20, %s23
    %p29 = scmp.eq.s32.totalorder %s10, 0
    %p30 = por %p28, %p29
    %p31 = scmp.ne.s32.totalorder %s20, %s23
    %p32 = scmp.eq.s32.totalorder %s15, 1
    %p33 = por %p31, %p32
    %p34 = scmp.ne.s32.totalorder %s23, %s24
    %p35 = scmp.eq.s32.totalorder %s15, 0
    %p36 = por %p34, %p35
    %p37 = scmp.ne.s32.totalorder %s23, %s24
    %p38 = scmp.eq.s32.totalorder %s16, 1
    %p39 = por %p37, %p38
    %p41 = scmp.ne.s32.totalorder %s24, %s40
    %p42 = scmp.eq.s32.totalorder %s16, 0
    %p43 = por %p41, %p42
    %s45 = sadd.s32 %s44, 1
    %p48 = scmp.eq.s32.totalorder %s10, 1
    %p49 = scmp.ne.s32.totalorder %s44, %s46
    %p50 = scmp.eq.s32.totalorder %s10, 0
    %p51 = por %p49, %p50
    %p52 = scmp.ne.s32.totalorder %s44, %s46
    %p53 = scmp.eq.s32.totalorder %s15, 1
    %p54 = por %p52, %p53
    %p55 = scmp.ne.s32.totalorder %s46, %s47
    %p56 = scmp.eq.s32.totalorder %s15, 0
    %p57 = por %p55, %p56
    %p58 = scmp.ne.s32.totalorder %s46, %s47
    %p59 = scmp.eq.s32.totalorder %s16, 1
    %p60 = por %p58, %p59
    %p62 = scmp.ne.s32.totalorder %s47, %s61
    %p63 = scmp.eq.s32.totalorder %s16, 0
    %p64 = por %p62, %p63
    %s66 = sadd.s32 %s65, 1
    %p69 = scmp.eq.s32.totalorder %s10, 1
    %p70 = scmp.ne.s32.totalorder %s65, %s67
    %p71 = scmp.eq.s32.totalorder %s10, 0
    %p72 = por %p70, %p71
    %p73 = scmp.ne.s32.totalorder %s65, %s67
    %p74 = scmp.eq.s32.totalorder %s15, 1
    %p75 = por %p73, %p74
    %p76 = scmp.ne.s32.totalorder %s67, %s68
    %p77 = scmp.eq.s32.totalorder %s15, 0
    %p78 = por %p76, %p77
    %p79 = scmp.ne.s32.totalorder %s67, %s68
    %p80 = scmp.eq.s32.totalorder %s16, 1
    %p81 = por %p79, %p80
    %p83 = scmp.ne.s32.totalorder %s68, %s82
    %p84 = scmp.eq.s32.totalorder %s16, 0
    %p85 = por %p83, %p84
    %s87 = sadd.s32 %s86, 1
    %p90 = scmp.eq.s32.totalorder %s10, 1
    %p91 = scmp.ne.s32.totalorder %s86, %s88
    %p92 = scmp.eq.s32.totalorder %s10, 0
    %p93 = por %p91, %p92
    %p94 = scmp.ne.s32.totalorder %s86, %s88
    %p95 = scmp.eq.s32.totalorder %s15, 1
    %p96 = por %p94, %p95
    %p97 = scmp.ne.s32.totalorder %s88, %s89
    %p98 = scmp.eq.s32.totalorder %s15, 0
    %p99 = por %p97, %p98
    %p100 = scmp.ne.s32.totalorder %s88, %s89
    %p101 = scmp.eq.s32.totalorder %s16, 1
    %p102 = por %p100, %p101
    %p104 = scmp.ne.s32.totalorder %s89, %s103
    %p105 = scmp.eq.s32.totalorder %s16, 0
    %p106 = por %p104, %p105
    %s107 = ssub.s32 %s10, %s17
    %p108 = scmp.eq.s32.totalorder %s107, 0
    %s110 = sadd.s32 %s109, 1
    %s111 = scalar_select %p108, %s109, %s110
    %p114 = pneg %p108
    %p115 = scmp.eq.s32.totalorder %s10, 1
    %p116 = por %p114, %p115
    %p117 = scmp.ne.s32.totalorder %s109, %s112
    %p118 = scmp.eq.s32.totalorder %s10, 0
    %p119 = por %p117, %p118
    %p120 = scmp.ne.s32.totalorder %s109, %s112
    %p121 = scmp.eq.s32.totalorder %s15, 1
    %p122 = por %p120, %p121
    %p123 = scmp.ne.s32.totalorder %s112, %s113
    %p124 = scmp.eq.s32.totalorder %s15, 0
    %p125 = por %p123, %p124
    %p126 = scmp.ne.s32.totalorder %s112, %s113
    %p127 = scmp.eq.s32.totalorder %s16, 1
    %p128 = por %p126, %p127
    %p130 = scmp.ne.s32.totalorder %s113, %s129
    %p131 = scmp.eq.s32.totalorder %s16, 0
    %p132 = por %p130, %p131
    %p133 = scmp.le.s32.totalorder 1, %s10
    %p134 = scmp.lt.s32.totalorder %s10, 3
    %p135 = pnand %p133, %p134
    %p136 = pneg %p135
    // Predicated region
    $region9: #{tpu_custom_call.1} parent=5 // pred_check
      _
    $region10: #{tpu_custom_call.1} parent=5 // pred_check_branch
      %138 = sbr.rel (%p135) target = $region12
    $region11: #{tpu_custom_call.1} parent=5 // pred_region
      %s139 = ssub.s32 %s10, 1
      // Predicated region
      $region13: #{tpu_custom_call.1} parent=11 // pred_check
        %p140 = pneg %p57
      $region14: #{tpu_custom_call.1} parent=11 // pred_check_branch
        %142 = sbr.rel (%p140) target = $region16
      $region15: #{tpu_custom_call.1} parent=11 // pred_region
        _
      $region16: #{tpu_custom_call.1} parent=11 // pred_fallthru
        _
      // Predicated region
      $region17: #{tpu_custom_call.1} parent=11 // pred_check
        %p143 = pneg %p78
      $region18: #{tpu_custom_call.1} parent=11 // pred_check_branch
        %145 = sbr.rel (%p143) target = $region20
      $region19: #{tpu_custom_call.1} parent=11 // pred_region
        _
      $region20: #{tpu_custom_call.1} parent=11 // pred_fallthru
        _
      // Predicated region
      $region21: #{tpu_custom_call.1} parent=11 // pred_check
        %p146 = pneg %p99
      $region22: #{tpu_custom_call.1} parent=11 // pred_check_branch
        %148 = sbr.rel (%p146) target = $region24
      $region23: #{tpu_custom_call.1} parent=11 // pred_region
        _
      $region24: #{tpu_custom_call.1} parent=11 // pred_fallthru
        _
    $region12: #{tpu_custom_call.1} parent=5 // pred_fallthru
      _
    %p149 = scmp.lt.s32.totalorder %s10, 2
    // Predicated region
    $region25: #{tpu_custom_call.1} parent=5 // pred_check
      %p150 = pneg %p149
    $region26: #{tpu_custom_call.1} parent=5 // pred_check_branch
      %152 = sbr.rel (%p150) target = $region28
    $region27: #{tpu_custom_call.1} parent=5 // pred_region
      // Predicated region
      $region29: #{tpu_custom_call.1} parent=27 // pred_check
        %p153 = pneg %p30
      $region30: #{tpu_custom_call.1} parent=27 // pred_check_branch
        %155 = sbr.rel (%p153) target = $region32
      $region31: #{tpu_custom_call.1} parent=27 // pred_region
        %s156 = smul.u32 32, %s10
        %p157 = scmp.lt.s32.totalorder %s156, 63
        %s158 = scalar_select %p157, %s156, 63
        %s159 = smul.addr %s158, 8
        %s160 = scalar_lea.vmem %s0, %s159
        %s161 = smul.u32 32, %s10
      $region32: #{tpu_custom_call.1} parent=27 // pred_fallthru
        _
    $region28: #{tpu_custom_call.1} parent=5 // pred_fallthru
      _
    %p162 = scmp.le.s32.totalorder 1, %s10
    %p163 = scmp.lt.s32.totalorder %s10, 3
    %p164 = pnand %p162, %p163
    %p165 = pneg %p164
    // Predicated region
    $region33: #{tpu_custom_call.1} parent=5 // pred_check
      _
    $region34: #{tpu_custom_call.1} parent=5 // pred_check_branch
      %167 = sbr.rel (%p164) target = $region36
    $region35: #{tpu_custom_call.1} parent=5 // pred_region
      %s168 = ssub.s32 %s10, 1
      %s169 = smul.u32 32, %s15
      %p170 = scmp.lt.s32.totalorder %s169, 63
      %s171 = scalar_select %p170, %s169, 63
      %s172 = smul.addr %s171, 8
      %s173 = scalar_lea.vmem %s0, %s172
      %p174 = pneg %p36
      %p175 = pneg %p33
      %p176 = pneg %p57
      %p177 = pneg %p54
      %p178 = pneg %p78
      %p179 = pneg %p75
      %p180 = pneg %p99
      %p181 = pneg %p96
      %p182 = pneg %p125
      %p183 = pneg %p122
      %s184 = smul.u32 32, %s15
      %p185 = scmp.lt.s32.totalorder %s184, 63
      %s186 = scalar_select %p185, %s184, 63
      %s187 = smul.addr %s186, 8
      %s188 = scalar_lea.vmem %s4, %s187
      %s189 = smul.u32 32, %s15
      %p190 = scmp.lt.s32.totalorder %s189, 63
      %s191 = scalar_select %p190, %s189, 63
      %s192 = smul.addr %s191, 8
      %s193 = scalar_lea.vmem %s0, %s192
      %s194 = smul.u32 32, %s15
      %s195 = smul.u32 32, %s15
      %p196 = scmp.lt.s32.totalorder %s195, 63
      %s197 = scalar_select %p196, %s195, 63
      %s198 = smul.addr %s197, 8
      %s199 = scalar_lea.vmem %s4, %s198
      %s200 = smul.u32 32, %s15
      %v201 = vld [vmem:[%s2] sm:$0xff]
      %v202 = vld [vmem:[%s193] sm:$0xff]
      %v203 = vld [vmem:[%s193 + $0x8] sm:$0xff]
      %v204 = vld [vmem:[%s193 + $0x10] sm:$0xff]
      %v205 = vld [vmem:[%s193 + $0x18] sm:$0xff]
      %v206 = vld [vmem:[%s193 + $0x20] sm:$0xff]
      %v207 = vld [vmem:[%s193 + $0x28] sm:$0xff]
      %v208 = vld [vmem:[%s193 + $0x30] sm:$0xff]
      %v209 = vld [vmem:[%s193 + $0x38] sm:$0xff]
      %v210 = vld [vmem:[%s193 + $0x40] sm:$0xff]
      %v211 = vld [vmem:[%s193 + $0x48] sm:$0xff]
      %v212 = vld [vmem:[%s193 + $0x50] sm:$0xff]
      %v213 = vld [vmem:[%s193 + $0x58] sm:$0xff]
      %v214 = vld [vmem:[%s193 + $0x60] sm:$0xff]
      %v215 = vld [vmem:[%s193 + $0x68] sm:$0xff]
      %v216 = vld [vmem:[%s193 + $0x70] sm:$0xff]
      %v217 = vld [vmem:[%s193 + $0x78] sm:$0xff]
      %v218 = vld [vmem:[%s193 + $0x80] sm:$0xff]
      %v219 = vld [vmem:[%s193 + $0x88] sm:$0xff]
      %v220 = vld [vmem:[%s193 + $0x90] sm:$0xff]
      %v221 = vld [vmem:[%s193 + $0x98] sm:$0xff]
      %v222 = vld [vmem:[%s193 + $0xa0] sm:$0xff]
      %v223 = vld [vmem:[%s193 + $0xa8] sm:$0xff]
      %v224 = vld [vmem:[%s193 + $0xb0] sm:$0xff]
      %v225 = vld [vmem:[%s193 + $0xb8] sm:$0xff]
      %v226 = vld [vmem:[%s193 + $0xc0] sm:$0xff]
      %v227 = vld [vmem:[%s193 + $0xc8] sm:$0xff]
      %v228 = vld [vmem:[%s193 + $0xd0] sm:$0xff]
      %v229 = vld [vmem:[%s193 + $0xd8] sm:$0xff]
      %v230 = vld [vmem:[%s193 + $0xe0] sm:$0xff]
      %v231 = vld [vmem:[%s193 + $0xe8] sm:$0xff]
      %v232 = vld [vmem:[%s193 + $0xf0] sm:$0xff]
      %v233 = vld [vmem:[%s193 + $0xf8] sm:$0xff]
      %v234 = vld [vmem:[%s1] sm:$0xf]
      %v235 = vlaneseq
      %v236 = vshrl.u32 %v235, 7
      %v237 = vsub.s32 0, %v236
      %v238 = vrot.slane %v201, %v237
      %vm239 = vcmask 31744
      %v241 = vsel %vm239, %v202, 0
      %v244 = vsel %vm239, %v203, 0
      %v247 = vsel %vm239, %v204, 0
      %v250 = vsel %vm239, %v205, 0
      %v253 = vsel %vm239, %v206, 0
      %v256 = vsel %vm239, %v207, 0
      %v259 = vsel %vm239, %v208, 0
      %v262 = vsel %vm239, %v209, 0
      %v265 = vsel %vm239, %v210, 0
      %v268 = vsel %vm239, %v211, 0
      %v271 = vsel %vm239, %v212, 0
      %v274 = vsel %vm239, %v213, 0
      %v277 = vsel %vm239, %v214, 0
      %v280 = vsel %vm239, %v215, 0
      %v283 = vsel %vm239, %v216, 0
      %v286 = vsel %vm239, %v217, 0
      %v289 = vsel %vm239, %v218, 0
      %v292 = vsel %vm239, %v219, 0
      %v295 = vsel %vm239, %v220, 0
      %v298 = vsel %vm239, %v221, 0
      %v301 = vsel %vm239, %v222, 0
      %v304 = vsel %vm239, %v223, 0
      %v307 = vsel %vm239, %v224, 0
      %v310 = vsel %vm239, %v225, 0
      %v313 = vsel %vm239, %v226, 0
      %v316 = vsel %vm239, %v227, 0
      %v319 = vsel %vm239, %v228, 0
      %v322 = vsel %vm239, %v229, 0
      %v325 = vsel %vm239, %v230, 0
      %v328 = vsel %vm239, %v231, 0
      %v331 = vsel %vm239, %v232, 0
      %v334 = vsel %vm239, %v233, 0
      %vm336 = vcmask 1043456
      %v338 = vsel %vm336, %v234, 0
      %340 = vmatprep.subr.mxu0 0.0
      %341 = vmatpush1.msra.mxu0 %v338
      %342 = vmatprep.subr.mxu0 0.0
      %343 = vmatpush1.msra.mxu0 0.0
      %344 = vmatprep.subr.mxu0 0.0
      %345 = vmatpush1.msra.mxu0 0.0
      %346 = vmatprep.subr.mxu0 0.0
      %347 = vmatpush1.msra.mxu0 0.0
      %348 = vmatprep.subr.mxu0 0.0
      %349 = vmatpush1.msra.mxu0 0.0
      %350 = vmatprep.subr.mxu0 0.0
      %351 = vmatpush1.msra.mxu0 0.0
      %352 = vmatprep.subr.mxu0 0.0
      %353 = vmatpush1.msra.mxu0 0.0
      %354 = vmatprep.subr.mxu0 0.0
      %355 = vmatpush1.msra.mxu0 0.0
      %356 = vmatprep.subr.mxu0 0.0
      %357 = vmatpush1.msra.mxu0 0.0
      %358 = vmatprep.subr.mxu0 0.0
      %359 = vmatpush1.msra.mxu0 0.0
      %360 = vmatprep.subr.mxu0 0.0
      %361 = vmatpush1.msra.mxu0 0.0
      %362 = vmatprep.subr.mxu0 0.0
      %363 = vmatpush1.msra.mxu0 0.0
      %364 = vmatprep.subr.mxu0 0.0
      %365 = vmatpush1.msra.mxu0 0.0
      %366 = vmatprep.subr.mxu0 0.0
      %367 = vmatpush1.msra.mxu0 0.0
      %368 = vmatprep.subr.mxu0 0.0
      %369 = vmatpush1.msra.mxu0 0.0
      %370 = vmatprep.subr.mxu0 0.0
      %371 = vmatpush1.msra.mxu0 0.0
      %372 = vmatprep.subr.mxu0 0.0
      %373 = vmatpush1.msra.mxu0 0.0
      %374 = vmatprep.subr.mxu0 0.0
      %375 = vmatpush1.msra.mxu0 0.0
      %376 = vmatprep.subr.mxu0 0.0
      %377 = vmatpush1.msra.mxu0 0.0
      %378 = vmatprep.subr.mxu0 0.0
      %379 = vmatpush1.msra.mxu0 0.0
      %380 = vmatprep.subr.mxu0 0.0
      %381 = vmatpush1.msra.mxu0 0.0
      %382 = vmatprep.subr.mxu0 0.0
      %383 = vmatpush1.msra.mxu0 0.0
      %384 = vmatprep.subr.mxu0 0.0
      %385 = vmatpush1.msra.mxu0 0.0
      %386 = vmatprep.subr.mxu0 0.0
      %387 = vmatpush1.msra.mxu0 0.0
      %388 = vmatprep.subr.mxu0 0.0
      %389 = vmatpush1.msra.mxu0 0.0
      %390 = vmatprep.subr.mxu0 0.0
      %391 = vmatpush1.msra.mxu0 0.0
      %392 = vmatprep.subr.mxu0 0.0
      %393 = vmatpush1.msra.mxu0 0.0
      %394 = vmatprep.subr.mxu0 0.0
      %395 = vmatpush1.msra.mxu0 0.0
      %396 = vmatprep.subr.mxu0 0.0
      %397 = vmatpush1.msra.mxu0 0.0
      %398 = vmatprep.subr.mxu0 0.0
      %399 = vmatpush1.msra.mxu0 0.0
      %400 = vmatprep.subr.mxu0 0.0
      %401 = vmatpush1.msra.mxu0 0.0
      %402 = vmatprep.subr.mxu0 0.0
      %403 = vmatpush1.msra.mxu0 0.0
      %404 = vmatprep.mubr.f32.mxu0 0.0
      %405 = vmatmul.mubr.f32.gmra.mrb[0].mxu0 %v241
      %v406 = vpop.f32.mrb[0].mxu0
      %v407 = vadd.f32 %v238, %v406
      %v408 = vpop.f32.mrb[0].mxu0
      %409 = vmatprep.mubr.f32.mxu0 0.0
      %410 = vmatmul.mubr.f32.gmra.mrb[0].mxu0 %v244
      %v411 = vpop.f32.mrb[0].mxu0
      %v412 = vadd.f32 %v238, %v411
      %v413 = vpop.f32.mrb[0].mxu0
      %414 = vmatprep.mubr.f32.mxu0 0.0
      %415 = vmatmul.mubr.f32.gmra.mrb[0].mxu0 %v247
      %v416 = vpop.f32.mrb[0].mxu0
      %v417 = vadd.f32 %v238, %v416
      %v418 = vpop.f32.mrb[0].mxu0
      %419 = vmatprep.mubr.f32.mxu0 0.0
      %420 = vmatmul.mubr.f32.gmra.mrb[0].mxu0 %v250
      %v421 = vpop.f32.mrb[0].mxu0
      %v422 = vadd.f32 %v238, %v421
      %v423 = vpop.f32.mrb[0].mxu0
      %424 = vmatprep.mubr.f32.mxu0 0.0
      %425 = vmatmul.mubr.f32.gmra.mrb[0].mxu0 %v253
      %v426 = vpop.f32.mrb[0].mxu0
      %v427 = vadd.f32 %v238, %v426
      %v428 = vpop.f32.mrb[0].mxu0
      %429 = vmatprep.mubr.f32.mxu0 0.0
      %430 = vmatmul.mubr.f32.gmra.mrb[0].mxu0 %v256
      %v431 = vpop.f32.mrb[0].mxu0
      %v432 = vadd.f32 %v238, %v431
      %v433 = vpop.f32.mrb[0].mxu0
      %434 = vmatprep.mubr.f32.mxu0 0.0
      %435 = vmatmul.mubr.f32.gmra.mrb[0].mxu0 %v259
      %v436 = vpop.f32.mrb[0].mxu0
      %v437 = vadd.f32 %v238, %v436
      %v438 = vpop.f32.mrb[0].mxu0
      %439 = vmatprep.mubr.f32.mxu0 0.0
      %440 = vmatmul.mubr.f32.gmra.mrb[0].mxu0 %v262
      %v441 = vpop.f32.mrb[0].mxu0
      %v442 = vadd.f32 %v238, %v441
      %v443 = vpop.f32.mrb[0].mxu0
      %444 = vmatprep.mubr.f32.mxu0 0.0
      %445 = vmatmul.mubr.f32.gmra.mrb[0].mxu0 %v265
      %v446 = vpop.f32.mrb[0].mxu0
      %v447 = vadd.f32 %v238, %v446
      %v448 = vpop.f32.mrb[0].mxu0
      %449 = vmatprep.mubr.f32.mxu0 0.0
      %450 = vmatmul.mubr.f32.gmra.mrb[0].mxu0 %v268
      %v451 = vpop.f32.mrb[0].mxu0
      %v452 = vadd.f32 %v238, %v451
      %v453 = vpop.f32.mrb[0].mxu0
      %454 = vmatprep.mubr.f32.mxu0 0.0
      %455 = vmatmul.mubr.f32.gmra.mrb[0].mxu0 %v271
      %v456 = vpop.f32.mrb[0].mxu0
      %v457 = vadd.f32 %v238, %v456
      %v458 = vpop.f32.mrb[0].mxu0
      %459 = vmatprep.mubr.f32.mxu0 0.0
      %460 = vmatmul.mubr.f32.gmra.mrb[0].mxu0 %v274
      %v461 = vpop.f32.mrb[0].mxu0
      %v462 = vadd.f32 %v238, %v461
      %v463 = vpop.f32.mrb[0].mxu0
      %464 = vmatprep.mubr.f32.mxu0 0.0
      %465 = vmatmul.mubr.f32.gmra.mrb[0].mxu0 %v277
      %v466 = vpop.f32.mrb[0].mxu0
      %v467 = vadd.f32 %v238, %v466
      %v468 = vpop.f32.mrb[0].mxu0
      %469 = vmatprep.mubr.f32.mxu0 0.0
      %470 = vmatmul.mubr.f32.gmra.mrb[0].mxu0 %v280
      %v471 = vpop.f32.mrb[0].mxu0
      %v472 = vadd.f32 %v238, %v471
      %v473 = vpop.f32.mrb[0].mxu0
      %474 = vmatprep.mubr.f32.mxu0 0.0
      %475 = vmatmul.mubr.f32.gmra.mrb[0].mxu0 %v283
      %v476 = vpop.f32.mrb[0].mxu0
      %v477 = vadd.f32 %v238, %v476
      %v478 = vpop.f32.mrb[0].mxu0
      %479 = vmatprep.mubr.f32.mxu0 0.0
      %480 = vmatmul.mubr.f32.gmra.mrb[0].mxu0 %v286
      %v481 = vpop.f32.mrb[0].mxu0
      %v482 = vadd.f32 %v238, %v481
      %v483 = vpop.f32.mrb[0].mxu0
      %484 = vmatprep.mubr.f32.mxu0 0.0
      %485 = vmatmul.mubr.f32.gmra.mrb[0].mxu0 %v289
      %v486 = vpop.f32.mrb[0].mxu0
      %v487 = vadd.f32 %v238, %v486
      %v488 = vpop.f32.mrb[0].mxu0
      %489 = vmatprep.mubr.f32.mxu0 0.0
      %490 = vmatmul.mubr.f32.gmra.mrb[0].mxu0 %v292
      %v491 = vpop.f32.mrb[0].mxu0
      %v492 = vadd.f32 %v238, %v491
      %v493 = vpop.f32.mrb[0].mxu0
      %494 = vmatprep.mubr.f32.mxu0 0.0
      %495 = vmatmul.mubr.f32.gmra.mrb[0].mxu0 %v295
      %v496 = vpop.f32.mrb[0].mxu0
      %v497 = vadd.f32 %v238, %v496
      %v498 = vpop.f32.mrb[0].mxu0
      %499 = vmatprep.mubr.f32.mxu0 0.0
      %500 = vmatmul.mubr.f32.gmra.mrb[0].mxu0 %v298
      %v501 = vpop.f32.mrb[0].mxu0
      %v502 = vadd.f32 %v238, %v501
      %v503 = vpop.f32.mrb[0].mxu0
      %504 = vmatprep.mubr.f32.mxu0 0.0
      %505 = vmatmul.mubr.f32.gmra.mrb[0].mxu0 %v301
      %v506 = vpop.f32.mrb[0].mxu0
      %v507 = vadd.f32 %v238, %v506
      %v508 = vpop.f32.mrb[0].mxu0
      %509 = vmatprep.mubr.f32.mxu0 0.0
      %510 = vmatmul.mubr.f32.gmra.mrb[0].mxu0 %v304
      %v511 = vpop.f32.mrb[0].mxu0
      %v512 = vadd.f32 %v238, %v511
      %v513 = vpop.f32.mrb[0].mxu0
      %514 = vmatprep.mubr.f32.mxu0 0.0
      %515 = vmatmul.mubr.f32.gmra.mrb[0].mxu0 %v307
      %v516 = vpop.f32.mrb[0].mxu0
      %v517 = vadd.f32 %v238, %v516
      %v518 = vpop.f32.mrb[0].mxu0
      %519 = vmatprep.mubr.f32.mxu0 0.0
      %520 = vmatmul.mubr.f32.gmra.mrb[0].mxu0 %v310
      %v521 = vpop.f32.mrb[0].mxu0
      %v522 = vadd.f32 %v238, %v521
      %v523 = vpop.f32.mrb[0].mxu0
      %524 = vmatprep.mubr.f32.mxu0 0.0
      %525 = vmatmul.mubr.f32.gmra.mrb[0].mxu0 %v313
      %v526 = vpop.f32.mrb[0].mxu0
      %v527 = vadd.f32 %v238, %v526
      %v528 = vpop.f32.mrb[0].mxu0
      %529 = vmatprep.mubr.f32.mxu0 0.0
      %530 = vmatmul.mubr.f32.gmra.mrb[0].mxu0 %v316
      %v531 = vpop.f32.mrb[0].mxu0
      %v532 = vadd.f32 %v238, %v531
      %v533 = vpop.f32.mrb[0].mxu0
      %534 = vmatprep.mubr.f32.mxu0 0.0
      %535 = vmatmul.mubr.f32.gmra.mrb[0].mxu0 %v319
      %v536 = vpop.f32.mrb[0].mxu0
      %v537 = vadd.f32 %v238, %v536
      %v538 = vpop.f32.mrb[0].mxu0
      %539 = vmatprep.mubr.f32.mxu0 0.0
      %540 = vmatmul.mubr.f32.gmra.mrb[0].mxu0 %v322
      %v541 = vpop.f32.mrb[0].mxu0
      %v542 = vadd.f32 %v238, %v541
      %v543 = vpop.f32.mrb[0].mxu0
      %544 = vmatprep.mubr.f32.mxu0 0.0
      %545 = vmatmul.mubr.f32.gmra.mrb[0].mxu0 %v325
      %v546 = vpop.f32.mrb[0].mxu0
      %v547 = vadd.f32 %v238, %v546
      %v548 = vpop.f32.mrb[0].mxu0
      %549 = vmatprep.mubr.f32.mxu0 0.0
      %550 = vmatmul.mubr.f32.gmra.mrb[0].mxu0 %v328
      %v551 = vpop.f32.mrb[0].mxu0
      %v552 = vadd.f32 %v238, %v551
      %v553 = vpop.f32.mrb[0].mxu0
      %554 = vmatprep.mubr.f32.mxu0 0.0
      %555 = vmatmul.mubr.f32.gmra.mrb[0].mxu0 %v331
      %v556 = vpop.f32.mrb[0].mxu0
      %v557 = vadd.f32 %v238, %v556
      %v558 = vpop.f32.mrb[0].mxu0
      %559 = vmatprep.mubr.f32.mxu0 0.0
      %560 = vmatmul.mubr.f32.gmra.mrb[0].mxu0 %v334
      %v561 = vpop.f32.mrb[0].mxu0
      %v562 = vadd.f32 %v238, %v561
      %v563 = vpop.f32.mrb[0].mxu0
      %564 = vdwg.mxu0
      %v565 = vmin.f32 %v407, 0.0
      %v566 = vmin.f32 %v412, 0.0
      %v567 = vmin.f32 %v417, 0.0
      %v568 = vmin.f32 %v422, 0.0
      %v569 = vmin.f32 %v427, 0.0
      %v570 = vmin.f32 %v432, 0.0
      %v571 = vmin.f32 %v437, 0.0
      %v572 = vmin.f32 %v442, 0.0
      %v573 = vmin.f32 %v447, 0.0
      %v574 = vmin.f32 %v452, 0.0
      %v575 = vmin.f32 %v457, 0.0
      %v576 = vmin.f32 %v462, 0.0
      %v577 = vmin.f32 %v467, 0.0
      %v578 = vmin.f32 %v472, 0.0
      %v579 = vmin.f32 %v477, 0.0
      %v580 = vmin.f32 %v482, 0.0
      %v581 = vmin.f32 %v487, 0.0
      %v582 = vmin.f32 %v492, 0.0
      %v583 = vmin.f32 %v497, 0.0
      %v584 = vmin.f32 %v502, 0.0
      %v585 = vmin.f32 %v507, 0.0
      %v586 = vmin.f32 %v512, 0.0
      %v587 = vmin.f32 %v517, 0.0
      %v588 = vmin.f32 %v522, 0.0
      %v589 = vmin.f32 %v527, 0.0
      %v590 = vmin.f32 %v532, 0.0
      %v591 = vmin.f32 %v537, 0.0
      %v592 = vmin.f32 %v542, 0.0
      %v593 = vmin.f32 %v547, 0.0
      %v594 = vmin.f32 %v552, 0.0
      %v595 = vmin.f32 %v557, 0.0
      %v596 = vmin.f32 %v562, 0.0
      %v597 = vlaneseq
      %v598 = vshrl.u32 %v597, 7
      %v599 = vsub.s32 1, %v598
      %v600 = vrot.slane %v201, %v599
      %v601 = vmul.f32 %v600, %v565
      %v602 = vmul.f32 %v600, %v566
      %v603 = vmul.f32 %v600, %v567
      %v604 = vmul.f32 %v600, %v568
      %v605 = vmul.f32 %v600, %v569
      %v606 = vmul.f32 %v600, %v570
      %v607 = vmul.f32 %v600, %v571
      %v608 = vmul.f32 %v600, %v572
      %v609 = vmul.f32 %v600, %v573
      %v610 = vmul.f32 %v600, %v574
      %v611 = vmul.f32 %v600, %v575
      %v612 = vmul.f32 %v600, %v576
      %v613 = vmul.f32 %v600, %v577
      %v614 = vmul.f32 %v600, %v578
      %v615 = vmul.f32 %v600, %v579
      %v616 = vmul.f32 %v600, %v580
      %v617 = vmul.f32 %v600, %v581
      %v618 = vmul.f32 %v600, %v582
      %v619 = vmul.f32 %v600, %v583
      %v620 = vmul.f32 %v600, %v584
      %v621 = vmul.f32 %v600, %v585
      %v622 = vmul.f32 %v600, %v586
      %v623 = vmul.f32 %v600, %v587
      %v624 = vmul.f32 %v600, %v588
      %v625 = vmul.f32 %v600, %v589
      %v626 = vmul.f32 %v600, %v590
      %v627 = vmul.f32 %v600, %v591
      %v628 = vmul.f32 %v600, %v592
      %v629 = vmul.f32 %v600, %v593
      %v630 = vmul.f32 %v600, %v594
      %v631 = vmul.f32 %v600, %v595
      %v632 = vmul.f32 %v600, %v596
      %v633 = vsub.f32 %v407, %v601
      %v634 = vsub.f32 %v412, %v602
      %v635 = vsub.f32 %v417, %v603
      %v636 = vsub.f32 %v422, %v604
      %v637 = vsub.f32 %v427, %v605
      %v638 = vsub.f32 %v432, %v606
      %v639 = vsub.f32 %v437, %v607
      %v640 = vsub.f32 %v442, %v608
      %v641 = vsub.f32 %v447, %v609
      %v642 = vsub.f32 %v452, %v610
      %v643 = vsub.f32 %v457, %v611
      %v644 = vsub.f32 %v462, %v612
      %v645 = vsub.f32 %v467, %v613
      %v646 = vsub.f32 %v472, %v614
      %v647 = vsub.f32 %v477, %v615
      %v648 = vsub.f32 %v482, %v616
      %v649 = vsub.f32 %v487, %v617
      %v650 = vsub.f32 %v492, %v618
      %v651 = vsub.f32 %v497, %v619
      %v652 = vsub.f32 %v502, %v620
      %v653 = vsub.f32 %v507, %v621
      %v654 = vsub.f32 %v512, %v622
      %v655 = vsub.f32 %v517, %v623
      %v656 = vsub.f32 %v522, %v624
      %v657 = vsub.f32 %v527, %v625
      %v658 = vsub.f32 %v532, %v626
      %v659 = vsub.f32 %v537, %v627
      %v660 = vsub.f32 %v542, %v628
      %v661 = vsub.f32 %v547, %v629
      %v662 = vsub.f32 %v552, %v630
      %v663 = vsub.f32 %v557, %v631
      %v664 = vsub.f32 %v562, %v632
      %vm665 = vcmask 97280
      %666 = vst.msk [vmem:[#allocation2] sm:$0xff] %vm665, 0.0
      %667 = vst.msk [vmem:[#allocation2 + $0x8] sm:$0xff] %vm665, 0.0
      %668 = vst.msk [vmem:[#allocation2 + $0x10] sm:$0xff] %vm665, 0.0
      %669 = vst.msk [vmem:[#allocation2 + $0x18] sm:$0xff] %vm665, 0.0
      %670 = vst.msk [vmem:[#allocation2 + $0x20] sm:$0xff] %vm665, 0.0
      %671 = vst.msk [vmem:[#allocation2 + $0x28] sm:$0xff] %vm665, 0.0
      %672 = vst.msk [vmem:[#allocation2 + $0x30] sm:$0xff] %vm665, 0.0
      %673 = vst.msk [vmem:[#allocation2 + $0x38] sm:$0xff] %vm665, 0.0
      %674 = vst.msk [vmem:[#allocation2 + $0x140] sm:$0xff] %vm665, 0.0
      %675 = vst.msk [vmem:[#allocation2 + $0x148] sm:$0xff] %vm665, 0.0
      %676 = vst.msk [vmem:[#allocation2 + $0x150] sm:$0xff] %vm665, 0.0
      %677 = vst.msk [vmem:[#allocation2 + $0x158] sm:$0xff] %vm665, 0.0
      %678 = vst.msk [vmem:[#allocation2 + $0x160] sm:$0xff] %vm665, 0.0
      %679 = vst.msk [vmem:[#allocation2 + $0x168] sm:$0xff] %vm665, 0.0
      %680 = vst.msk [vmem:[#allocation2 + $0x170] sm:$0xff] %vm665, 0.0
      %681 = vst.msk [vmem:[#allocation2 + $0x178] sm:$0xff] %vm665, 0.0
      %682 = vst.msk [vmem:[#allocation2 + $0x40] sm:$0xff] %vm665, %v633
      %683 = vst.msk [vmem:[#allocation2 + $0x48] sm:$0xff] %vm665, %v634
      %684 = vst.msk [vmem:[#allocation2 + $0x50] sm:$0xff] %vm665, %v635
      %685 = vst.msk [vmem:[#allocation2 + $0x58] sm:$0xff] %vm665, %v636
      %686 = vst.msk [vmem:[#allocation2 + $0x60] sm:$0xff] %vm665, %v637
      %687 = vst.msk [vmem:[#allocation2 + $0x68] sm:$0xff] %vm665, %v638
      %688 = vst.msk [vmem:[#allocation2 + $0x70] sm:$0xff] %vm665, %v639
      %689 = vst.msk [vmem:[#allocation2 + $0x78] sm:$0xff] %vm665, %v640
      %690 = vst.msk [vmem:[#allocation2 + $0x80] sm:$0xff] %vm665, %v641
      %691 = vst.msk [vmem:[#allocation2 + $0x88] sm:$0xff] %vm665, %v642
      %692 = vst.msk [vmem:[#allocation2 + $0x90] sm:$0xff] %vm665, %v643
      %693 = vst.msk [vmem:[#allocation2 + $0x98] sm:$0xff] %vm665, %v644
      %694 = vst.msk [vmem:[#allocation2 + $0xa0] sm:$0xff] %vm665, %v645
      %695 = vst.msk [vmem:[#allocation2 + $0xa8] sm:$0xff] %vm665, %v646
      %696 = vst.msk [vmem:[#allocation2 + $0xb0] sm:$0xff] %vm665, %v647
      %697 = vst.msk [vmem:[#allocation2 + $0xb8] sm:$0xff] %vm665, %v648
      %698 = vst.msk [vmem:[#allocation2 + $0xc0] sm:$0xff] %vm665, %v649
      %699 = vst.msk [vmem:[#allocation2 + $0xc8] sm:$0xff] %vm665, %v650
      %700 = vst.msk [vmem:[#allocation2 + $0xd0] sm:$0xff] %vm665, %v651
      %701 = vst.msk [vmem:[#allocation2 + $0xd8] sm:$0xff] %vm665, %v652
      %702 = vst.msk [vmem:[#allocation2 + $0xe0] sm:$0xff] %vm665, %v653
      %703 = vst.msk [vmem:[#allocation2 + $0xe8] sm:$0xff] %vm665, %v654
      %704 = vst.msk [vmem:[#allocation2 + $0xf0] sm:$0xff] %vm665, %v655
      %705 = vst.msk [vmem:[#allocation2 + $0xf8] sm:$0xff] %vm665, %v656
      %706 = vst.msk [vmem:[#allocation2 + $0x100] sm:$0xff] %vm665, %v657
      %707 = vst.msk [vmem:[#allocation2 + $0x108] sm:$0xff] %vm665, %v658
      %708 = vst.msk [vmem:[#allocation2 + $0x110] sm:$0xff] %vm665, %v659
      %709 = vst.msk [vmem:[#allocation2 + $0x118] sm:$0xff] %vm665, %v660
      %710 = vst.msk [vmem:[#allocation2 + $0x120] sm:$0xff] %vm665, %v661
      %711 = vst.msk [vmem:[#allocation2 + $0x128] sm:$0xff] %vm665, %v662
      %712 = vst.msk [vmem:[#allocation2 + $0x130] sm:$0xff] %vm665, %v663
      %713 = vst.msk [vmem:[#allocation2 + $0x138] sm:$0xff] %vm665, %v664
      %v714 = vld [vmem:[#allocation2] sm:$0xff]
      %v715 = vld [vmem:[#allocation2 + $0x8] sm:$0xff]
      %v716 = vld [vmem:[#allocation2 + $0x10] sm:$0xff]
      %v717 = vld [vmem:[#allocation2 + $0x18] sm:$0xff]
      %v718 = vld [vmem:[#allocation2 + $0x20] sm:$0xff]
      %v719 = vld [vmem:[#allocation2 + $0x28] sm:$0xff]
      %v720 = vld [vmem:[#allocation2 + $0x30] sm:$0xff]
      %v721 = vld [vmem:[#allocation2 + $0x38] sm:$0xff]
      %v722 = vld [vmem:[#allocation2 + $0x40] sm:$0xff]
      %v723 = vld [vmem:[#allocation2 + $0x48] sm:$0xff]
      %v724 = vld [vmem:[#allocation2 + $0x50] sm:$0xff]
      %v725 = vld [vmem:[#allocation2 + $0x58] sm:$0xff]
      %v726 = vld [vmem:[#allocation2 + $0x60] sm:$0xff]
      %v727 = vld [vmem:[#allocation2 + $0x68] sm:$0xff]
      %v728 = vld [vmem:[#allocation2 + $0x70] sm:$0xff]
      %v729 = vld [vmem:[#allocation2 + $0x78] sm:$0xff]
      %v730 = vld [vmem:[#allocation2 + $0x80] sm:$0xff]
      %v731 = vld [vmem:[#allocation2 + $0x88] sm:$0xff]
      %v732 = vld [vmem:[#allocation2 + $0x90] sm:$0xff]
      %v733 = vld [vmem:[#allocation2 + $0x98] sm:$0xff]
      %v734 = vld [vmem:[#allocation2 + $0xa0] sm:$0xff]
      %v735 = vld [vmem:[#allocation2 + $0xa8] sm:$0xff]
      %v736 = vld [vmem:[#allocation2 + $0xb0] sm:$0xff]
      %v737 = vld [vmem:[#allocation2 + $0xb8] sm:$0xff]
      %v738 = vld [vmem:[#allocation2 + $0xc0] sm:$0xff]
      %v739 = vld [vmem:[#allocation2 + $0xc8] sm:$0xff]
      %v740 = vld [vmem:[#allocation2 + $0xd0] sm:$0xff]
      %v741 = vld [vmem:[#allocation2 + $0xd8] sm:$0xff]
      %v742 = vld [vmem:[#allocation2 + $0xe0] sm:$0xff]
      %v743 = vld [vmem:[#allocation2 + $0xe8] sm:$0xff]
      %v744 = vld [vmem:[#allocation2 + $0xf0] sm:$0xff]
      %v745 = vld [vmem:[#allocation2 + $0xf8] sm:$0xff]
      %v746 = vld [vmem:[%s3] sm:$0xff]
      %v747 = vld [vmem:[%s3 + $0x8] sm:$0xf]
      %v748 = vld [vmem:[#allocation2 + $0x100] sm:$0xff]
      %v749 = vld [vmem:[#allocation2 + $0x108] sm:$0xff]
      %s750 = scalar_lea.vmem %s3, 16
      %v751 = vld [vmem:[%s750] sm:$0xff]
      %v752 = vld [vmem:[%s750 + $0x8] sm:$0xf]
      %v754 = vsel %vm665, %v716, 0
      %v757 = vsel %vm665, %v717, 0
      %v760 = vsel %vm665, %v718, 0
      %v763 = vsel %vm665, %v719, 0
      %v766 = vsel %vm665, %v720, 0
      %v769 = vsel %vm665, %v721, 0
      %v772 = vsel %vm665, %v722, 0
      %v775 = vsel %vm665, %v723, 0
      %v778 = vsel %vm665, %v724, 0
      %v781 = vsel %vm665, %v725, 0
      %v784 = vsel %vm665, %v726, 0
      %v787 = vsel %vm665, %v727, 0
      %v790 = vsel %vm665, %v728, 0
      %v793 = vsel %vm665, %v729, 0
      %v796 = vsel %vm665, %v730, 0
      %v799 = vsel %vm665, %v731, 0
      %v802 = vsel %vm665, %v732, 0
      %v805 = vsel %vm665, %v733, 0
      %v808 = vsel %vm665, %v734, 0
      %v811 = vsel %vm665, %v735, 0
      %v814 = vsel %vm665, %v736, 0
      %v817 = vsel %vm665, %v737, 0
      %v820 = vsel %vm665, %v738, 0
      %v823 = vsel %vm665, %v739, 0
      %v826 = vsel %vm665, %v740, 0
      %v829 = vsel %vm665, %v741, 0
      %v832 = vsel %vm665, %v742, 0
      %v835 = vsel %vm665, %v743, 0
      %v838 = vsel %vm665, %v744, 0
      %v841 = vsel %vm665, %v745, 0
      %v844 = vsel %vm665, %v748, 0
      %v847 = vsel %vm665, %v749, 0
      %v850 = vsel %vm336, %v752, 0
      %852 = vmatprep.subr.mxu0 0.0
      %853 = vmatpush1.msra.mxu0 %v751
      %854 = vmatprep.subr.mxu0 0.0
      %855 = vmatpush1.msra.mxu0 %v850
      %856 = vmatprep.subr.mxu0 0.0
      %857 = vmatpush1.msra.mxu0 0.0
      %858 = vmatprep.subr.mxu0 0.0
      %859 = vmatpush1.msra.mxu0 0.0
      %860 = vmatprep.subr.mxu0 0.0
      %861 = vmatpush1.msra.mxu0 0.0
      %862 = vmatprep.subr.mxu0 0.0
      %863 = vmatpush1.msra.mxu0 0.0
      %864 = vmatprep.subr.mxu0 0.0
      %865 = vmatpush1.msra.mxu0 0.0
      %866 = vmatprep.subr.mxu0 0.0
      %867 = vmatpush1.msra.mxu0 0.0
      %868 = vmatprep.subr.mxu0 0.0
      %869 = vmatpush1.msra.mxu0 0.0
      %870 = vmatprep.subr.mxu0 0.0
      %871 = vmatpush1.msra.mxu0 0.0
      %872 = vmatprep.subr.mxu0 0.0
      %873 = vmatpush1.msra.mxu0 0.0
      %874 = vmatprep.subr.mxu0 0.0
      %875 = vmatpush1.msra.mxu0 0.0
      %876 = vmatprep.subr.mxu0 0.0
      %877 = vmatpush1.msra.mxu0 0.0
      %878 = vmatprep.subr.mxu0 0.0
      %879 = vmatpush1.msra.mxu0 0.0
      %880 = vmatprep.subr.mxu0 0.0
      %881 = vmatpush1.msra.mxu0 0.0
      %882 = vmatprep.subr.mxu0 0.0
      %883 = vmatpush1.msra.mxu0 0.0
      %884 = vmatprep.subr.mxu0 0.0
      %885 = vmatpush1.msra.mxu0 0.0
      %886 = vmatprep.subr.mxu0 0.0
      %887 = vmatpush1.msra.mxu0 0.0
      %888 = vmatprep.subr.mxu0 0.0
      %889 = vmatpush1.msra.mxu0 0.0
      %890 = vmatprep.subr.mxu0 0.0
      %891 = vmatpush1.msra.mxu0 0.0
      %892 = vmatprep.subr.mxu0 0.0
      %893 = vmatpush1.msra.mxu0 0.0
      %894 = vmatprep.subr.mxu0 0.0
      %895 = vmatpush1.msra.mxu0 0.0
      %896 = vmatprep.subr.mxu0 0.0
      %897 = vmatpush1.msra.mxu0 0.0
      %898 = vmatprep.subr.mxu0 0.0
      %899 = vmatpush1.msra.mxu0 0.0
      %900 = vmatprep.subr.mxu0 0.0
      %901 = vmatpush1.msra.mxu0 0.0
      %902 = vmatprep.subr.mxu0 0.0
      %903 = vmatpush1.msra.mxu0 0.0
      %904 = vmatprep.subr.mxu0 0.0
      %905 = vmatpush1.msra.mxu0 0.0
      %906 = vmatprep.subr.mxu0 0.0
      %907 = vmatpush1.msra.mxu0 0.0
      %908 = vmatprep.subr.mxu0 0.0
      %909 = vmatpush1.msra.mxu0 0.0
      %910 = vmatprep.subr.mxu0 0.0
      %911 = vmatpush1.msra.mxu0 0.0
      %912 = vmatprep.subr.mxu0 0.0
      %913 = vmatpush1.msra.mxu0 0.0
      %914 = vmatprep.subr.mxu0 0.0
      %915 = vmatpush1.msra.mxu0 0.0
      %916 = vmatprep.mubr.f32.mxu0 0.0
      %917 = vmatmul.mubr.f32.gmra.mrb[0].mxu0 %v754
      %v918 = vpop.f32.mrb[0].mxu0
      %v919 = vadd.f32 0.0, %v918
      %v920 = vpop.f32.mrb[0].mxu0
      %921 = vmatprep.mubr.f32.mxu0 0.0
      %922 = vmatmul.mubr.f32.gmra.mrb[0].mxu0 %v757
      %v923 = vpop.f32.mrb[0].mxu0
      %v924 = vadd.f32 0.0, %v923
      %v925 = vpop.f32.mrb[0].mxu0
      %926 = vmatprep.mubr.f32.mxu0 0.0
      %927 = vmatmul.mubr.f32.gmra.mrb[0].mxu0 %v760
      %v928 = vpop.f32.mrb[0].mxu0
      %v929 = vadd.f32 0.0, %v928
      %v930 = vpop.f32.mrb[0].mxu0
      %931 = vmatprep.mubr.f32.mxu0 0.0
      %932 = vmatmul.mubr.f32.gmra.mrb[0].mxu0 %v763
      %v933 = vpop.f32.mrb[0].mxu0
      %v934 = vadd.f32 0.0, %v933
      %v935 = vpop.f32.mrb[0].mxu0
      %936 = vmatprep.mubr.f32.mxu0 0.0
      %937 = vmatmul.mubr.f32.gmra.mrb[0].mxu0 %v766
      %v938 = vpop.f32.mrb[0].mxu0
      %v939 = vadd.f32 0.0, %v938
      %v940 = vpop.f32.mrb[0].mxu0
      %941 = vmatprep.mubr.f32.mxu0 0.0
      %942 = vmatmul.mubr.f32.gmra.mrb[0].mxu0 %v769
      %v943 = vpop.f32.mrb[0].mxu0
      %v944 = vadd.f32 0.0, %v943
      %v945 = vpop.f32.mrb[0].mxu0
      %946 = vmatprep.mubr.f32.mxu0 0.0
      %947 = vmatmul.mubr.f32.gmra.mrb[0].mxu0 %v772
      %v948 = vpop.f32.mrb[0].mxu0
      %v949 = vadd.f32 0.0, %v948
      %v950 = vpop.f32.mrb[0].mxu0
      %951 = vmatprep.mubr.f32.mxu0 0.0
      %952 = vmatmul.mubr.f32.gmra.mrb[0].mxu0 %v775
      %v953 = vpop.f32.mrb[0].mxu0
      %v954 = vadd.f32 0.0, %v953
      %v955 = vpop.f32.mrb[0].mxu0
      %956 = vmatprep.mubr.f32.mxu0 0.0
      %957 = vmatmul.mubr.f32.gmra.mrb[0].mxu0 %v778
      %v958 = vpop.f32.mrb[0].mxu0
      %v959 = vadd.f32 0.0, %v958
      %v960 = vpop.f32.mrb[0].mxu0
      %961 = vmatprep.mubr.f32.mxu0 0.0
      %962 = vmatmul.mubr.f32.gmra.mrb[0].mxu0 %v781
      %v963 = vpop.f32.mrb[0].mxu0
      %v964 = vadd.f32 0.0, %v963
      %v965 = vpop.f32.mrb[0].mxu0
      %966 = vmatprep.mubr.f32.mxu0 0.0
      %967 = vmatmul.mubr.f32.gmra.mrb[0].mxu0 %v784
      %v968 = vpop.f32.mrb[0].mxu0
      %v969 = vadd.f32 0.0, %v968
      %v970 = vpop.f32.mrb[0].mxu0
      %971 = vmatprep.mubr.f32.mxu0 0.0
      %972 = vmatmul.mubr.f32.gmra.mrb[0].mxu0 %v787
      %v973 = vpop.f32.mrb[0].mxu0
      %v974 = vadd.f32 0.0, %v973
      %v975 = vpop.f32.mrb[0].mxu0
      %976 = vmatprep.mubr.f32.mxu0 0.0
      %977 = vmatmul.mubr.f32.gmra.mrb[0].mxu0 %v790
      %v978 = vpop.f32.mrb[0].mxu0
      %v979 = vadd.f32 0.0, %v978
      %v980 = vpop.f32.mrb[0].mxu0
      %981 = vmatprep.mubr.f32.mxu0 0.0
      %982 = vmatmul.mubr.f32.gmra.mrb[0].mxu0 %v793
      %v983 = vpop.f32.mrb[0].mxu0
      %v984 = vadd.f32 0.0, %v983
      %v985 = vpop.f32.mrb[0].mxu0
      %986 = vmatprep.mubr.f32.mxu0 0.0
      %987 = vmatmul.mubr.f32.gmra.mrb[0].mxu0 %v796
      %v988 = vpop.f32.mrb[0].mxu0
      %v989 = vadd.f32 0.0, %v988
      %v990 = vpop.f32.mrb[0].mxu0
      %991 = vmatprep.mubr.f32.mxu0 0.0
      %992 = vmatmul.mubr.f32.gmra.mrb[0].mxu0 %v799
      %v993 = vpop.f32.mrb[0].mxu0
      %v994 = vadd.f32 0.0, %v993
      %v995 = vpop.f32.mrb[0].mxu0
      %996 = vmatprep.mubr.f32.mxu0 0.0
      %997 = vmatmul.mubr.f32.gmra.mrb[0].mxu0 %v802
      %v998 = vpop.f32.mrb[0].mxu0
      %v999 = vadd.f32 0.0, %v998
      %v1000 = vpop.f32.mrb[0].mxu0
      %1001 = vmatprep.mubr.f32.mxu0 0.0
      %1002 = vmatmul.mubr.f32.gmra.mrb[0].mxu0 %v805
      %v1003 = vpop.f32.mrb[0].mxu0
      %v1004 = vadd.f32 0.0, %v1003
      %v1005 = vpop.f32.mrb[0].mxu0
      %1006 = vmatprep.mubr.f32.mxu0 0.0
      %1007 = vmatmul.mubr.f32.gmra.mrb[0].mxu0 %v808
      %v1008 = vpop.f32.mrb[0].mxu0
      %v1009 = vadd.f32 0.0, %v1008
      %v1010 = vpop.f32.mrb[0].mxu0
      %1011 = vmatprep.mubr.f32.mxu0 0.0
      %1012 = vmatmul.mubr.f32.gmra.mrb[0].mxu0 %v811
      %v1013 = vpop.f32.mrb[0].mxu0
      %v1014 = vadd.f32 0.0, %v1013
      %v1015 = vpop.f32.mrb[0].mxu0
      %1016 = vmatprep.mubr.f32.mxu0 0.0
      %1017 = vmatmul.mubr.f32.gmra.mrb[0].mxu0 %v814
      %v1018 = vpop.f32.mrb[0].mxu0
      %v1019 = vadd.f32 0.0, %v1018
      %v1020 = vpop.f32.mrb[0].mxu0
      %1021 = vmatprep.mubr.f32.mxu0 0.0
      %1022 = vmatmul.mubr.f32.gmra.mrb[0].mxu0 %v817
      %v1023 = vpop.f32.mrb[0].mxu0
      %v1024 = vadd.f32 0.0, %v1023
      %v1025 = vpop.f32.mrb[0].mxu0
      %1026 = vmatprep.mubr.f32.mxu0 0.0
      %1027 = vmatmul.mubr.f32.gmra.mrb[0].mxu0 %v820
      %v1028 = vpop.f32.mrb[0].mxu0
      %v1029 = vadd.f32 0.0, %v1028
      %v1030 = vpop.f32.mrb[0].mxu0
      %1031 = vmatprep.mubr.f32.mxu0 0.0
      %1032 = vmatmul.mubr.f32.gmra.mrb[0].mxu0 %v823
      %v1033 = vpop.f32.mrb[0].mxu0
      %v1034 = vadd.f32 0.0, %v1033
      %v1035 = vpop.f32.mrb[0].mxu0
      %1036 = vmatprep.mubr.f32.mxu0 0.0
      %1037 = vmatmul.mubr.f32.gmra.mrb[0].mxu0 %v826
      %v1038 = vpop.f32.mrb[0].mxu0
      %v1039 = vadd.f32 0.0, %v1038
      %v1040 = vpop.f32.mrb[0].mxu0
      %1041 = vmatprep.mubr.f32.mxu0 0.0
      %1042 = vmatmul.mubr.f32.gmra.mrb[0].mxu0 %v829
      %v1043 = vpop.f32.mrb[0].mxu0
      %v1044 = vadd.f32 0.0, %v1043
      %v1045 = vpop.f32.mrb[0].mxu0
      %1046 = vmatprep.mubr.f32.mxu0 0.0
      %1047 = vmatmul.mubr.f32.gmra.mrb[0].mxu0 %v832
      %v1048 = vpop.f32.mrb[0].mxu0
      %v1049 = vadd.f32 0.0, %v1048
      %v1050 = vpop.f32.mrb[0].mxu0
      %1051 = vmatprep.mubr.f32.mxu0 0.0
      %1052 = vmatmul.mubr.f32.gmra.mrb[0].mxu0 %v835
      %v1053 = vpop.f32.mrb[0].mxu0
      %v1054 = vadd.f32 0.0, %v1053
      %v1055 = vpop.f32.mrb[0].mxu0
      %1056 = vmatprep.mubr.f32.mxu0 0.0
      %1057 = vmatmul.mubr.f32.gmra.mrb[0].mxu0 %v838
      %v1058 = vpop.f32.mrb[0].mxu0
      %v1059 = vadd.f32 0.0, %v1058
      %v1060 = vpop.f32.mrb[0].mxu0
      %1061 = vmatprep.mubr.f32.mxu0 0.0
      %1062 = vmatmul.mubr.f32.gmra.mrb[0].mxu0 %v841
      %v1063 = vpop.f32.mrb[0].mxu0
      %v1064 = vadd.f32 0.0, %v1063
      %v1065 = vpop.f32.mrb[0].mxu0
      %1066 = vmatprep.mubr.f32.mxu0 0.0
      %1067 = vmatmul.mubr.f32.gmra.mrb[0].mxu0 %v844
      %v1068 = vpop.f32.mrb[0].mxu0
      %v1069 = vadd.f32 0.0, %v1068
      %v1070 = vpop.f32.mrb[0].mxu0
      %1071 = vmatprep.mubr.f32.mxu0 0.0
      %1072 = vmatmul.mubr.f32.gmra.mrb[0].mxu0 %v847
      %v1073 = vpop.f32.mrb[0].mxu0
      %v1074 = vadd.f32 0.0, %v1073
      %v1075 = vpop.f32.mrb[0].mxu0
      %1076 = vdwg.mxu0
      %v1078 = vsel %vm665, %v714, 0
      %v1081 = vsel %vm665, %v715, 0
      %v1084 = vsel %vm336, %v747, 0
      %1086 = vmatprep.subr.mxu0 0.0
      %1087 = vmatpush1.msra.mxu0 %v746
      %1088 = vmatprep.subr.mxu0 0.0
      %1089 = vmatpush1.msra.mxu0 %v1084
      %1090 = vmatprep.subr.mxu0 0.0
      %1091 = vmatpush1.msra.mxu0 0.0
      %1092 = vmatprep.subr.mxu0 0.0
      %1093 = vmatpush1.msra.mxu0 0.0
      %1094 = vmatprep.subr.mxu0 0.0
      %1095 = vmatpush1.msra.mxu0 0.0
      %1096 = vmatprep.subr.mxu0 0.0
      %1097 = vmatpush1.msra.mxu0 0.0
      %1098 = vmatprep.subr.mxu0 0.0
      %1099 = vmatpush1.msra.mxu0 0.0
      %1100 = vmatprep.subr.mxu0 0.0
      %1101 = vmatpush1.msra.mxu0 0.0
      %1102 = vmatprep.subr.mxu0 0.0
      %1103 = vmatpush1.msra.mxu0 0.0
      %1104 = vmatprep.subr.mxu0 0.0
      %1105 = vmatpush1.msra.mxu0 0.0
      %1106 = vmatprep.subr.mxu0 0.0
      %1107 = vmatpush1.msra.mxu0 0.0
      %1108 = vmatprep.subr.mxu0 0.0
      %1109 = vmatpush1.msra.mxu0 0.0
      %1110 = vmatprep.subr.mxu0 0.0
      %1111 = vmatpush1.msra.mxu0 0.0
      %1112 = vmatprep.subr.mxu0 0.0
      %1113 = vmatpush1.msra.mxu0 0.0
      %1114 = vmatprep.subr.mxu0 0.0
      %1115 = vmatpush1.msra.mxu0 0.0
      %1116 = vmatprep.subr.mxu0 0.0
      %1117 = vmatpush1.msra.mxu0 0.0
      %1118 = vmatprep.subr.mxu0 0.0
      %1119 = vmatpush1.msra.mxu0 0.0
      %1120 = vmatprep.subr.mxu0 0.0
      %1121 = vmatpush1.msra.mxu0 0.0
      %1122 = vmatprep.subr.mxu0 0.0
      %1123 = vmatpush1.msra.mxu0 0.0
      %1124 = vmatprep.subr.mxu0 0.0
      %1125 = vmatpush1.msra.mxu0 0.0
      %1126 = vmatprep.subr.mxu0 0.0
      %1127 = vmatpush1.msra.mxu0 0.0
      %1128 = vmatprep.subr.mxu0 0.0
      %1129 = vmatpush1.msra.mxu0 0.0
      %1130 = vmatprep.subr.mxu0 0.0
      %1131 = vmatpush1.msra.mxu0 0.0
      %1132 = vmatprep.subr.mxu0 0.0
      %1133 = vmatpush1.msra.mxu0 0.0
      %1134 = vmatprep.subr.mxu0 0.0
      %1135 = vmatpush1.msra.mxu0 0.0
      %1136 = vmatprep.subr.mxu0 0.0
      %1137 = vmatpush1.msra.mxu0 0.0
      %1138 = vmatprep.subr.mxu0 0.0
      %1139 = vmatpush1.msra.mxu0 0.0
      %1140 = vmatprep.subr.mxu0 0.0
      %1141 = vmatpush1.msra.mxu0 0.0
      %1142 = vmatprep.subr.mxu0 0.0
      %1143 = vmatpush1.msra.mxu0 0.0
      %1144 = vmatprep.subr.mxu0 0.0
      %1145 = vmatpush1.msra.mxu0 0.0
      %1146 = vmatprep.subr.mxu0 0.0
      %1147 = vmatpush1.msra.mxu0 0.0
      %1148 = vmatprep.subr.mxu0 0.0
      %1149 = vmatpush1.msra.mxu0 0.0
      %1150 = vmatprep.mubr.f32.mxu0 0.0
      %1151 = vmatmul.mubr.f32.gmra.mrb[0].mxu0 %v1078
      %v1152 = vpop.f32.mrb[0].mxu0
      %v1153 = vadd.f32 %v919, %v1152
      %v1154 = vpop.f32.mrb[0].mxu0
      %1155 = vmatprep.mubr.f32.mxu0 0.0
      %1156 = vmatmul.mubr.f32.gmra.mrb[0].mxu0 %v1081
      %v1157 = vpop.f32.mrb[0].mxu0
      %v1158 = vadd.f32 %v924, %v1157
      %v1159 = vpop.f32.mrb[0].mxu0
      %1160 = vmatprep.mubr.f32.mxu0 0.0
      %1161 = vmatmul.mubr.f32.gmra.mrb[0].mxu0 %v754
      %v1162 = vpop.f32.mrb[0].mxu0
      %v1163 = vadd.f32 %v929, %v1162
      %v1164 = vpop.f32.mrb[0].mxu0
      %1165 = vmatprep.mubr.f32.mxu0 0.0
      %1166 = vmatmul.mubr.f32.gmra.mrb[0].mxu0 %v757
      %v1167 = vpop.f32.mrb[0].mxu0
      %v1168 = vadd.f32 %v934, %v1167
      %v1169 = vpop.f32.mrb[0].mxu0
      %1170 = vmatprep.mubr.f32.mxu0 0.0
      %1171 = vmatmul.mubr.f32.gmra.mrb[0].mxu0 %v760
      %v1172 = vpop.f32.mrb[0].mxu0
      %v1173 = vadd.f32 %v939, %v1172
      %v1174 = vpop.f32.mrb[0].mxu0
      %1175 = vmatprep.mubr.f32.mxu0 0.0
      %1176 = vmatmul.mubr.f32.gmra.mrb[0].mxu0 %v763
      %v1177 = vpop.f32.mrb[0].mxu0
      %v1178 = vadd.f32 %v944, %v1177
      %v1179 = vpop.f32.mrb[0].mxu0
      %1180 = vmatprep.mubr.f32.mxu0 0.0
      %1181 = vmatmul.mubr.f32.gmra.mrb[0].mxu0 %v766
      %v1182 = vpop.f32.mrb[0].mxu0
      %v1183 = vadd.f32 %v949, %v1182
      %v1184 = vpop.f32.mrb[0].mxu0
      %1185 = vmatprep.mubr.f32.mxu0 0.0
      %1186 = vmatmul.mubr.f32.gmra.mrb[0].mxu0 %v769
      %v1187 = vpop.f32.mrb[0].mxu0
      %v1188 = vadd.f32 %v954, %v1187
      %v1189 = vpop.f32.mrb[0].mxu0
      %1190 = vmatprep.mubr.f32.mxu0 0.0
      %1191 = vmatmul.mubr.f32.gmra.mrb[0].mxu0 %v772
      %v1192 = vpop.f32.mrb[0].mxu0
      %v1193 = vadd.f32 %v959, %v1192
      %v1194 = vpop.f32.mrb[0].mxu0
      %1195 = vmatprep.mubr.f32.mxu0 0.0
      %1196 = vmatmul.mubr.f32.gmra.mrb[0].mxu0 %v775
      %v1197 = vpop.f32.mrb[0].mxu0
      %v1198 = vadd.f32 %v964, %v1197
      %v1199 = vpop.f32.mrb[0].mxu0
      %1200 = vmatprep.mubr.f32.mxu0 0.0
      %1201 = vmatmul.mubr.f32.gmra.mrb[0].mxu0 %v778
      %v1202 = vpop.f32.mrb[0].mxu0
      %v1203 = vadd.f32 %v969, %v1202
      %v1204 = vpop.f32.mrb[0].mxu0
      %1205 = vmatprep.mubr.f32.mxu0 0.0
      %1206 = vmatmul.mubr.f32.gmra.mrb[0].mxu0 %v781
      %v1207 = vpop.f32.mrb[0].mxu0
      %v1208 = vadd.f32 %v974, %v1207
      %v1209 = vpop.f32.mrb[0].mxu0
      %1210 = vmatprep.mubr.f32.mxu0 0.0
      %1211 = vmatmul.mubr.f32.gmra.mrb[0].mxu0 %v784
      %v1212 = vpop.f32.mrb[0].mxu0
      %v1213 = vadd.f32 %v979, %v1212
      %v1214 = vpop.f32.mrb[0].mxu0
      %1215 = vmatprep.mubr.f32.mxu0 0.0
      %1216 = vmatmul.mubr.f32.gmra.mrb[0].mxu0 %v787
      %v1217 = vpop.f32.mrb[0].mxu0
      %v1218 = vadd.f32 %v984, %v1217
      %v1219 = vpop.f32.mrb[0].mxu0
      %1220 = vmatprep.mubr.f32.mxu0 0.0
      %1221 = vmatmul.mubr.f32.gmra.mrb[0].mxu0 %v790
      %v1222 = vpop.f32.mrb[0].mxu0
      %v1223 = vadd.f32 %v989, %v1222
      %v1224 = vpop.f32.mrb[0].mxu0
      %1225 = vmatprep.mubr.f32.mxu0 0.0
      %1226 = vmatmul.mubr.f32.gmra.mrb[0].mxu0 %v793
      %v1227 = vpop.f32.mrb[0].mxu0
      %v1228 = vadd.f32 %v994, %v1227
      %v1229 = vpop.f32.mrb[0].mxu0
      %1230 = vmatprep.mubr.f32.mxu0 0.0
      %1231 = vmatmul.mubr.f32.gmra.mrb[0].mxu0 %v796
      %v1232 = vpop.f32.mrb[0].mxu0
      %v1233 = vadd.f32 %v999, %v1232
      %v1234 = vpop.f32.mrb[0].mxu0
      %1235 = vmatprep.mubr.f32.mxu0 0.0
      %1236 = vmatmul.mubr.f32.gmra.mrb[0].mxu0 %v799
      %v1237 = vpop.f32.mrb[0].mxu0
      %v1238 = vadd.f32 %v1004, %v1237
      %v1239 = vpop.f32.mrb[0].mxu0
      %1240 = vmatprep.mubr.f32.mxu0 0.0
      %1241 = vmatmul.mubr.f32.gmra.mrb[0].mxu0 %v802
      %v1242 = vpop.f32.mrb[0].mxu0
      %v1243 = vadd.f32 %v1009, %v1242
      %v1244 = vpop.f32.mrb[0].mxu0
      %1245 = vmatprep.mubr.f32.mxu0 0.0
      %1246 = vmatmul.mubr.f32.gmra.mrb[0].mxu0 %v805
      %v1247 = vpop.f32.mrb[0].mxu0
      %v1248 = vadd.f32 %v1014, %v1247
      %v1249 = vpop.f32.mrb[0].mxu0
      %1250 = vmatprep.mubr.f32.mxu0 0.0
      %1251 = vmatmul.mubr.f32.gmra.mrb[0].mxu0 %v808
      %v1252 = vpop.f32.mrb[0].mxu0
      %v1253 = vadd.f32 %v1019, %v1252
      %v1254 = vpop.f32.mrb[0].mxu0
      %1255 = vmatprep.mubr.f32.mxu0 0.0
      %1256 = vmatmul.mubr.f32.gmra.mrb[0].mxu0 %v811
      %v1257 = vpop.f32.mrb[0].mxu0
      %v1258 = vadd.f32 %v1024, %v1257
      %v1259 = vpop.f32.mrb[0].mxu0
      %1260 = vmatprep.mubr.f32.mxu0 0.0
      %1261 = vmatmul.mubr.f32.gmra.mrb[0].mxu0 %v814
      %v1262 = vpop.f32.mrb[0].mxu0
      %v1263 = vadd.f32 %v1029, %v1262
      %v1264 = vpop.f32.mrb[0].mxu0
      %1265 = vmatprep.mubr.f32.mxu0 0.0
      %1266 = vmatmul.mubr.f32.gmra.mrb[0].mxu0 %v817
      %v1267 = vpop.f32.mrb[0].mxu0
      %v1268 = vadd.f32 %v1034, %v1267
      %v1269 = vpop.f32.mrb[0].mxu0
      %1270 = vmatprep.mubr.f32.mxu0 0.0
      %1271 = vmatmul.mubr.f32.gmra.mrb[0].mxu0 %v820
      %v1272 = vpop.f32.mrb[0].mxu0
      %v1273 = vadd.f32 %v1039, %v1272
      %v1274 = vpop.f32.mrb[0].mxu0
      %1275 = vmatprep.mubr.f32.mxu0 0.0
      %1276 = vmatmul.mubr.f32.gmra.mrb[0].mxu0 %v823
      %v1277 = vpop.f32.mrb[0].mxu0
      %v1278 = vadd.f32 %v1044, %v1277
      %v1279 = vpop.f32.mrb[0].mxu0
      %1280 = vmatprep.mubr.f32.mxu0 0.0
      %1281 = vmatmul.mubr.f32.gmra.mrb[0].mxu0 %v826
      %v1282 = vpop.f32.mrb[0].mxu0
      %v1283 = vadd.f32 %v1049, %v1282
      %v1284 = vpop.f32.mrb[0].mxu0
      %1285 = vmatprep.mubr.f32.mxu0 0.0
      %1286 = vmatmul.mubr.f32.gmra.mrb[0].mxu0 %v829
      %v1287 = vpop.f32.mrb[0].mxu0
      %v1288 = vadd.f32 %v1054, %v1287
      %v1289 = vpop.f32.mrb[0].mxu0
      %1290 = vmatprep.mubr.f32.mxu0 0.0
      %1291 = vmatmul.mubr.f32.gmra.mrb[0].mxu0 %v832
      %v1292 = vpop.f32.mrb[0].mxu0
      %v1293 = vadd.f32 %v1059, %v1292
      %v1294 = vpop.f32.mrb[0].mxu0
      %1295 = vmatprep.mubr.f32.mxu0 0.0
      %1296 = vmatmul.mubr.f32.gmra.mrb[0].mxu0 %v835
      %v1297 = vpop.f32.mrb[0].mxu0
      %v1298 = vadd.f32 %v1064, %v1297
      %v1299 = vpop.f32.mrb[0].mxu0
      %1300 = vmatprep.mubr.f32.mxu0 0.0
      %1301 = vmatmul.mubr.f32.gmra.mrb[0].mxu0 %v838
      %v1302 = vpop.f32.mrb[0].mxu0
      %v1303 = vadd.f32 %v1069, %v1302
      %v1304 = vpop.f32.mrb[0].mxu0
      %1305 = vmatprep.mubr.f32.mxu0 0.0
      %1306 = vmatmul.mubr.f32.gmra.mrb[0].mxu0 %v841
      %v1307 = vpop.f32.mrb[0].mxu0
      %v1308 = vadd.f32 %v1074, %v1307
      %v1309 = vpop.f32.mrb[0].mxu0
      %1310 = vdwg.mxu0
      %v1311 = vld [vmem:[#allocation2 + $0x20] sm:$0xff]
      %v1312 = vld [vmem:[#allocation2 + $0x28] sm:$0xff]
      %v1313 = vld [vmem:[#allocation2 + $0x30] sm:$0xff]
      %v1314 = vld [vmem:[#allocation2 + $0x38] sm:$0xff]
      %v1315 = vld [vmem:[#allocation2 + $0x40] sm:$0xff]
      %v1316 = vld [vmem:[#allocation2 + $0x48] sm:$0xff]
      %v1317 = vld [vmem:[#allocation2 + $0x50] sm:$0xff]
      %v1318 = vld [vmem:[#allocation2 + $0x58] sm:$0xff]
      %v1319 = vld [vmem:[#allocation2 + $0x60] sm:$0xff]
      %v1320 = vld [vmem:[#allocation2 + $0x68] sm:$0xff]
      %v1321 = vld [vmem:[#allocation2 + $0x70] sm:$0xff]
      %v1322 = vld [vmem:[#allocation2 + $0x78] sm:$0xff]
      %v1323 = vld [vmem:[#allocation2 + $0x80] sm:$0xff]
      %v1324 = vld [vmem:[#allocation2 + $0x88] sm:$0xff]
      %v1325 = vld [vmem:[#allocation2 + $0x90] sm:$0xff]
      %v1326 = vld [vmem:[#allocation2 + $0x98] sm:$0xff]
      %v1327 = vld [vmem:[#allocation2 + $0xa0] sm:$0xff]
      %v1328 = vld [vmem:[#allocation2 + $0xa8] sm:$0xff]
      %v1329 = vld [vmem:[#allocation2 + $0xb0] sm:$0xff]
      %v1330 = vld [vmem:[#allocation2 + $0xb8] sm:$0xff]
      %v1331 = vld [vmem:[#allocation2 + $0xc0] sm:$0xff]
      %v1332 = vld [vmem:[#allocation2 + $0xc8] sm:$0xff]
      %v1333 = vld [vmem:[#allocation2 + $0xd0] sm:$0xff]
      %v1334 = vld [vmem:[#allocation2 + $0xd8] sm:$0xff]
      %v1335 = vld [vmem:[#allocation2 + $0xe0] sm:$0xff]
      %v1336 = vld [vmem:[#allocation2 + $0xe8] sm:$0xff]
      %v1337 = vld [vmem:[#allocation2 + $0xf0] sm:$0xff]
      %v1338 = vld [vmem:[#allocation2 + $0xf8] sm:$0xff]
      %v1339 = vld [vmem:[#allocation2 + $0x100] sm:$0xff]
      %v1340 = vld [vmem:[#allocation2 + $0x108] sm:$0xff]
      %v1341 = vld [vmem:[#allocation2 + $0x110] sm:$0xff]
      %v1342 = vld [vmem:[#allocation2 + $0x118] sm:$0xff]
      %s1343 = scalar_lea.vmem %s3, 32
      %v1344 = vld [vmem:[%s1343] sm:$0xff]
      %v1345 = vld [vmem:[%s1343 + $0x8] sm:$0xf]
      %v1347 = vsel %vm665, %v1311, 0
      %v1350 = vsel %vm665, %v1312, 0
      %v1353 = vsel %vm665, %v1313, 0
      %v1356 = vsel %vm665, %v1314, 0
      %v1359 = vsel %vm665, %v1315, 0
      %v1362 = vsel %vm665, %v1316, 0
      %v1365 = vsel %vm665, %v1317, 0
      %v1368 = vsel %vm665, %v1318, 0
      %v1371 = vsel %vm665, %v1319, 0
      %v1374 = vsel %vm665, %v1320, 0
      %v1377 = vsel %vm665, %v1321, 0
      %v1380 = vsel %vm665, %v1322, 0
      %v1383 = vsel %vm665, %v1323, 0
      %v1386 = vsel %vm665, %v1324, 0
      %v1389 = vsel %vm665, %v1325, 0
      %v1392 = vsel %vm665, %v1326, 0
      %v1395 = vsel %vm665, %v1327, 0
      %v1398 = vsel %vm665, %v1328, 0
      %v1401 = vsel %vm665, %v1329, 0
      %v1404 = vsel %vm665, %v1330, 0
      %v1407 = vsel %vm665, %v1331, 0
      %v1410 = vsel %vm665, %v1332, 0
      %v1413 = vsel %vm665, %v1333, 0
      %v1416 = vsel %vm665, %v1334, 0
      %v1419 = vsel %vm665, %v1335, 0
      %v1422 = vsel %vm665, %v1336, 0
      %v1425 = vsel %vm665, %v1337, 0
      %v1428 = vsel %vm665, %v1338, 0
      %v1431 = vsel %vm665, %v1339, 0
      %v1434 = vsel %vm665, %v1340, 0
      %v1437 = vsel %vm665, %v1341, 0
      %v1440 = vsel %vm665, %v1342, 0
      %v1443 = vsel %vm336, %v1345, 0
      %1445 = vmatprep.subr.mxu0 0.0
      %1446 = vmatpush1.msra.mxu0 %v1344
      %1447 = vmatprep.subr.mxu0 0.0
      %1448 = vmatpush1.msra.mxu0 %v1443
      %1449 = vmatprep.subr.mxu0 0.0
      %1450 = vmatpush1.msra.mxu0 0.0
      %1451 = vmatprep.subr.mxu0 0.0
      %1452 = vmatpush1.msra.mxu0 0.0
      %1453 = vmatprep.subr.mxu0 0.0
      %1454 = vmatpush1.msra.mxu0 0.0
      %1455 = vmatprep.subr.mxu0 0.0
      %1456 = vmatpush1.msra.mxu0 0.0
      %1457 = vmatprep.subr.mxu0 0.0
      %1458 = vmatpush1.msra.mxu0 0.0
      %1459 = vmatprep.subr.mxu0 0.0
      %1460 = vmatpush1.msra.mxu0 0.0
      %1461 = vmatprep.subr.mxu0 0.0
      %1462 = vmatpush1.msra.mxu0 0.0
      %1463 = vmatprep.subr.mxu0 0.0
      %1464 = vmatpush1.msra.mxu0 0.0
      %1465 = vmatprep.subr.mxu0 0.0
      %1466 = vmatpush1.msra.mxu0 0.0
      %1467 = vmatprep.subr.mxu0 0.0
      %1468 = vmatpush1.msra.mxu0 0.0
      %1469 = vmatprep.subr.mxu0 0.0
      %1470 = vmatpush1.msra.mxu0 0.0
      %1471 = vmatprep.subr.mxu0 0.0
      %1472 = vmatpush1.msra.mxu0 0.0
      %1473 = vmatprep.subr.mxu0 0.0
      %1474 = vmatpush1.msra.mxu0 0.0
      %1475 = vmatprep.subr.mxu0 0.0
      %1476 = vmatpush1.msra.mxu0 0.0
      %1477 = vmatprep.subr.mxu0 0.0
      %1478 = vmatpush1.msra.mxu0 0.0
      %1479 = vmatprep.subr.mxu0 0.0
      %1480 = vmatpush1.msra.mxu0 0.0
      %1481 = vmatprep.subr.mxu0 0.0
      %1482 = vmatpush1.msra.mxu0 0.0
      %1483 = vmatprep.subr.mxu0 0.0
      %1484 = vmatpush1.msra.mxu0 0.0
      %1485 = vmatprep.subr.mxu0 0.0
      %1486 = vmatpush1.msra.mxu0 0.0
      %1487 = vmatprep.subr.mxu0 0.0
      %1488 = vmatpush1.msra.mxu0 0.0
      %1489 = vmatprep.subr.mxu0 0.0
      %1490 = vmatpush1.msra.mxu0 0.0
      %1491 = vmatprep.subr.mxu0 0.0
      %1492 = vmatpush1.msra.mxu0 0.0
      %1493 = vmatprep.subr.mxu0 0.0
      %1494 = vmatpush1.msra.mxu0 0.0
      %1495 = vmatprep.subr.mxu0 0.0
      %1496 = vmatpush1.msra.mxu0 0.0
      %1497 = vmatprep.subr.mxu0 0.0
      %1498 = vmatpush1.msra.mxu0 0.0
      %1499 = vmatprep.subr.mxu0 0.0
      %1500 = vmatpush1.msra.mxu0 0.0
      %1501 = vmatprep.subr.mxu0 0.0
      %1502 = vmatpush1.msra.mxu0 0.0
      %1503 = vmatprep.subr.mxu0 0.0
      %1504 = vmatpush1.msra.mxu0 0.0
      %1505 = vmatprep.subr.mxu0 0.0
      %1506 = vmatpush1.msra.mxu0 0.0
      %1507 = vmatprep.subr.mxu0 0.0
      %1508 = vmatpush1.msra.mxu0 0.0
      %1509 = vmatprep.mubr.f32.mxu0 0.0
      %1510 = vmatmul.mubr.f32.gmra.mrb[0].mxu0 %v1347
      %v1511 = vpop.f32.mrb[0].mxu0
      %v1512 = vadd.f32 0.0, %v1511
      %v1513 = vpop.f32.mrb[0].mxu0
      %1514 = vmatprep.mubr.f32.mxu0 0.0
      %1515 = vmatmul.mubr.f32.gmra.mrb[0].mxu0 %v1350
      %v1516 = vpop.f32.mrb[0].mxu0
      %v1517 = vadd.f32 0.0, %v1516
      %v1518 = vpop.f32.mrb[0].mxu0
      %1519 = vmatprep.mubr.f32.mxu0 0.0
      %1520 = vmatmul.mubr.f32.gmra.mrb[0].mxu0 %v1353
      %v1521 = vpop.f32.mrb[0].mxu0
      %v1522 = vadd.f32 0.0, %v1521
      %v1523 = vpop.f32.mrb[0].mxu0
      %1524 = vmatprep.mubr.f32.mxu0 0.0
      %1525 = vmatmul.mubr.f32.gmra.mrb[0].mxu0 %v1356
      %v1526 = vpop.f32.mrb[0].mxu0
      %v1527 = vadd.f32 0.0, %v1526
      %v1528 = vpop.f32.mrb[0].mxu0
      %1529 = vmatprep.mubr.f32.mxu0 0.0
      %1530 = vmatmul.mubr.f32.gmra.mrb[0].mxu0 %v1359
      %v1531 = vpop.f32.mrb[0].mxu0
      %v1532 = vadd.f32 0.0, %v1531
      %v1533 = vpop.f32.mrb[0].mxu0
      %1534 = vmatprep.mubr.f32.mxu0 0.0
      %1535 = vmatmul.mubr.f32.gmra.mrb[0].mxu0 %v1362
      %v1536 = vpop.f32.mrb[0].mxu0
      %v1537 = vadd.f32 0.0, %v1536
      %v1538 = vpop.f32.mrb[0].mxu0
      %1539 = vmatprep.mubr.f32.mxu0 0.0
      %1540 = vmatmul.mubr.f32.gmra.mrb[0].mxu0 %v1365
      %v1541 = vpop.f32.mrb[0].mxu0
      %v1542 = vadd.f32 0.0, %v1541
      %v1543 = vpop.f32.mrb[0].mxu0
      %1544 = vmatprep.mubr.f32.mxu0 0.0
      %1545 = vmatmul.mubr.f32.gmra.mrb[0].mxu0 %v1368
      %v1546 = vpop.f32.mrb[0].mxu0
      %v1547 = vadd.f32 0.0, %v1546
      %v1548 = vpop.f32.mrb[0].mxu0
      %1549 = vmatprep.mubr.f32.mxu0 0.0
      %1550 = vmatmul.mubr.f32.gmra.mrb[0].mxu0 %v1371
      %v1551 = vpop.f32.mrb[0].mxu0
      %v1552 = vadd.f32 0.0, %v1551
      %v1553 = vpop.f32.mrb[0].mxu0
      %1554 = vmatprep.mubr.f32.mxu0 0.0
      %1555 = vmatmul.mubr.f32.gmra.mrb[0].mxu0 %v1374
      %v1556 = vpop.f32.mrb[0].mxu0
      %v1557 = vadd.f32 0.0, %v1556
      %v1558 = vpop.f32.mrb[0].mxu0
      %1559 = vmatprep.mubr.f32.mxu0 0.0
      %1560 = vmatmul.mubr.f32.gmra.mrb[0].mxu0 %v1377
      %v1561 = vpop.f32.mrb[0].mxu0
      %v1562 = vadd.f32 0.0, %v1561
      %v1563 = vpop.f32.mrb[0].mxu0
      %1564 = vmatprep.mubr.f32.mxu0 0.0
      %1565 = vmatmul.mubr.f32.gmra.mrb[0].mxu0 %v1380
      %v1566 = vpop.f32.mrb[0].mxu0
      %v1567 = vadd.f32 0.0, %v1566
      %v1568 = vpop.f32.mrb[0].mxu0
      %1569 = vmatprep.mubr.f32.mxu0 0.0
      %1570 = vmatmul.mubr.f32.gmra.mrb[0].mxu0 %v1383
      %v1571 = vpop.f32.mrb[0].mxu0
      %v1572 = vadd.f32 0.0, %v1571
      %v1573 = vpop.f32.mrb[0].mxu0
      %1574 = vmatprep.mubr.f32.mxu0 0.0
      %1575 = vmatmul.mubr.f32.gmra.mrb[0].mxu0 %v1386
      %v1576 = vpop.f32.mrb[0].mxu0
      %v1577 = vadd.f32 0.0, %v1576
      %v1578 = vpop.f32.mrb[0].mxu0
      %1579 = vmatprep.mubr.f32.mxu0 0.0
      %1580 = vmatmul.mubr.f32.gmra.mrb[0].mxu0 %v1389
      %v1581 = vpop.f32.mrb[0].mxu0
      %v1582 = vadd.f32 0.0, %v1581
      %v1583 = vpop.f32.mrb[0].mxu0
      %1584 = vmatprep.mubr.f32.mxu0 0.0
      %1585 = vmatmul.mubr.f32.gmra.mrb[0].mxu0 %v1392
      %v1586 = vpop.f32.mrb[0].mxu0
      %v1587 = vadd.f32 0.0, %v1586
      %v1588 = vpop.f32.mrb[0].mxu0
      %1589 = vmatprep.mubr.f32.mxu0 0.0
      %1590 = vmatmul.mubr.f32.gmra.mrb[0].mxu0 %v1395
      %v1591 = vpop.f32.mrb[0].mxu0
      %v1592 = vadd.f32 0.0, %v1591
      %v1593 = vpop.f32.mrb[0].mxu0
      %1594 = vmatprep.mubr.f32.mxu0 0.0
      %1595 = vmatmul.mubr.f32.gmra.mrb[0].mxu0 %v1398
      %v1596 = vpop.f32.mrb[0].mxu0
      %v1597 = vadd.f32 0.0, %v1596
      %v1598 = vpop.f32.mrb[0].mxu0
      %1599 = vmatprep.mubr.f32.mxu0 0.0
      %1600 = vmatmul.mubr.f32.gmra.mrb[0].mxu0 %v1401
      %v1601 = vpop.f32.mrb[0].mxu0
      %v1602 = vadd.f32 0.0, %v1601
      %v1603 = vpop.f32.mrb[0].mxu0
      %1604 = vmatprep.mubr.f32.mxu0 0.0
      %1605 = vmatmul.mubr.f32.gmra.mrb[0].mxu0 %v1404
      %v1606 = vpop.f32.mrb[0].mxu0
      %v1607 = vadd.f32 0.0, %v1606
      %v1608 = vpop.f32.mrb[0].mxu0
      %1609 = vmatprep.mubr.f32.mxu0 0.0
      %1610 = vmatmul.mubr.f32.gmra.mrb[0].mxu0 %v1407
      %v1611 = vpop.f32.mrb[0].mxu0
      %v1612 = vadd.f32 0.0, %v1611
      %v1613 = vpop.f32.mrb[0].mxu0
      %1614 = vmatprep.mubr.f32.mxu0 0.0
      %1615 = vmatmul.mubr.f32.gmra.mrb[0].mxu0 %v1410
      %v1616 = vpop.f32.mrb[0].mxu0
      %v1617 = vadd.f32 0.0, %v1616
      %v1618 = vpop.f32.mrb[0].mxu0
      %1619 = vmatprep.mubr.f32.mxu0 0.0
      %1620 = vmatmul.mubr.f32.gmra.mrb[0].mxu0 %v1413
      %v1621 = vpop.f32.mrb[0].mxu0
      %v1622 = vadd.f32 0.0, %v1621
      %v1623 = vpop.f32.mrb[0].mxu0
      %1624 = vmatprep.mubr.f32.mxu0 0.0
      %1625 = vmatmul.mubr.f32.gmra.mrb[0].mxu0 %v1416
      %v1626 = vpop.f32.mrb[0].mxu0
      %v1627 = vadd.f32 0.0, %v1626
      %v1628 = vpop.f32.mrb[0].mxu0
      %1629 = vmatprep.mubr.f32.mxu0 0.0
      %1630 = vmatmul.mubr.f32.gmra.mrb[0].mxu0 %v1419
      %v1631 = vpop.f32.mrb[0].mxu0
      %v1632 = vadd.f32 0.0, %v1631
      %v1633 = vpop.f32.mrb[0].mxu0
      %1634 = vmatprep.mubr.f32.mxu0 0.0
      %1635 = vmatmul.mubr.f32.gmra.mrb[0].mxu0 %v1422
      %v1636 = vpop.f32.mrb[0].mxu0
      %v1637 = vadd.f32 0.0, %v1636
      %v1638 = vpop.f32.mrb[0].mxu0
      %1639 = vmatprep.mubr.f32.mxu0 0.0
      %1640 = vmatmul.mubr.f32.gmra.mrb[0].mxu0 %v1425
      %v1641 = vpop.f32.mrb[0].mxu0
      %v1642 = vadd.f32 0.0, %v1641
      %v1643 = vpop.f32.mrb[0].mxu0
      %1644 = vmatprep.mubr.f32.mxu0 0.0
      %1645 = vmatmul.mubr.f32.gmra.mrb[0].mxu0 %v1428
      %v1646 = vpop.f32.mrb[0].mxu0
      %v1647 = vadd.f32 0.0, %v1646
      %v1648 = vpop.f32.mrb[0].mxu0
      %1649 = vmatprep.mubr.f32.mxu0 0.0
      %1650 = vmatmul.mubr.f32.gmra.mrb[0].mxu0 %v1431
      %v1651 = vpop.f32.mrb[0].mxu0
      %v1652 = vadd.f32 0.0, %v1651
      %v1653 = vpop.f32.mrb[0].mxu0
      %1654 = vmatprep.mubr.f32.mxu0 0.0
      %1655 = vmatmul.mubr.f32.gmra.mrb[0].mxu0 %v1434
      %v1656 = vpop.f32.mrb[0].mxu0
      %v1657 = vadd.f32 0.0, %v1656
      %v1658 = vpop.f32.mrb[0].mxu0
      %1659 = vmatprep.mubr.f32.mxu0 0.0
      %1660 = vmatmul.mubr.f32.gmra.mrb[0].mxu0 %v1437
      %v1661 = vpop.f32.mrb[0].mxu0
      %v1662 = vadd.f32 0.0, %v1661
      %v1663 = vpop.f32.mrb[0].mxu0
      %1664 = vmatprep.mubr.f32.mxu0 0.0
      %1665 = vmatmul.mubr.f32.gmra.mrb[0].mxu0 %v1440
      %v1666 = vpop.f32.mrb[0].mxu0
      %v1667 = vadd.f32 0.0, %v1666
      %v1668 = vpop.f32.mrb[0].mxu0
      %1669 = vdwg.mxu0
      %v1670 = vadd.f32 %v1153, %v1512
      %v1671 = vadd.f32 %v1158, %v1517
      %v1672 = vadd.f32 %v1163, %v1522
      %v1673 = vadd.f32 %v1168, %v1527
      %v1674 = vadd.f32 %v1173, %v1532
      %v1675 = vadd.f32 %v1178, %v1537
      %v1676 = vadd.f32 %v1183, %v1542
      %v1677 = vadd.f32 %v1188, %v1547
      %v1678 = vadd.f32 %v1193, %v1552
      %v1679 = vadd.f32 %v1198, %v1557
      %v1680 = vadd.f32 %v1203, %v1562
      %v1681 = vadd.f32 %v1208, %v1567
      %v1682 = vadd.f32 %v1213, %v1572
      %v1683 = vadd.f32 %v1218, %v1577
      %v1684 = vadd.f32 %v1223, %v1582
      %v1685 = vadd.f32 %v1228, %v1587
      %v1686 = vadd.f32 %v1233, %v1592
      %v1687 = vadd.f32 %v1238, %v1597
      %v1688 = vadd.f32 %v1243, %v1602
      %v1689 = vadd.f32 %v1248, %v1607
      %v1690 = vadd.f32 %v1253, %v1612
      %v1691 = vadd.f32 %v1258, %v1617
      %v1692 = vadd.f32 %v1263, %v1622
      %v1693 = vadd.f32 %v1268, %v1627
      %v1694 = vadd.f32 %v1273, %v1632
      %v1695 = vadd.f32 %v1278, %v1637
      %v1696 = vadd.f32 %v1283, %v1642
      %v1697 = vadd.f32 %v1288, %v1647
      %v1698 = vadd.f32 %v1293, %v1652
      %v1699 = vadd.f32 %v1298, %v1657
      %v1700 = vadd.f32 %v1303, %v1662
      %v1701 = vadd.f32 %v1308, %v1667
      %v1702 = vld [vmem:[#allocation2 + $0x30] sm:$0xff]
      %v1703 = vld [vmem:[#allocation2 + $0x38] sm:$0xff]
      %v1704 = vld [vmem:[#allocation2 + $0x40] sm:$0xff]
      %v1705 = vld [vmem:[#allocation2 + $0x48] sm:$0xff]
      %v1706 = vld [vmem:[#allocation2 + $0x50] sm:$0xff]
      %v1707 = vld [vmem:[#allocation2 + $0x58] sm:$0xff]
      %v1708 = vld [vmem:[#allocation2 + $0x60] sm:$0xff]
      %v1709 = vld [vmem:[#allocation2 + $0x68] sm:$0xff]
      %v1710 = vld [vmem:[#allocation2 + $0x70] sm:$0xff]
      %v1711 = vld [vmem:[#allocation2 + $0x78] sm:$0xff]
      %v1712 = vld [vmem:[#allocation2 + $0x80] sm:$0xff]
      %v1713 = vld [vmem:[#allocation2 + $0x88] sm:$0xff]
      %v1714 = vld [vmem:[#allocation2 + $0x90] sm:$0xff]
      %v1715 = vld [vmem:[#allocation2 + $0x98] sm:$0xff]
      %v1716 = vld [vmem:[#allocation2 + $0xa0] sm:$0xff]
      %v1717 = vld [vmem:[#allocation2 + $0xa8] sm:$0xff]
      %v1718 = vld [vmem:[#allocation2 + $0xb0] sm:$0xff]
      %v1719 = vld [vmem:[#allocation2 + $0xb8] sm:$0xff]
      %v1720 = vld [vmem:[#allocation2 + $0xc0] sm:$0xff]
      %v1721 = vld [vmem:[#allocation2 + $0xc8] sm:$0xff]
      %v1722 = vld [vmem:[#allocation2 + $0xd0] sm:$0xff]
      %v1723 = vld [vmem:[#allocation2 + $0xd8] sm:$0xff]
      %v1724 = vld [vmem:[#allocation2 + $0xe0] sm:$0xff]
      %v1725 = vld [vmem:[#allocation2 + $0xe8] sm:$0xff]
      %v1726 = vld [vmem:[#allocation2 + $0xf0] sm:$0xff]
      %v1727 = vld [vmem:[#allocation2 + $0xf8] sm:$0xff]
      %v1728 = vld [vmem:[#allocation2 + $0x100] sm:$0xff]
      %v1729 = vld [vmem:[#allocation2 + $0x108] sm:$0xff]
      %v1730 = vld [vmem:[#allocation2 + $0x110] sm:$0xff]
      %v1731 = vld [vmem:[#allocation2 + $0x118] sm:$0xff]
      %v1732 = vld [vmem:[#allocation2 + $0x120] sm:$0xff]
      %v1733 = vld [vmem:[#allocation2 + $0x128] sm:$0xff]
      %s1734 = scalar_lea.vmem %s3, 48
      %v1735 = vld [vmem:[%s1734] sm:$0xff]
      %v1736 = vld [vmem:[%s1734 + $0x8] sm:$0xf]
      %v1738 = vsel %vm665, %v1702, 0
      %v1741 = vsel %vm665, %v1703, 0
      %v1744 = vsel %vm665, %v1704, 0
      %v1747 = vsel %vm665, %v1705, 0
      %v1750 = vsel %vm665, %v1706, 0
      %v1753 = vsel %vm665, %v1707, 0
      %v1756 = vsel %vm665, %v1708, 0
      %v1759 = vsel %vm665, %v1709, 0
      %v1762 = vsel %vm665, %v1710, 0
      %v1765 = vsel %vm665, %v1711, 0
      %v1768 = vsel %vm665, %v1712, 0
      %v1771 = vsel %vm665, %v1713, 0
      %v1774 = vsel %vm665, %v1714, 0
      %v1777 = vsel %vm665, %v1715, 0
      %v1780 = vsel %vm665, %v1716, 0
      %v1783 = vsel %vm665, %v1717, 0
      %v1786 = vsel %vm665, %v1718, 0
      %v1789 = vsel %vm665, %v1719, 0
      %v1792 = vsel %vm665, %v1720, 0
      %v1795 = vsel %vm665, %v1721, 0
      %v1798 = vsel %vm665, %v1722, 0
      %v1801 = vsel %vm665, %v1723, 0
      %v1804 = vsel %vm665, %v1724, 0
      %v1807 = vsel %vm665, %v1725, 0
      %v1810 = vsel %vm665, %v1726, 0
      %v1813 = vsel %vm665, %v1727, 0
      %v1816 = vsel %vm665, %v1728, 0
      %v1819 = vsel %vm665, %v1729, 0
      %v1822 = vsel %vm665, %v1730, 0
      %v1825 = vsel %vm665, %v1731, 0
      %v1828 = vsel %vm665, %v1732, 0
      %v1831 = vsel %vm665, %v1733, 0
      %v1834 = vsel %vm336, %v1736, 0
      %1836 = vmatprep.subr.mxu0 0.0
      %1837 = vmatpush1.msra.mxu0 %v1735
      %1838 = vmatprep.subr.mxu0 0.0
      %1839 = vmatpush1.msra.mxu0 %v1834
      %1840 = vmatprep.subr.mxu0 0.0
      %1841 = vmatpush1.msra.mxu0 0.0
      %1842 = vmatprep.subr.mxu0 0.0
      %1843 = vmatpush1.msra.mxu0 0.0
      %1844 = vmatprep.subr.mxu0 0.0
      %1845 = vmatpush1.msra.mxu0 0.0
      %1846 = vmatprep.subr.mxu0 0.0
      %1847 = vmatpush1.msra.mxu0 0.0
      %1848 = vmatprep.subr.mxu0 0.0
      %1849 = vmatpush1.msra.mxu0 0.0
      %1850 = vmatprep.subr.mxu0 0.0
      %1851 = vmatpush1.msra.mxu0 0.0
      %1852 = vmatprep.subr.mxu0 0.0
      %1853 = vmatpush1.msra.mxu0 0.0
      %1854 = vmatprep.subr.mxu0 0.0
      %1855 = vmatpush1.msra.mxu0 0.0
      %1856 = vmatprep.subr.mxu0 0.0
      %1857 = vmatpush1.msra.mxu0 0.0
      %1858 = vmatprep.subr.mxu0 0.0
      %1859 = vmatpush1.msra.mxu0 0.0
      %1860 = vmatprep.subr.mxu0 0.0
      %1861 = vmatpush1.msra.mxu0 0.0
      %1862 = vmatprep.subr.mxu0 0.0
      %1863 = vmatpush1.msra.mxu0 0.0
      %1864 = vmatprep.subr.mxu0 0.0
      %1865 = vmatpush1.msra.mxu0 0.0
      %1866 = vmatprep.subr.mxu0 0.0
      %1867 = vmatpush1.msra.mxu0 0.0
      %1868 = vmatprep.subr.mxu0 0.0
      %1869 = vmatpush1.msra.mxu0 0.0
      %1870 = vmatprep.subr.mxu0 0.0
      %1871 = vmatpush1.msra.mxu0 0.0
      %1872 = vmatprep.subr.mxu0 0.0
      %1873 = vmatpush1.msra.mxu0 0.0
      %1874 = vmatprep.subr.mxu0 0.0
      %1875 = vmatpush1.msra.mxu0 0.0
      %1876 = vmatprep.subr.mxu0 0.0
      %1877 = vmatpush1.msra.mxu0 0.0
      %1878 = vmatprep.subr.mxu0 0.0
      %1879 = vmatpush1.msra.mxu0 0.0
      %1880 = vmatprep.subr.mxu0 0.0
      %1881 = vmatpush1.msra.mxu0 0.0
      %1882 = vmatprep.subr.mxu0 0.0
      %1883 = vmatpush1.msra.mxu0 0.0
      %1884 = vmatprep.subr.mxu0 0.0
      %1885 = vmatpush1.msra.mxu0 0.0
      %1886 = vmatprep.subr.mxu0 0.0
      %1887 = vmatpush1.msra.mxu0 0.0
      %1888 = vmatprep.subr.mxu0 0.0
      %1889 = vmatpush1.msra.mxu0 0.0
      %1890 = vmatprep.subr.mxu0 0.0
      %1891 = vmatpush1.msra.mxu0 0.0
      %1892 = vmatprep.subr.mxu0 0.0
      %1893 = vmatpush1.msra.mxu0 0.0
      %1894 = vmatprep.subr.mxu0 0.0
      %1895 = vmatpush1.msra.mxu0 0.0
      %1896 = vmatprep.subr.mxu0 0.0
      %1897 = vmatpush1.msra.mxu0 0.0
      %1898 = vmatprep.subr.mxu0 0.0
      %1899 = vmatpush1.msra.mxu0 0.0
      %1900 = vmatprep.mubr.f32.mxu0 0.0
      %1901 = vmatmul.mubr.f32.gmra.mrb[0].mxu0 %v1738
      %v1902 = vpop.f32.mrb[0].mxu0
      %v1903 = vadd.f32 0.0, %v1902
      %v1904 = vpop.f32.mrb[0].mxu0
      %1905 = vmatprep.mubr.f32.mxu0 0.0
      %1906 = vmatmul.mubr.f32.gmra.mrb[0].mxu0 %v1741
      %v1907 = vpop.f32.mrb[0].mxu0
      %v1908 = vadd.f32 0.0, %v1907
      %v1909 = vpop.f32.mrb[0].mxu0
      %1910 = vmatprep.mubr.f32.mxu0 0.0
      %1911 = vmatmul.mubr.f32.gmra.mrb[0].mxu0 %v1744
      %v1912 = vpop.f32.mrb[0].mxu0
      %v1913 = vadd.f32 0.0, %v1912
      %v1914 = vpop.f32.mrb[0].mxu0
      %1915 = vmatprep.mubr.f32.mxu0 0.0
      %1916 = vmatmul.mubr.f32.gmra.mrb[0].mxu0 %v1747
      %v1917 = vpop.f32.mrb[0].mxu0
      %v1918 = vadd.f32 0.0, %v1917
      %v1919 = vpop.f32.mrb[0].mxu0
      %1920 = vmatprep.mubr.f32.mxu0 0.0
      %1921 = vmatmul.mubr.f32.gmra.mrb[0].mxu0 %v1750
      %v1922 = vpop.f32.mrb[0].mxu0
      %v1923 = vadd.f32 0.0, %v1922
      %v1924 = vpop.f32.mrb[0].mxu0
      %1925 = vmatprep.mubr.f32.mxu0 0.0
      %1926 = vmatmul.mubr.f32.gmra.mrb[0].mxu0 %v1753
      %v1927 = vpop.f32.mrb[0].mxu0
      %v1928 = vadd.f32 0.0, %v1927
      %v1929 = vpop.f32.mrb[0].mxu0
      %1930 = vmatprep.mubr.f32.mxu0 0.0
      %1931 = vmatmul.mubr.f32.gmra.mrb[0].mxu0 %v1756
      %v1932 = vpop.f32.mrb[0].mxu0
      %v1933 = vadd.f32 0.0, %v1932
      %v1934 = vpop.f32.mrb[0].mxu0
      %1935 = vmatprep.mubr.f32.mxu0 0.0
      %1936 = vmatmul.mubr.f32.gmra.mrb[0].mxu0 %v1759
      %v1937 = vpop.f32.mrb[0].mxu0
      %v1938 = vadd.f32 0.0, %v1937
      %v1939 = vpop.f32.mrb[0].mxu0
      %1940 = vmatprep.mubr.f32.mxu0 0.0
      %1941 = vmatmul.mubr.f32.gmra.mrb[0].mxu0 %v1762
      %v1942 = vpop.f32.mrb[0].mxu0
      %v1943 = vadd.f32 0.0, %v1942
      %v1944 = vpop.f32.mrb[0].mxu0
      %1945 = vmatprep.mubr.f32.mxu0 0.0
      %1946 = vmatmul.mubr.f32.gmra.mrb[0].mxu0 %v1765
      %v1947 = vpop.f32.mrb[0].mxu0
      %v1948 = vadd.f32 0.0, %v1947
      %v1949 = vpop.f32.mrb[0].mxu0
      %1950 = vmatprep.mubr.f32.mxu0 0.0
      %1951 = vmatmul.mubr.f32.gmra.mrb[0].mxu0 %v1768
      %v1952 = vpop.f32.mrb[0].mxu0
      %v1953 = vadd.f32 0.0, %v1952
      %v1954 = vpop.f32.mrb[0].mxu0
      %1955 = vmatprep.mubr.f32.mxu0 0.0
      %1956 = vmatmul.mubr.f32.gmra.mrb[0].mxu0 %v1771
      %v1957 = vpop.f32.mrb[0].mxu0
      %v1958 = vadd.f32 0.0, %v1957
      %v1959 = vpop.f32.mrb[0].mxu0
      %1960 = vmatprep.mubr.f32.mxu0 0.0
      %1961 = vmatmul.mubr.f32.gmra.mrb[0].mxu0 %v1774
      %v1962 = vpop.f32.mrb[0].mxu0
      %v1963 = vadd.f32 0.0, %v1962
      %v1964 = vpop.f32.mrb[0].mxu0
      %1965 = vmatprep.mubr.f32.mxu0 0.0
      %1966 = vmatmul.mubr.f32.gmra.mrb[0].mxu0 %v1777
      %v1967 = vpop.f32.mrb[0].mxu0
      %v1968 = vadd.f32 0.0, %v1967
      %v1969 = vpop.f32.mrb[0].mxu0
      %1970 = vmatprep.mubr.f32.mxu0 0.0
      %1971 = vmatmul.mubr.f32.gmra.mrb[0].mxu0 %v1780
      %v1972 = vpop.f32.mrb[0].mxu0
      %v1973 = vadd.f32 0.0, %v1972
      %v1974 = vpop.f32.mrb[0].mxu0
      %1975 = vmatprep.mubr.f32.mxu0 0.0
      %1976 = vmatmul.mubr.f32.gmra.mrb[0].mxu0 %v1783
      %v1977 = vpop.f32.mrb[0].mxu0
      %v1978 = vadd.f32 0.0, %v1977
      %v1979 = vpop.f32.mrb[0].mxu0
      %1980 = vmatprep.mubr.f32.mxu0 0.0
      %1981 = vmatmul.mubr.f32.gmra.mrb[0].mxu0 %v1786
      %v1982 = vpop.f32.mrb[0].mxu0
      %v1983 = vadd.f32 0.0, %v1982
      %v1984 = vpop.f32.mrb[0].mxu0
      %1985 = vmatprep.mubr.f32.mxu0 0.0
      %1986 = vmatmul.mubr.f32.gmra.mrb[0].mxu0 %v1789
      %v1987 = vpop.f32.mrb[0].mxu0
      %v1988 = vadd.f32 0.0, %v1987
      %v1989 = vpop.f32.mrb[0].mxu0
      %1990 = vmatprep.mubr.f32.mxu0 0.0
      %1991 = vmatmul.mubr.f32.gmra.mrb[0].mxu0 %v1792
      %v1992 = vpop.f32.mrb[0].mxu0
      %v1993 = vadd.f32 0.0, %v1992
      %v1994 = vpop.f32.mrb[0].mxu0
      %1995 = vmatprep.mubr.f32.mxu0 0.0
      %1996 = vmatmul.mubr.f32.gmra.mrb[0].mxu0 %v1795
      %v1997 = vpop.f32.mrb[0].mxu0
      %v1998 = vadd.f32 0.0, %v1997
      %v1999 = vpop.f32.mrb[0].mxu0
      %2000 = vmatprep.mubr.f32.mxu0 0.0
      %2001 = vmatmul.mubr.f32.gmra.mrb[0].mxu0 %v1798
      %v2002 = vpop.f32.mrb[0].mxu0
      %v2003 = vadd.f32 0.0, %v2002
      %v2004 = vpop.f32.mrb[0].mxu0
      %2005 = vmatprep.mubr.f32.mxu0 0.0
      %2006 = vmatmul.mubr.f32.gmra.mrb[0].mxu0 %v1801
      %v2007 = vpop.f32.mrb[0].mxu0
      %v2008 = vadd.f32 0.0, %v2007
      %v2009 = vpop.f32.mrb[0].mxu0
      %2010 = vmatprep.mubr.f32.mxu0 0.0
      %2011 = vmatmul.mubr.f32.gmra.mrb[0].mxu0 %v1804
      %v2012 = vpop.f32.mrb[0].mxu0
      %v2013 = vadd.f32 0.0, %v2012
      %v2014 = vpop.f32.mrb[0].mxu0
      %2015 = vmatprep.mubr.f32.mxu0 0.0
      %2016 = vmatmul.mubr.f32.gmra.mrb[0].mxu0 %v1807
      %v2017 = vpop.f32.mrb[0].mxu0
      %v2018 = vadd.f32 0.0, %v2017
      %v2019 = vpop.f32.mrb[0].mxu0
      %2020 = vmatprep.mubr.f32.mxu0 0.0
      %2021 = vmatmul.mubr.f32.gmra.mrb[0].mxu0 %v1810
      %v2022 = vpop.f32.mrb[0].mxu0
      %v2023 = vadd.f32 0.0, %v2022
      %v2024 = vpop.f32.mrb[0].mxu0
      %2025 = vmatprep.mubr.f32.mxu0 0.0
      %2026 = vmatmul.mubr.f32.gmra.mrb[0].mxu0 %v1813
      %v2027 = vpop.f32.mrb[0].mxu0
      %v2028 = vadd.f32 0.0, %v2027
      %v2029 = vpop.f32.mrb[0].mxu0
      %2030 = vmatprep.mubr.f32.mxu0 0.0
      %2031 = vmatmul.mubr.f32.gmra.mrb[0].mxu0 %v1816
      %v2032 = vpop.f32.mrb[0].mxu0
      %v2033 = vadd.f32 0.0, %v2032
      %v2034 = vpop.f32.mrb[0].mxu0
      %2035 = vmatprep.mubr.f32.mxu0 0.0
      %2036 = vmatmul.mubr.f32.gmra.mrb[0].mxu0 %v1819
      %v2037 = vpop.f32.mrb[0].mxu0
      %v2038 = vadd.f32 0.0, %v2037
      %v2039 = vpop.f32.mrb[0].mxu0
      %2040 = vmatprep.mubr.f32.mxu0 0.0
      %2041 = vmatmul.mubr.f32.gmra.mrb[0].mxu0 %v1822
      %v2042 = vpop.f32.mrb[0].mxu0
      %v2043 = vadd.f32 0.0, %v2042
      %v2044 = vpop.f32.mrb[0].mxu0
      %2045 = vmatprep.mubr.f32.mxu0 0.0
      %2046 = vmatmul.mubr.f32.gmra.mrb[0].mxu0 %v1825
      %v2047 = vpop.f32.mrb[0].mxu0
      %v2048 = vadd.f32 0.0, %v2047
      %v2049 = vpop.f32.mrb[0].mxu0
      %2050 = vmatprep.mubr.f32.mxu0 0.0
      %2051 = vmatmul.mubr.f32.gmra.mrb[0].mxu0 %v1828
      %v2052 = vpop.f32.mrb[0].mxu0
      %v2053 = vadd.f32 0.0, %v2052
      %v2054 = vpop.f32.mrb[0].mxu0
      %2055 = vmatprep.mubr.f32.mxu0 0.0
      %2056 = vmatmul.mubr.f32.gmra.mrb[0].mxu0 %v1831
      %v2057 = vpop.f32.mrb[0].mxu0
      %v2058 = vadd.f32 0.0, %v2057
      %v2059 = vpop.f32.mrb[0].mxu0
      %2060 = vdwg.mxu0
      %v2061 = vadd.f32 %v1670, %v1903
      %v2062 = vadd.f32 %v1671, %v1908
      %v2063 = vadd.f32 %v1672, %v1913
      %v2064 = vadd.f32 %v1673, %v1918
      %v2065 = vadd.f32 %v1674, %v1923
      %v2066 = vadd.f32 %v1675, %v1928
      %v2067 = vadd.f32 %v1676, %v1933
      %v2068 = vadd.f32 %v1677, %v1938
      %v2069 = vadd.f32 %v1678, %v1943
      %v2070 = vadd.f32 %v1679, %v1948
      %v2071 = vadd.f32 %v1680, %v1953
      %v2072 = vadd.f32 %v1681, %v1958
      %v2073 = vadd.f32 %v1682, %v1963
      %v2074 = vadd.f32 %v1683, %v1968
      %v2075 = vadd.f32 %v1684, %v1973
      %v2076 = vadd.f32 %v1685, %v1978
      %v2077 = vadd.f32 %v1686, %v1983
      %v2078 = vadd.f32 %v1687, %v1988
      %v2079 = vadd.f32 %v1688, %v1993
      %v2080 = vadd.f32 %v1689, %v1998
      %v2081 = vadd.f32 %v1690, %v2003
      %v2082 = vadd.f32 %v1691, %v2008
      %v2083 = vadd.f32 %v1692, %v2013
      %v2084 = vadd.f32 %v1693, %v2018
      %v2085 = vadd.f32 %v1694, %v2023
      %v2086 = vadd.f32 %v1695, %v2028
      %v2087 = vadd.f32 %v1696, %v2033
      %v2088 = vadd.f32 %v1697, %v2038
      %v2089 = vadd.f32 %v1698, %v2043
      %v2090 = vadd.f32 %v1699, %v2048
      %v2091 = vadd.f32 %v1700, %v2053
      %v2092 = vadd.f32 %v1701, %v2058
      %s2093 = scalar_lea.vmem %s3, 64
      %v2094 = vld [vmem:[%s2093] sm:$0xff]
      %v2095 = vld [vmem:[%s2093 + $0x8] sm:$0xf]
      %v2097 = vsel %vm665, %v633, 0
      %v2100 = vsel %vm665, %v634, 0
      %v2103 = vsel %vm665, %v635, 0
      %v2106 = vsel %vm665, %v636, 0
      %v2109 = vsel %vm665, %v637, 0
      %v2112 = vsel %vm665, %v638, 0
      %v2115 = vsel %vm665, %v639, 0
      %v2118 = vsel %vm665, %v640, 0
      %v2121 = vsel %vm665, %v641, 0
      %v2124 = vsel %vm665, %v642, 0
      %v2127 = vsel %vm665, %v643, 0
      %v2130 = vsel %vm665, %v644, 0
      %v2133 = vsel %vm665, %v645, 0
      %v2136 = vsel %vm665, %v646, 0
      %v2139 = vsel %vm665, %v647, 0
      %v2142 = vsel %vm665, %v648, 0
      %v2145 = vsel %vm665, %v649, 0
      %v2148 = vsel %vm665, %v650, 0
      %v2151 = vsel %vm665, %v651, 0
      %v2154 = vsel %vm665, %v652, 0
      %v2157 = vsel %vm665, %v653, 0
      %v2160 = vsel %vm665, %v654, 0
      %v2163 = vsel %vm665, %v655, 0
      %v2166 = vsel %vm665, %v656, 0
      %v2169 = vsel %vm665, %v657, 0
      %v2172 = vsel %vm665, %v658, 0
      %v2175 = vsel %vm665, %v659, 0
      %v2178 = vsel %vm665, %v660, 0
      %v2181 = vsel %vm665, %v661, 0
      %v2184 = vsel %vm665, %v662, 0
      %v2187 = vsel %vm665, %v663, 0
      %v2190 = vsel %vm665, %v664, 0
      %v2193 = vsel %vm336, %v2095, 0
      %2195 = vmatprep.subr.mxu0 0.0
      %2196 = vmatpush1.msra.mxu0 %v2094
      %2197 = vmatprep.subr.mxu0 0.0
      %2198 = vmatpush1.msra.mxu0 %v2193
      %2199 = vmatprep.subr.mxu0 0.0
      %2200 = vmatpush1.msra.mxu0 0.0
      %2201 = vmatprep.subr.mxu0 0.0
      %2202 = vmatpush1.msra.mxu0 0.0
      %2203 = vmatprep.subr.mxu0 0.0
      %2204 = vmatpush1.msra.mxu0 0.0
      %2205 = vmatprep.subr.mxu0 0.0
      %2206 = vmatpush1.msra.mxu0 0.0
      %2207 = vmatprep.subr.mxu0 0.0
      %2208 = vmatpush1.msra.mxu0 0.0
      %2209 = vmatprep.subr.mxu0 0.0
      %2210 = vmatpush1.msra.mxu0 0.0
      %2211 = vmatprep.subr.mxu0 0.0
      %2212 = vmatpush1.msra.mxu0 0.0
      %2213 = vmatprep.subr.mxu0 0.0
      %2214 = vmatpush1.msra.mxu0 0.0
      %2215 = vmatprep.subr.mxu0 0.0
      %2216 = vmatpush1.msra.mxu0 0.0
      %2217 = vmatprep.subr.mxu0 0.0
      %2218 = vmatpush1.msra.mxu0 0.0
      %2219 = vmatprep.subr.mxu0 0.0
      %2220 = vmatpush1.msra.mxu0 0.0
      %2221 = vmatprep.subr.mxu0 0.0
      %2222 = vmatpush1.msra.mxu0 0.0
      %2223 = vmatprep.subr.mxu0 0.0
      %2224 = vmatpush1.msra.mxu0 0.0
      %2225 = vmatprep.subr.mxu0 0.0
      %2226 = vmatpush1.msra.mxu0 0.0
      %2227 = vmatprep.subr.mxu0 0.0
      %2228 = vmatpush1.msra.mxu0 0.0
      %2229 = vmatprep.subr.mxu0 0.0
      %2230 = vmatpush1.msra.mxu0 0.0
      %2231 = vmatprep.subr.mxu0 0.0
      %2232 = vmatpush1.msra.mxu0 0.0
      %2233 = vmatprep.subr.mxu0 0.0
      %2234 = vmatpush1.msra.mxu0 0.0
      %2235 = vmatprep.subr.mxu0 0.0
      %2236 = vmatpush1.msra.mxu0 0.0
      %2237 = vmatprep.subr.mxu0 0.0
      %2238 = vmatpush1.msra.mxu0 0.0
      %2239 = vmatprep.subr.mxu0 0.0
      %2240 = vmatpush1.msra.mxu0 0.0
      %2241 = vmatprep.subr.mxu0 0.0
      %2242 = vmatpush1.msra.mxu0 0.0
      %2243 = vmatprep.subr.mxu0 0.0
      %2244 = vmatpush1.msra.mxu0 0.0
      %2245 = vmatprep.subr.mxu0 0.0
      %2246 = vmatpush1.msra.mxu0 0.0
      %2247 = vmatprep.subr.mxu0 0.0
      %2248 = vmatpush1.msra.mxu0 0.0
      %2249 = vmatprep.subr.mxu0 0.0
      %2250 = vmatpush1.msra.mxu0 0.0
      %2251 = vmatprep.subr.mxu0 0.0
      %2252 = vmatpush1.msra.mxu0 0.0
      %2253 = vmatprep.subr.mxu0 0.0
      %2254 = vmatpush1.msra.mxu0 0.0
      %2255 = vmatprep.subr.mxu0 0.0
      %2256 = vmatpush1.msra.mxu0 0.0
      %2257 = vmatprep.subr.mxu0 0.0
      %2258 = vmatpush1.msra.mxu0 0.0
      %2259 = vmatprep.mubr.f32.mxu0 0.0
      %2260 = vmatmul.mubr.f32.gmra.mrb[0].mxu0 %v2097
      %v2261 = vpop.f32.mrb[0].mxu0
      %v2262 = vadd.f32 0.0, %v2261
      %v2263 = vpop.f32.mrb[0].mxu0
      %2264 = vmatprep.mubr.f32.mxu0 0.0
      %2265 = vmatmul.mubr.f32.gmra.mrb[0].mxu0 %v2100
      %v2266 = vpop.f32.mrb[0].mxu0
      %v2267 = vadd.f32 0.0, %v2266
      %v2268 = vpop.f32.mrb[0].mxu0
      %2269 = vmatprep.mubr.f32.mxu0 0.0
      %2270 = vmatmul.mubr.f32.gmra.mrb[0].mxu0 %v2103
      %v2271 = vpop.f32.mrb[0].mxu0
      %v2272 = vadd.f32 0.0, %v2271
      %v2273 = vpop.f32.mrb[0].mxu0
      %2274 = vmatprep.mubr.f32.mxu0 0.0
      %2275 = vmatmul.mubr.f32.gmra.mrb[0].mxu0 %v2106
      %v2276 = vpop.f32.mrb[0].mxu0
      %v2277 = vadd.f32 0.0, %v2276
      %v2278 = vpop.f32.mrb[0].mxu0
      %2279 = vmatprep.mubr.f32.mxu0 0.0
      %2280 = vmatmul.mubr.f32.gmra.mrb[0].mxu0 %v2109
      %v2281 = vpop.f32.mrb[0].mxu0
      %v2282 = vadd.f32 0.0, %v2281
      %v2283 = vpop.f32.mrb[0].mxu0
      %2284 = vmatprep.mubr.f32.mxu0 0.0
      %2285 = vmatmul.mubr.f32.gmra.mrb[0].mxu0 %v2112
      %v2286 = vpop.f32.mrb[0].mxu0
      %v2287 = vadd.f32 0.0, %v2286
      %v2288 = vpop.f32.mrb[0].mxu0
      %2289 = vmatprep.mubr.f32.mxu0 0.0
      %2290 = vmatmul.mubr.f32.gmra.mrb[0].mxu0 %v2115
      %v2291 = vpop.f32.mrb[0].mxu0
      %v2292 = vadd.f32 0.0, %v2291
      %v2293 = vpop.f32.mrb[0].mxu0
      %2294 = vmatprep.mubr.f32.mxu0 0.0
      %2295 = vmatmul.mubr.f32.gmra.mrb[0].mxu0 %v2118
      %v2296 = vpop.f32.mrb[0].mxu0
      %v2297 = vadd.f32 0.0, %v2296
      %v2298 = vpop.f32.mrb[0].mxu0
      %2299 = vmatprep.mubr.f32.mxu0 0.0
      %2300 = vmatmul.mubr.f32.gmra.mrb[0].mxu0 %v2121
      %v2301 = vpop.f32.mrb[0].mxu0
      %v2302 = vadd.f32 0.0, %v2301
      %v2303 = vpop.f32.mrb[0].mxu0
      %2304 = vmatprep.mubr.f32.mxu0 0.0
      %2305 = vmatmul.mubr.f32.gmra.mrb[0].mxu0 %v2124
      %v2306 = vpop.f32.mrb[0].mxu0
      %v2307 = vadd.f32 0.0, %v2306
      %v2308 = vpop.f32.mrb[0].mxu0
      %2309 = vmatprep.mubr.f32.mxu0 0.0
      %2310 = vmatmul.mubr.f32.gmra.mrb[0].mxu0 %v2127
      %v2311 = vpop.f32.mrb[0].mxu0
      %v2312 = vadd.f32 0.0, %v2311
      %v2313 = vpop.f32.mrb[0].mxu0
      %2314 = vmatprep.mubr.f32.mxu0 0.0
      %2315 = vmatmul.mubr.f32.gmra.mrb[0].mxu0 %v2130
      %v2316 = vpop.f32.mrb[0].mxu0
      %v2317 = vadd.f32 0.0, %v2316
      %v2318 = vpop.f32.mrb[0].mxu0
      %2319 = vmatprep.mubr.f32.mxu0 0.0
      %2320 = vmatmul.mubr.f32.gmra.mrb[0].mxu0 %v2133
      %v2321 = vpop.f32.mrb[0].mxu0
      %v2322 = vadd.f32 0.0, %v2321
      %v2323 = vpop.f32.mrb[0].mxu0
      %2324 = vmatprep.mubr.f32.mxu0 0.0
      %2325 = vmatmul.mubr.f32.gmra.mrb[0].mxu0 %v2136
      %v2326 = vpop.f32.mrb[0].mxu0
      %v2327 = vadd.f32 0.0, %v2326
      %v2328 = vpop.f32.mrb[0].mxu0
      %2329 = vmatprep.mubr.f32.mxu0 0.0
      %2330 = vmatmul.mubr.f32.gmra.mrb[0].mxu0 %v2139
      %v2331 = vpop.f32.mrb[0].mxu0
      %v2332 = vadd.f32 0.0, %v2331
      %v2333 = vpop.f32.mrb[0].mxu0
      %2334 = vmatprep.mubr.f32.mxu0 0.0
      %2335 = vmatmul.mubr.f32.gmra.mrb[0].mxu0 %v2142
      %v2336 = vpop.f32.mrb[0].mxu0
      %v2337 = vadd.f32 0.0, %v2336
      %v2338 = vpop.f32.mrb[0].mxu0
      %2339 = vmatprep.mubr.f32.mxu0 0.0
      %2340 = vmatmul.mubr.f32.gmra.mrb[0].mxu0 %v2145
      %v2341 = vpop.f32.mrb[0].mxu0
      %v2342 = vadd.f32 0.0, %v2341
      %v2343 = vpop.f32.mrb[0].mxu0
      %2344 = vmatprep.mubr.f32.mxu0 0.0
      %2345 = vmatmul.mubr.f32.gmra.mrb[0].mxu0 %v2148
      %v2346 = vpop.f32.mrb[0].mxu0
      %v2347 = vadd.f32 0.0, %v2346
      %v2348 = vpop.f32.mrb[0].mxu0
      %2349 = vmatprep.mubr.f32.mxu0 0.0
      %2350 = vmatmul.mubr.f32.gmra.mrb[0].mxu0 %v2151
      %v2351 = vpop.f32.mrb[0].mxu0
      %v2352 = vadd.f32 0.0, %v2351
      %v2353 = vpop.f32.mrb[0].mxu0
      %2354 = vmatprep.mubr.f32.mxu0 0.0
      %2355 = vmatmul.mubr.f32.gmra.mrb[0].mxu0 %v2154
      %v2356 = vpop.f32.mrb[0].mxu0
      %v2357 = vadd.f32 0.0, %v2356
      %v2358 = vpop.f32.mrb[0].mxu0
      %2359 = vmatprep.mubr.f32.mxu0 0.0
      %2360 = vmatmul.mubr.f32.gmra.mrb[0].mxu0 %v2157
      %v2361 = vpop.f32.mrb[0].mxu0
      %v2362 = vadd.f32 0.0, %v2361
      %v2363 = vpop.f32.mrb[0].mxu0
      %2364 = vmatprep.mubr.f32.mxu0 0.0
      %2365 = vmatmul.mubr.f32.gmra.mrb[0].mxu0 %v2160
      %v2366 = vpop.f32.mrb[0].mxu0
      %v2367 = vadd.f32 0.0, %v2366
      %v2368 = vpop.f32.mrb[0].mxu0
      %2369 = vmatprep.mubr.f32.mxu0 0.0
      %2370 = vmatmul.mubr.f32.gmra.mrb[0].mxu0 %v2163
      %v2371 = vpop.f32.mrb[0].mxu0
      %v2372 = vadd.f32 0.0, %v2371
      %v2373 = vpop.f32.mrb[0].mxu0
      %2374 = vmatprep.mubr.f32.mxu0 0.0
      %2375 = vmatmul.mubr.f32.gmra.mrb[0].mxu0 %v2166
      %v2376 = vpop.f32.mrb[0].mxu0
      %v2377 = vadd.f32 0.0, %v2376
      %v2378 = vpop.f32.mrb[0].mxu0
      %2379 = vmatprep.mubr.f32.mxu0 0.0
      %2380 = vmatmul.mubr.f32.gmra.mrb[0].mxu0 %v2169
      %v2381 = vpop.f32.mrb[0].mxu0
      %v2382 = vadd.f32 0.0, %v2381
      %v2383 = vpop.f32.mrb[0].mxu0
      %2384 = vmatprep.mubr.f32.mxu0 0.0
      %2385 = vmatmul.mubr.f32.gmra.mrb[0].mxu0 %v2172
      %v2386 = vpop.f32.mrb[0].mxu0
      %v2387 = vadd.f32 0.0, %v2386
      %v2388 = vpop.f32.mrb[0].mxu0
      %2389 = vmatprep.mubr.f32.mxu0 0.0
      %2390 = vmatmul.mubr.f32.gmra.mrb[0].mxu0 %v2175
      %v2391 = vpop.f32.mrb[0].mxu0
      %v2392 = vadd.f32 0.0, %v2391
      %v2393 = vpop.f32.mrb[0].mxu0
      %2394 = vmatprep.mubr.f32.mxu0 0.0
      %2395 = vmatmul.mubr.f32.gmra.mrb[0].mxu0 %v2178
      %v2396 = vpop.f32.mrb[0].mxu0
      %v2397 = vadd.f32 0.0, %v2396
      %v2398 = vpop.f32.mrb[0].mxu0
      %2399 = vmatprep.mubr.f32.mxu0 0.0
      %2400 = vmatmul.mubr.f32.gmra.mrb[0].mxu0 %v2181
      %v2401 = vpop.f32.mrb[0].mxu0
      %v2402 = vadd.f32 0.0, %v2401
      %v2403 = vpop.f32.mrb[0].mxu0
      %2404 = vmatprep.mubr.f32.mxu0 0.0
      %2405 = vmatmul.mubr.f32.gmra.mrb[0].mxu0 %v2184
      %v2406 = vpop.f32.mrb[0].mxu0
      %v2407 = vadd.f32 0.0, %v2406
      %v2408 = vpop.f32.mrb[0].mxu0
      %2409 = vmatprep.mubr.f32.mxu0 0.0
      %2410 = vmatmul.mubr.f32.gmra.mrb[0].mxu0 %v2187
      %v2411 = vpop.f32.mrb[0].mxu0
      %v2412 = vadd.f32 0.0, %v2411
      %v2413 = vpop.f32.mrb[0].mxu0
      %2414 = vmatprep.mubr.f32.mxu0 0.0
      %2415 = vmatmul.mubr.f32.gmra.mrb[0].mxu0 %v2190
      %v2416 = vpop.f32.mrb[0].mxu0
      %v2417 = vadd.f32 0.0, %v2416
      %v2418 = vpop.f32.mrb[0].mxu0
      %2419 = vdwg.mxu0
      %v2420 = vadd.f32 %v2061, %v2262
      %v2421 = vadd.f32 %v2062, %v2267
      %v2422 = vadd.f32 %v2063, %v2272
      %v2423 = vadd.f32 %v2064, %v2277
      %v2424 = vadd.f32 %v2065, %v2282
      %v2425 = vadd.f32 %v2066, %v2287
      %v2426 = vadd.f32 %v2067, %v2292
      %v2427 = vadd.f32 %v2068, %v2297
      %v2428 = vadd.f32 %v2069, %v2302
      %v2429 = vadd.f32 %v2070, %v2307
      %v2430 = vadd.f32 %v2071, %v2312
      %v2431 = vadd.f32 %v2072, %v2317
      %v2432 = vadd.f32 %v2073, %v2322
      %v2433 = vadd.f32 %v2074, %v2327
      %v2434 = vadd.f32 %v2075, %v2332
      %v2435 = vadd.f32 %v2076, %v2337
      %v2436 = vadd.f32 %v2077, %v2342
      %v2437 = vadd.f32 %v2078, %v2347
      %v2438 = vadd.f32 %v2079, %v2352
      %v2439 = vadd.f32 %v2080, %v2357
      %v2440 = vadd.f32 %v2081, %v2362
      %v2441 = vadd.f32 %v2082, %v2367
      %v2442 = vadd.f32 %v2083, %v2372
      %v2443 = vadd.f32 %v2084, %v2377
      %v2444 = vadd.f32 %v2085, %v2382
      %v2445 = vadd.f32 %v2086, %v2387
      %v2446 = vadd.f32 %v2087, %v2392
      %v2447 = vadd.f32 %v2088, %v2397
      %v2448 = vadd.f32 %v2089, %v2402
      %v2449 = vadd.f32 %v2090, %v2407
      %v2450 = vadd.f32 %v2091, %v2412
      %v2451 = vadd.f32 %v2092, %v2417
      %v2452 = vld [vmem:[#allocation2 + $0x50] sm:$0xff]
      %v2453 = vld [vmem:[#allocation2 + $0x58] sm:$0xff]
      %v2454 = vld [vmem:[#allocation2 + $0x60] sm:$0xff]
      %v2455 = vld [vmem:[#allocation2 + $0x68] sm:$0xff]
      %v2456 = vld [vmem:[#allocation2 + $0x70] sm:$0xff]
      %v2457 = vld [vmem:[#allocation2 + $0x78] sm:$0xff]
      %v2458 = vld [vmem:[#allocation2 + $0x80] sm:$0xff]
      %v2459 = vld [vmem:[#allocation2 + $0x88] sm:$0xff]
      %v2460 = vld [vmem:[#allocation2 + $0x90] sm:$0xff]
      %v2461 = vld [vmem:[#allocation2 + $0x98] sm:$0xff]
      %v2462 = vld [vmem:[#allocation2 + $0xa0] sm:$0xff]
      %v2463 = vld [vmem:[#allocation2 + $0xa8] sm:$0xff]
      %v2464 = vld [vmem:[#allocation2 + $0xb0] sm:$0xff]
      %v2465 = vld [vmem:[#allocation2 + $0xb8] sm:$0xff]
      %v2466 = vld [vmem:[#allocation2 + $0xc0] sm:$0xff]
      %v2467 = vld [vmem:[#allocation2 + $0xc8] sm:$0xff]
      %v2468 = vld [vmem:[#allocation2 + $0xd0] sm:$0xff]
      %v2469 = vld [vmem:[#allocation2 + $0xd8] sm:$0xff]
      %v2470 = vld [vmem:[#allocation2 + $0xe0] sm:$0xff]
      %v2471 = vld [vmem:[#allocation2 + $0xe8] sm:$0xff]
      %v2472 = vld [vmem:[#allocation2 + $0xf0] sm:$0xff]
      %v2473 = vld [vmem:[#allocation2 + $0xf8] sm:$0xff]
      %v2474 = vld [vmem:[#allocation2 + $0x100] sm:$0xff]
      %v2475 = vld [vmem:[#allocation2 + $0x108] sm:$0xff]
      %v2476 = vld [vmem:[#allocation2 + $0x110] sm:$0xff]
      %v2477 = vld [vmem:[#allocation2 + $0x118] sm:$0xff]
      %v2478 = vld [vmem:[#allocation2 + $0x120] sm:$0xff]
      %v2479 = vld [vmem:[#allocation2 + $0x128] sm:$0xff]
      %v2480 = vld [vmem:[#allocation2 + $0x130] sm:$0xff]
      %v2481 = vld [vmem:[#allocation2 + $0x138] sm:$0xff]
      %v2482 = vld [vmem:[#allocation2 + $0x140] sm:$0xff]
      %v2483 = vld [vmem:[#allocation2 + $0x148] sm:$0xff]
      %s2484 = scalar_lea.vmem %s3, 80
      %v2485 = vld [vmem:[%s2484] sm:$0xff]
      %v2486 = vld [vmem:[%s2484 + $0x8] sm:$0xf]
      %v2488 = vsel %vm665, %v2452, 0
      %v2491 = vsel %vm665, %v2453, 0
      %v2494 = vsel %vm665, %v2454, 0
      %v2497 = vsel %vm665, %v2455, 0
      %v2500 = vsel %vm665, %v2456, 0
      %v2503 = vsel %vm665, %v2457, 0
      %v2506 = vsel %vm665, %v2458, 0
      %v2509 = vsel %vm665, %v2459, 0
      %v2512 = vsel %vm665, %v2460, 0
      %v2515 = vsel %vm665, %v2461, 0
      %v2518 = vsel %vm665, %v2462, 0
      %v2521 = vsel %vm665, %v2463, 0
      %v2524 = vsel %vm665, %v2464, 0
      %v2527 = vsel %vm665, %v2465, 0
      %v2530 = vsel %vm665, %v2466, 0
      %v2533 = vsel %vm665, %v2467, 0
      %v2536 = vsel %vm665, %v2468, 0
      %v2539 = vsel %vm665, %v2469, 0
      %v2542 = vsel %vm665, %v2470, 0
      %v2545 = vsel %vm665, %v2471, 0
      %v2548 = vsel %vm665, %v2472, 0
      %v2551 = vsel %vm665, %v2473, 0
      %v2554 = vsel %vm665, %v2474, 0
      %v2557 = vsel %vm665, %v2475, 0
      %v2560 = vsel %vm665, %v2476, 0
      %v2563 = vsel %vm665, %v2477, 0
      %v2566 = vsel %vm665, %v2478, 0
      %v2569 = vsel %vm665, %v2479, 0
      %v2572 = vsel %vm665, %v2480, 0
      %v2575 = vsel %vm665, %v2481, 0
      %v2578 = vsel %vm665, %v2482, 0
      %v2581 = vsel %vm665, %v2483, 0
      %v2584 = vsel %vm336, %v2486, 0
      %2586 = vmatprep.subr.mxu0 0.0
      %2587 = vmatpush1.msra.mxu0 %v2485
      %2588 = vmatprep.subr.mxu0 0.0
      %2589 = vmatpush1.msra.mxu0 %v2584
      %2590 = vmatprep.subr.mxu0 0.0
      %2591 = vmatpush1.msra.mxu0 0.0
      %2592 = vmatprep.subr.mxu0 0.0
      %2593 = vmatpush1.msra.mxu0 0.0
      %2594 = vmatprep.subr.mxu0 0.0
      %2595 = vmatpush1.msra.mxu0 0.0
      %2596 = vmatprep.subr.mxu0 0.0
      %2597 = vmatpush1.msra.mxu0 0.0
      %2598 = vmatprep.subr.mxu0 0.0
      %2599 = vmatpush1.msra.mxu0 0.0
      %2600 = vmatprep.subr.mxu0 0.0
      %2601 = vmatpush1.msra.mxu0 0.0
      %2602 = vmatprep.subr.mxu0 0.0
      %2603 = vmatpush1.msra.mxu0 0.0
      %2604 = vmatprep.subr.mxu0 0.0
      %2605 = vmatpush1.msra.mxu0 0.0
      %2606 = vmatprep.subr.mxu0 0.0
      %2607 = vmatpush1.msra.mxu0 0.0
      %2608 = vmatprep.subr.mxu0 0.0
      %2609 = vmatpush1.msra.mxu0 0.0
      %2610 = vmatprep.subr.mxu0 0.0
      %2611 = vmatpush1.msra.mxu0 0.0
      %2612 = vmatprep.subr.mxu0 0.0
      %2613 = vmatpush1.msra.mxu0 0.0
      %2614 = vmatprep.subr.mxu0 0.0
      %2615 = vmatpush1.msra.mxu0 0.0
      %2616 = vmatprep.subr.mxu0 0.0
      %2617 = vmatpush1.msra.mxu0 0.0
      %2618 = vmatprep.subr.mxu0 0.0
      %2619 = vmatpush1.msra.mxu0 0.0
      %2620 = vmatprep.subr.mxu0 0.0
      %2621 = vmatpush1.msra.mxu0 0.0
      %2622 = vmatprep.subr.mxu0 0.0
      %2623 = vmatpush1.msra.mxu0 0.0
      %2624 = vmatprep.subr.mxu0 0.0
      %2625 = vmatpush1.msra.mxu0 0.0
      %2626 = vmatprep.subr.mxu0 0.0
      %2627 = vmatpush1.msra.mxu0 0.0
      %2628 = vmatprep.subr.mxu0 0.0
      %2629 = vmatpush1.msra.mxu0 0.0
      %2630 = vmatprep.subr.mxu0 0.0
      %2631 = vmatpush1.msra.mxu0 0.0
      %2632 = vmatprep.subr.mxu0 0.0
      %2633 = vmatpush1.msra.mxu0 0.0
      %2634 = vmatprep.subr.mxu0 0.0
      %2635 = vmatpush1.msra.mxu0 0.0
      %2636 = vmatprep.subr.mxu0 0.0
      %2637 = vmatpush1.msra.mxu0 0.0
      %2638 = vmatprep.subr.mxu0 0.0
      %2639 = vmatpush1.msra.mxu0 0.0
      %2640 = vmatprep.subr.mxu0 0.0
      %2641 = vmatpush1.msra.mxu0 0.0
      %2642 = vmatprep.subr.mxu0 0.0
      %2643 = vmatpush1.msra.mxu0 0.0
      %2644 = vmatprep.subr.mxu0 0.0
      %2645 = vmatpush1.msra.mxu0 0.0
      %2646 = vmatprep.subr.mxu0 0.0
      %2647 = vmatpush1.msra.mxu0 0.0
      %2648 = vmatprep.subr.mxu0 0.0
      %2649 = vmatpush1.msra.mxu0 0.0
      %2650 = vmatprep.mubr.f32.mxu0 0.0
      %2651 = vmatmul.mubr.f32.gmra.mrb[0].mxu0 %v2488
      %v2652 = vpop.f32.mrb[0].mxu0
      %v2653 = vadd.f32 0.0, %v2652
      %v2654 = vpop.f32.mrb[0].mxu0
      %2655 = vmatprep.mubr.f32.mxu0 0.0
      %2656 = vmatmul.mubr.f32.gmra.mrb[0].mxu0 %v2491
      %v2657 = vpop.f32.mrb[0].mxu0
      %v2658 = vadd.f32 0.0, %v2657
      %v2659 = vpop.f32.mrb[0].mxu0
      %2660 = vmatprep.mubr.f32.mxu0 0.0
      %2661 = vmatmul.mubr.f32.gmra.mrb[0].mxu0 %v2494
      %v2662 = vpop.f32.mrb[0].mxu0
      %v2663 = vadd.f32 0.0, %v2662
      %v2664 = vpop.f32.mrb[0].mxu0
      %2665 = vmatprep.mubr.f32.mxu0 0.0
      %2666 = vmatmul.mubr.f32.gmra.mrb[0].mxu0 %v2497
      %v2667 = vpop.f32.mrb[0].mxu0
      %v2668 = vadd.f32 0.0, %v2667
      %v2669 = vpop.f32.mrb[0].mxu0
      %2670 = vmatprep.mubr.f32.mxu0 0.0
      %2671 = vmatmul.mubr.f32.gmra.mrb[0].mxu0 %v2500
      %v2672 = vpop.f32.mrb[0].mxu0
      %v2673 = vadd.f32 0.0, %v2672
      %v2674 = vpop.f32.mrb[0].mxu0
      %2675 = vmatprep.mubr.f32.mxu0 0.0
      %2676 = vmatmul.mubr.f32.gmra.mrb[0].mxu0 %v2503
      %v2677 = vpop.f32.mrb[0].mxu0
      %v2678 = vadd.f32 0.0, %v2677
      %v2679 = vpop.f32.mrb[0].mxu0
      %2680 = vmatprep.mubr.f32.mxu0 0.0
      %2681 = vmatmul.mubr.f32.gmra.mrb[0].mxu0 %v2506
      %v2682 = vpop.f32.mrb[0].mxu0
      %v2683 = vadd.f32 0.0, %v2682
      %v2684 = vpop.f32.mrb[0].mxu0
      %2685 = vmatprep.mubr.f32.mxu0 0.0
      %2686 = vmatmul.mubr.f32.gmra.mrb[0].mxu0 %v2509
      %v2687 = vpop.f32.mrb[0].mxu0
      %v2688 = vadd.f32 0.0, %v2687
      %v2689 = vpop.f32.mrb[0].mxu0
      %2690 = vmatprep.mubr.f32.mxu0 0.0
      %2691 = vmatmul.mubr.f32.gmra.mrb[0].mxu0 %v2512
      %v2692 = vpop.f32.mrb[0].mxu0
      %v2693 = vadd.f32 0.0, %v2692
      %v2694 = vpop.f32.mrb[0].mxu0
      %2695 = vmatprep.mubr.f32.mxu0 0.0
      %2696 = vmatmul.mubr.f32.gmra.mrb[0].mxu0 %v2515
      %v2697 = vpop.f32.mrb[0].mxu0
      %v2698 = vadd.f32 0.0, %v2697
      %v2699 = vpop.f32.mrb[0].mxu0
      %2700 = vmatprep.mubr.f32.mxu0 0.0
      %2701 = vmatmul.mubr.f32.gmra.mrb[0].mxu0 %v2518
      %v2702 = vpop.f32.mrb[0].mxu0
      %v2703 = vadd.f32 0.0, %v2702
      %v2704 = vpop.f32.mrb[0].mxu0
      %2705 = vmatprep.mubr.f32.mxu0 0.0
      %2706 = vmatmul.mubr.f32.gmra.mrb[0].mxu0 %v2521
      %v2707 = vpop.f32.mrb[0].mxu0
      %v2708 = vadd.f32 0.0, %v2707
      %v2709 = vpop.f32.mrb[0].mxu0
      %2710 = vmatprep.mubr.f32.mxu0 0.0
      %2711 = vmatmul.mubr.f32.gmra.mrb[0].mxu0 %v2524
      %v2712 = vpop.f32.mrb[0].mxu0
      %v2713 = vadd.f32 0.0, %v2712
      %v2714 = vpop.f32.mrb[0].mxu0
      %2715 = vmatprep.mubr.f32.mxu0 0.0
      %2716 = vmatmul.mubr.f32.gmra.mrb[0].mxu0 %v2527
      %v2717 = vpop.f32.mrb[0].mxu0
      %v2718 = vadd.f32 0.0, %v2717
      %v2719 = vpop.f32.mrb[0].mxu0
      %2720 = vmatprep.mubr.f32.mxu0 0.0
      %2721 = vmatmul.mubr.f32.gmra.mrb[0].mxu0 %v2530
      %v2722 = vpop.f32.mrb[0].mxu0
      %v2723 = vadd.f32 0.0, %v2722
      %v2724 = vpop.f32.mrb[0].mxu0
      %2725 = vmatprep.mubr.f32.mxu0 0.0
      %2726 = vmatmul.mubr.f32.gmra.mrb[0].mxu0 %v2533
      %v2727 = vpop.f32.mrb[0].mxu0
      %v2728 = vadd.f32 0.0, %v2727
      %v2729 = vpop.f32.mrb[0].mxu0
      %2730 = vmatprep.mubr.f32.mxu0 0.0
      %2731 = vmatmul.mubr.f32.gmra.mrb[0].mxu0 %v2536
      %v2732 = vpop.f32.mrb[0].mxu0
      %v2733 = vadd.f32 0.0, %v2732
      %v2734 = vpop.f32.mrb[0].mxu0
      %2735 = vmatprep.mubr.f32.mxu0 0.0
      %2736 = vmatmul.mubr.f32.gmra.mrb[0].mxu0 %v2539
      %v2737 = vpop.f32.mrb[0].mxu0
      %v2738 = vadd.f32 0.0, %v2737
      %v2739 = vpop.f32.mrb[0].mxu0
      %2740 = vmatprep.mubr.f32.mxu0 0.0
      %2741 = vmatmul.mubr.f32.gmra.mrb[0].mxu0 %v2542
      %v2742 = vpop.f32.mrb[0].mxu0
      %v2743 = vadd.f32 0.0, %v2742
      %v2744 = vpop.f32.mrb[0].mxu0
      %2745 = vmatprep.mubr.f32.mxu0 0.0
      %2746 = vmatmul.mubr.f32.gmra.mrb[0].mxu0 %v2545
      %v2747 = vpop.f32.mrb[0].mxu0
      %v2748 = vadd.f32 0.0, %v2747
      %v2749 = vpop.f32.mrb[0].mxu0
      %2750 = vmatprep.mubr.f32.mxu0 0.0
      %2751 = vmatmul.mubr.f32.gmra.mrb[0].mxu0 %v2548
      %v2752 = vpop.f32.mrb[0].mxu0
      %v2753 = vadd.f32 0.0, %v2752
      %v2754 = vpop.f32.mrb[0].mxu0
      %2755 = vmatprep.mubr.f32.mxu0 0.0
      %2756 = vmatmul.mubr.f32.gmra.mrb[0].mxu0 %v2551
      %v2757 = vpop.f32.mrb[0].mxu0
      %v2758 = vadd.f32 0.0, %v2757
      %v2759 = vpop.f32.mrb[0].mxu0
      %2760 = vmatprep.mubr.f32.mxu0 0.0
      %2761 = vmatmul.mubr.f32.gmra.mrb[0].mxu0 %v2554
      %v2762 = vpop.f32.mrb[0].mxu0
      %v2763 = vadd.f32 0.0, %v2762
      %v2764 = vpop.f32.mrb[0].mxu0
      %2765 = vmatprep.mubr.f32.mxu0 0.0
      %2766 = vmatmul.mubr.f32.gmra.mrb[0].mxu0 %v2557
      %v2767 = vpop.f32.mrb[0].mxu0
      %v2768 = vadd.f32 0.0, %v2767
      %v2769 = vpop.f32.mrb[0].mxu0
      %2770 = vmatprep.mubr.f32.mxu0 0.0
      %2771 = vmatmul.mubr.f32.gmra.mrb[0].mxu0 %v2560
      %v2772 = vpop.f32.mrb[0].mxu0
      %v2773 = vadd.f32 0.0, %v2772
      %v2774 = vpop.f32.mrb[0].mxu0
      %2775 = vmatprep.mubr.f32.mxu0 0.0
      %2776 = vmatmul.mubr.f32.gmra.mrb[0].mxu0 %v2563
      %v2777 = vpop.f32.mrb[0].mxu0
      %v2778 = vadd.f32 0.0, %v2777
      %v2779 = vpop.f32.mrb[0].mxu0
      %2780 = vmatprep.mubr.f32.mxu0 0.0
      %2781 = vmatmul.mubr.f32.gmra.mrb[0].mxu0 %v2566
      %v2782 = vpop.f32.mrb[0].mxu0
      %v2783 = vadd.f32 0.0, %v2782
      %v2784 = vpop.f32.mrb[0].mxu0
      %2785 = vmatprep.mubr.f32.mxu0 0.0
      %2786 = vmatmul.mubr.f32.gmra.mrb[0].mxu0 %v2569
      %v2787 = vpop.f32.mrb[0].mxu0
      %v2788 = vadd.f32 0.0, %v2787
      %v2789 = vpop.f32.mrb[0].mxu0
      %2790 = vmatprep.mubr.f32.mxu0 0.0
      %2791 = vmatmul.mubr.f32.gmra.mrb[0].mxu0 %v2572
      %v2792 = vpop.f32.mrb[0].mxu0
      %v2793 = vadd.f32 0.0, %v2792
      %v2794 = vpop.f32.mrb[0].mxu0
      %2795 = vmatprep.mubr.f32.mxu0 0.0
      %2796 = vmatmul.mubr.f32.gmra.mrb[0].mxu0 %v2575
      %v2797 = vpop.f32.mrb[0].mxu0
      %v2798 = vadd.f32 0.0, %v2797
      %v2799 = vpop.f32.mrb[0].mxu0
      %2800 = vmatprep.mubr.f32.mxu0 0.0
      %2801 = vmatmul.mubr.f32.gmra.mrb[0].mxu0 %v2578
      %v2802 = vpop.f32.mrb[0].mxu0
      %v2803 = vadd.f32 0.0, %v2802
      %v2804 = vpop.f32.mrb[0].mxu0
      %2805 = vmatprep.mubr.f32.mxu0 0.0
      %2806 = vmatmul.mubr.f32.gmra.mrb[0].mxu0 %v2581
      %v2807 = vpop.f32.mrb[0].mxu0
      %v2808 = vadd.f32 0.0, %v2807
      %v2809 = vpop.f32.mrb[0].mxu0
      %2810 = vdwg.mxu0
      %v2811 = vadd.f32 %v2420, %v2653
      %v2812 = vadd.f32 %v2421, %v2658
      %v2813 = vadd.f32 %v2422, %v2663
      %v2814 = vadd.f32 %v2423, %v2668
      %v2815 = vadd.f32 %v2424, %v2673
      %v2816 = vadd.f32 %v2425, %v2678
      %v2817 = vadd.f32 %v2426, %v2683
      %v2818 = vadd.f32 %v2427, %v2688
      %v2819 = vadd.f32 %v2428, %v2693
      %v2820 = vadd.f32 %v2429, %v2698
      %v2821 = vadd.f32 %v2430, %v2703
      %v2822 = vadd.f32 %v2431, %v2708
      %v2823 = vadd.f32 %v2432, %v2713
      %v2824 = vadd.f32 %v2433, %v2718
      %v2825 = vadd.f32 %v2434, %v2723
      %v2826 = vadd.f32 %v2435, %v2728
      %v2827 = vadd.f32 %v2436, %v2733
      %v2828 = vadd.f32 %v2437, %v2738
      %v2829 = vadd.f32 %v2438, %v2743
      %v2830 = vadd.f32 %v2439, %v2748
      %v2831 = vadd.f32 %v2440, %v2753
      %v2832 = vadd.f32 %v2441, %v2758
      %v2833 = vadd.f32 %v2442, %v2763
      %v2834 = vadd.f32 %v2443, %v2768
      %v2835 = vadd.f32 %v2444, %v2773
      %v2836 = vadd.f32 %v2445, %v2778
      %v2837 = vadd.f32 %v2446, %v2783
      %v2838 = vadd.f32 %v2447, %v2788
      %v2839 = vadd.f32 %v2448, %v2793
      %v2840 = vadd.f32 %v2449, %v2798
      %v2841 = vadd.f32 %v2450, %v2803
      %v2842 = vadd.f32 %v2451, %v2808
      %v2843 = vld [vmem:[#allocation2 + $0x60] sm:$0xff]
      %v2844 = vld [vmem:[#allocation2 + $0x68] sm:$0xff]
      %v2845 = vld [vmem:[#allocation2 + $0x70] sm:$0xff]
      %v2846 = vld [vmem:[#allocation2 + $0x78] sm:$0xff]
      %v2847 = vld [vmem:[#allocation2 + $0x80] sm:$0xff]
      %v2848 = vld [vmem:[#allocation2 + $0x88] sm:$0xff]
      %v2849 = vld [vmem:[#allocation2 + $0x90] sm:$0xff]
      %v2850 = vld [vmem:[#allocation2 + $0x98] sm:$0xff]
      %v2851 = vld [vmem:[#allocation2 + $0xa0] sm:$0xff]
      %v2852 = vld [vmem:[#allocation2 + $0xa8] sm:$0xff]
      %v2853 = vld [vmem:[#allocation2 + $0xb0] sm:$0xff]
      %v2854 = vld [vmem:[#allocation2 + $0xb8] sm:$0xff]
      %v2855 = vld [vmem:[#allocation2 + $0xc0] sm:$0xff]
      %v2856 = vld [vmem:[#allocation2 + $0xc8] sm:$0xff]
      %v2857 = vld [vmem:[#allocation2 + $0xd0] sm:$0xff]
      %v2858 = vld [vmem:[#allocation2 + $0xd8] sm:$0xff]
      %v2859 = vld [vmem:[#allocation2 + $0xe0] sm:$0xff]
      %v2860 = vld [vmem:[#allocation2 + $0xe8] sm:$0xff]
      %v2861 = vld [vmem:[#allocation2 + $0xf0] sm:$0xff]
      %v2862 = vld [vmem:[#allocation2 + $0xf8] sm:$0xff]
      %v2863 = vld [vmem:[#allocation2 + $0x100] sm:$0xff]
      %v2864 = vld [vmem:[#allocation2 + $0x108] sm:$0xff]
      %v2865 = vld [vmem:[#allocation2 + $0x110] sm:$0xff]
      %v2866 = vld [vmem:[#allocation2 + $0x118] sm:$0xff]
      %v2867 = vld [vmem:[#allocation2 + $0x120] sm:$0xff]
      %v2868 = vld [vmem:[#allocation2 + $0x128] sm:$0xff]
      %v2869 = vld [vmem:[#allocation2 + $0x130] sm:$0xff]
      %v2870 = vld [vmem:[#allocation2 + $0x138] sm:$0xff]
      %v2871 = vld [vmem:[#allocation2 + $0x140] sm:$0xff]
      %v2872 = vld [vmem:[#allocation2 + $0x148] sm:$0xff]
      %v2873 = vld [vmem:[#allocation2 + $0x150] sm:$0xff]
      %v2874 = vld [vmem:[#allocation2 + $0x158] sm:$0xff]
      %s2875 = scalar_lea.vmem %s3, 96
      %v2876 = vld [vmem:[%s2875] sm:$0xff]
      %v2877 = vld [vmem:[%s2875 + $0x8] sm:$0xf]
      %v2879 = vsel %vm665, %v2843, 0
      %v2882 = vsel %vm665, %v2844, 0
      %v2885 = vsel %vm665, %v2845, 0
      %v2888 = vsel %vm665, %v2846, 0
      %v2891 = vsel %vm665, %v2847, 0
      %v2894 = vsel %vm665, %v2848, 0
      %v2897 = vsel %vm665, %v2849, 0
      %v2900 = vsel %vm665, %v2850, 0
      %v2903 = vsel %vm665, %v2851, 0
      %v2906 = vsel %vm665, %v2852, 0
      %v2909 = vsel %vm665, %v2853, 0
      %v2912 = vsel %vm665, %v2854, 0
      %v2915 = vsel %vm665, %v2855, 0
      %v2918 = vsel %vm665, %v2856, 0
      %v2921 = vsel %vm665, %v2857, 0
      %v2924 = vsel %vm665, %v2858, 0
      %v2927 = vsel %vm665, %v2859, 0
      %v2930 = vsel %vm665, %v2860, 0
      %v2933 = vsel %vm665, %v2861, 0
      %v2936 = vsel %vm665, %v2862, 0
      %v2939 = vsel %vm665, %v2863, 0
      %v2942 = vsel %vm665, %v2864, 0
      %v2945 = vsel %vm665, %v2865, 0
      %v2948 = vsel %vm665, %v2866, 0
      %v2951 = vsel %vm665, %v2867, 0
      %v2954 = vsel %vm665, %v2868, 0
      %v2957 = vsel %vm665, %v2869, 0
      %v2960 = vsel %vm665, %v2870, 0
      %v2963 = vsel %vm665, %v2871, 0
      %v2966 = vsel %vm665, %v2872, 0
      %v2969 = vsel %vm665, %v2873, 0
      %v2972 = vsel %vm665, %v2874, 0
      %v2975 = vsel %vm336, %v2877, 0
      %2977 = vmatprep.subr.mxu0 0.0
      %2978 = vmatpush1.msra.mxu0 %v2876
      %2979 = vmatprep.subr.mxu0 0.0
      %2980 = vmatpush1.msra.mxu0 %v2975
      %2981 = vmatprep.subr.mxu0 0.0
      %2982 = vmatpush1.msra.mxu0 0.0
      %2983 = vmatprep.subr.mxu0 0.0
      %2984 = vmatpush1.msra.mxu0 0.0
      %2985 = vmatprep.subr.mxu0 0.0
      %2986 = vmatpush1.msra.mxu0 0.0
      %2987 = vmatprep.subr.mxu0 0.0
      %2988 = vmatpush1.msra.mxu0 0.0
      %2989 = vmatprep.subr.mxu0 0.0
      %2990 = vmatpush1.msra.mxu0 0.0
      %2991 = vmatprep.subr.mxu0 0.0
      %2992 = vmatpush1.msra.mxu0 0.0
      %2993 = vmatprep.subr.mxu0 0.0
      %2994 = vmatpush1.msra.mxu0 0.0
      %2995 = vmatprep.subr.mxu0 0.0
      %2996 = vmatpush1.msra.mxu0 0.0
      %2997 = vmatprep.subr.mxu0 0.0
      %2998 = vmatpush1.msra.mxu0 0.0
      %2999 = vmatprep.subr.mxu0 0.0
      %3000 = vmatpush1.msra.mxu0 0.0
      %3001 = vmatprep.subr.mxu0 0.0
      %3002 = vmatpush1.msra.mxu0 0.0
      %3003 = vmatprep.subr.mxu0 0.0
      %3004 = vmatpush1.msra.mxu0 0.0
      %3005 = vmatprep.subr.mxu0 0.0
      %3006 = vmatpush1.msra.mxu0 0.0
      %3007 = vmatprep.subr.mxu0 0.0
      %3008 = vmatpush1.msra.mxu0 0.0
      %3009 = vmatprep.subr.mxu0 0.0
      %3010 = vmatpush1.msra.mxu0 0.0
      %3011 = vmatprep.subr.mxu0 0.0
      %3012 = vmatpush1.msra.mxu0 0.0
      %3013 = vmatprep.subr.mxu0 0.0
      %3014 = vmatpush1.msra.mxu0 0.0
      %3015 = vmatprep.subr.mxu0 0.0
      %3016 = vmatpush1.msra.mxu0 0.0
      %3017 = vmatprep.subr.mxu0 0.0
      %3018 = vmatpush1.msra.mxu0 0.0
      %3019 = vmatprep.subr.mxu0 0.0
      %3020 = vmatpush1.msra.mxu0 0.0
      %3021 = vmatprep.subr.mxu0 0.0
      %3022 = vmatpush1.msra.mxu0 0.0
      %3023 = vmatprep.subr.mxu0 0.0
      %3024 = vmatpush1.msra.mxu0 0.0
      %3025 = vmatprep.subr.mxu0 0.0
      %3026 = vmatpush1.msra.mxu0 0.0
      %3027 = vmatprep.subr.mxu0 0.0
      %3028 = vmatpush1.msra.mxu0 0.0
      %3029 = vmatprep.subr.mxu0 0.0
      %3030 = vmatpush1.msra.mxu0 0.0
      %3031 = vmatprep.subr.mxu0 0.0
      %3032 = vmatpush1.msra.mxu0 0.0
      %3033 = vmatprep.subr.mxu0 0.0
      %3034 = vmatpush1.msra.mxu0 0.0
      %3035 = vmatprep.subr.mxu0 0.0
      %3036 = vmatpush1.msra.mxu0 0.0
      %3037 = vmatprep.subr.mxu0 0.0
      %3038 = vmatpush1.msra.mxu0 0.0
      %3039 = vmatprep.subr.mxu0 0.0
      %3040 = vmatpush1.msra.mxu0 0.0
      %3041 = vmatprep.mubr.f32.mxu0 0.0
      %3042 = vmatmul.mubr.f32.gmra.mrb[0].mxu0 %v2879
      %v3043 = vpop.f32.mrb[0].mxu0
      %v3044 = vadd.f32 0.0, %v3043
      %v3045 = vpop.f32.mrb[0].mxu0
      %3046 = vmatprep.mubr.f32.mxu0 0.0
      %3047 = vmatmul.mubr.f32.gmra.mrb[0].mxu0 %v2882
      %v3048 = vpop.f32.mrb[0].mxu0
      %v3049 = vadd.f32 0.0, %v3048
      %v3050 = vpop.f32.mrb[0].mxu0
      %3051 = vmatprep.mubr.f32.mxu0 0.0
      %3052 = vmatmul.mubr.f32.gmra.mrb[0].mxu0 %v2885
      %v3053 = vpop.f32.mrb[0].mxu0
      %v3054 = vadd.f32 0.0, %v3053
      %v3055 = vpop.f32.mrb[0].mxu0
      %3056 = vmatprep.mubr.f32.mxu0 0.0
      %3057 = vmatmul.mubr.f32.gmra.mrb[0].mxu0 %v2888
      %v3058 = vpop.f32.mrb[0].mxu0
      %v3059 = vadd.f32 0.0, %v3058
      %v3060 = vpop.f32.mrb[0].mxu0
      %3061 = vmatprep.mubr.f32.mxu0 0.0
      %3062 = vmatmul.mubr.f32.gmra.mrb[0].mxu0 %v2891
      %v3063 = vpop.f32.mrb[0].mxu0
      %v3064 = vadd.f32 0.0, %v3063
      %v3065 = vpop.f32.mrb[0].mxu0
      %3066 = vmatprep.mubr.f32.mxu0 0.0
      %3067 = vmatmul.mubr.f32.gmra.mrb[0].mxu0 %v2894
      %v3068 = vpop.f32.mrb[0].mxu0
      %v3069 = vadd.f32 0.0, %v3068
      %v3070 = vpop.f32.mrb[0].mxu0
      %3071 = vmatprep.mubr.f32.mxu0 0.0
      %3072 = vmatmul.mubr.f32.gmra.mrb[0].mxu0 %v2897
      %v3073 = vpop.f32.mrb[0].mxu0
      %v3074 = vadd.f32 0.0, %v3073
      %v3075 = vpop.f32.mrb[0].mxu0
      %3076 = vmatprep.mubr.f32.mxu0 0.0
      %3077 = vmatmul.mubr.f32.gmra.mrb[0].mxu0 %v2900
      %v3078 = vpop.f32.mrb[0].mxu0
      %v3079 = vadd.f32 0.0, %v3078
      %v3080 = vpop.f32.mrb[0].mxu0
      %3081 = vmatprep.mubr.f32.mxu0 0.0
      %3082 = vmatmul.mubr.f32.gmra.mrb[0].mxu0 %v2903
      %v3083 = vpop.f32.mrb[0].mxu0
      %v3084 = vadd.f32 0.0, %v3083
      %v3085 = vpop.f32.mrb[0].mxu0
      %3086 = vmatprep.mubr.f32.mxu0 0.0
      %3087 = vmatmul.mubr.f32.gmra.mrb[0].mxu0 %v2906
      %v3088 = vpop.f32.mrb[0].mxu0
      %v3089 = vadd.f32 0.0, %v3088
      %v3090 = vpop.f32.mrb[0].mxu0
      %3091 = vmatprep.mubr.f32.mxu0 0.0
      %3092 = vmatmul.mubr.f32.gmra.mrb[0].mxu0 %v2909
      %v3093 = vpop.f32.mrb[0].mxu0
      %v3094 = vadd.f32 0.0, %v3093
      %v3095 = vpop.f32.mrb[0].mxu0
      %3096 = vmatprep.mubr.f32.mxu0 0.0
      %3097 = vmatmul.mubr.f32.gmra.mrb[0].mxu0 %v2912
      %v3098 = vpop.f32.mrb[0].mxu0
      %v3099 = vadd.f32 0.0, %v3098
      %v3100 = vpop.f32.mrb[0].mxu0
      %3101 = vmatprep.mubr.f32.mxu0 0.0
      %3102 = vmatmul.mubr.f32.gmra.mrb[0].mxu0 %v2915
      %v3103 = vpop.f32.mrb[0].mxu0
      %v3104 = vadd.f32 0.0, %v3103
      %v3105 = vpop.f32.mrb[0].mxu0
      %3106 = vmatprep.mubr.f32.mxu0 0.0
      %3107 = vmatmul.mubr.f32.gmra.mrb[0].mxu0 %v2918
      %v3108 = vpop.f32.mrb[0].mxu0
      %v3109 = vadd.f32 0.0, %v3108
      %v3110 = vpop.f32.mrb[0].mxu0
      %3111 = vmatprep.mubr.f32.mxu0 0.0
      %3112 = vmatmul.mubr.f32.gmra.mrb[0].mxu0 %v2921
      %v3113 = vpop.f32.mrb[0].mxu0
      %v3114 = vadd.f32 0.0, %v3113
      %v3115 = vpop.f32.mrb[0].mxu0
      %3116 = vmatprep.mubr.f32.mxu0 0.0
      %3117 = vmatmul.mubr.f32.gmra.mrb[0].mxu0 %v2924
      %v3118 = vpop.f32.mrb[0].mxu0
      %v3119 = vadd.f32 0.0, %v3118
      %v3120 = vpop.f32.mrb[0].mxu0
      %3121 = vmatprep.mubr.f32.mxu0 0.0
      %3122 = vmatmul.mubr.f32.gmra.mrb[0].mxu0 %v2927
      %v3123 = vpop.f32.mrb[0].mxu0
      %v3124 = vadd.f32 0.0, %v3123
      %v3125 = vpop.f32.mrb[0].mxu0
      %3126 = vmatprep.mubr.f32.mxu0 0.0
      %3127 = vmatmul.mubr.f32.gmra.mrb[0].mxu0 %v2930
      %v3128 = vpop.f32.mrb[0].mxu0
      %v3129 = vadd.f32 0.0, %v3128
      %v3130 = vpop.f32.mrb[0].mxu0
      %3131 = vmatprep.mubr.f32.mxu0 0.0
      %3132 = vmatmul.mubr.f32.gmra.mrb[0].mxu0 %v2933
      %v3133 = vpop.f32.mrb[0].mxu0
      %v3134 = vadd.f32 0.0, %v3133
      %v3135 = vpop.f32.mrb[0].mxu0
      %3136 = vmatprep.mubr.f32.mxu0 0.0
      %3137 = vmatmul.mubr.f32.gmra.mrb[0].mxu0 %v2936
      %v3138 = vpop.f32.mrb[0].mxu0
      %v3139 = vadd.f32 0.0, %v3138
      %v3140 = vpop.f32.mrb[0].mxu0
      %3141 = vmatprep.mubr.f32.mxu0 0.0
      %3142 = vmatmul.mubr.f32.gmra.mrb[0].mxu0 %v2939
      %v3143 = vpop.f32.mrb[0].mxu0
      %v3144 = vadd.f32 0.0, %v3143
      %v3145 = vpop.f32.mrb[0].mxu0
      %3146 = vmatprep.mubr.f32.mxu0 0.0
      %3147 = vmatmul.mubr.f32.gmra.mrb[0].mxu0 %v2942
      %v3148 = vpop.f32.mrb[0].mxu0
      %v3149 = vadd.f32 0.0, %v3148
      %v3150 = vpop.f32.mrb[0].mxu0
      %3151 = vmatprep.mubr.f32.mxu0 0.0
      %3152 = vmatmul.mubr.f32.gmra.mrb[0].mxu0 %v2945
      %v3153 = vpop.f32.mrb[0].mxu0
      %v3154 = vadd.f32 0.0, %v3153
      %v3155 = vpop.f32.mrb[0].mxu0
      %3156 = vmatprep.mubr.f32.mxu0 0.0
      %3157 = vmatmul.mubr.f32.gmra.mrb[0].mxu0 %v2948
      %v3158 = vpop.f32.mrb[0].mxu0
      %v3159 = vadd.f32 0.0, %v3158
      %v3160 = vpop.f32.mrb[0].mxu0
      %3161 = vmatprep.mubr.f32.mxu0 0.0
      %3162 = vmatmul.mubr.f32.gmra.mrb[0].mxu0 %v2951
      %v3163 = vpop.f32.mrb[0].mxu0
      %v3164 = vadd.f32 0.0, %v3163
      %v3165 = vpop.f32.mrb[0].mxu0
      %3166 = vmatprep.mubr.f32.mxu0 0.0
      %3167 = vmatmul.mubr.f32.gmra.mrb[0].mxu0 %v2954
      %v3168 = vpop.f32.mrb[0].mxu0
      %v3169 = vadd.f32 0.0, %v3168
      %v3170 = vpop.f32.mrb[0].mxu0
      %3171 = vmatprep.mubr.f32.mxu0 0.0
      %3172 = vmatmul.mubr.f32.gmra.mrb[0].mxu0 %v2957
      %v3173 = vpop.f32.mrb[0].mxu0
      %v3174 = vadd.f32 0.0, %v3173
      %v3175 = vpop.f32.mrb[0].mxu0
      %3176 = vmatprep.mubr.f32.mxu0 0.0
      %3177 = vmatmul.mubr.f32.gmra.mrb[0].mxu0 %v2960
      %v3178 = vpop.f32.mrb[0].mxu0
      %v3179 = vadd.f32 0.0, %v3178
      %v3180 = vpop.f32.mrb[0].mxu0
      %3181 = vmatprep.mubr.f32.mxu0 0.0
      %3182 = vmatmul.mubr.f32.gmra.mrb[0].mxu0 %v2963
      %v3183 = vpop.f32.mrb[0].mxu0
      %v3184 = vadd.f32 0.0, %v3183
      %v3185 = vpop.f32.mrb[0].mxu0
      %3186 = vmatprep.mubr.f32.mxu0 0.0
      %3187 = vmatmul.mubr.f32.gmra.mrb[0].mxu0 %v2966
      %v3188 = vpop.f32.mrb[0].mxu0
      %v3189 = vadd.f32 0.0, %v3188
      %v3190 = vpop.f32.mrb[0].mxu0
      %3191 = vmatprep.mubr.f32.mxu0 0.0
      %3192 = vmatmul.mubr.f32.gmra.mrb[0].mxu0 %v2969
      %v3193 = vpop.f32.mrb[0].mxu0
      %v3194 = vadd.f32 0.0, %v3193
      %v3195 = vpop.f32.mrb[0].mxu0
      %3196 = vmatprep.mubr.f32.mxu0 0.0
      %3197 = vmatmul.mubr.f32.gmra.mrb[0].mxu0 %v2972
      %v3198 = vpop.f32.mrb[0].mxu0
      %v3199 = vadd.f32 0.0, %v3198
      %v3200 = vpop.f32.mrb[0].mxu0
      %3201 = vdwg.mxu0
      %v3202 = vadd.f32 %v2811, %v3044
      %v3203 = vadd.f32 %v2812, %v3049
      %v3204 = vadd.f32 %v2813, %v3054
      %v3205 = vadd.f32 %v2814, %v3059
      %v3206 = vadd.f32 %v2815, %v3064
      %v3207 = vadd.f32 %v2816, %v3069
      %v3208 = vadd.f32 %v2817, %v3074
      %v3209 = vadd.f32 %v2818, %v3079
      %v3210 = vadd.f32 %v2819, %v3084
      %v3211 = vadd.f32 %v2820, %v3089
      %v3212 = vadd.f32 %v2821, %v3094
      %v3213 = vadd.f32 %v2822, %v3099
      %v3214 = vadd.f32 %v2823, %v3104
      %v3215 = vadd.f32 %v2824, %v3109
      %v3216 = vadd.f32 %v2825, %v3114
      %v3217 = vadd.f32 %v2826, %v3119
      %v3218 = vadd.f32 %v2827, %v3124
      %v3219 = vadd.f32 %v2828, %v3129
      %v3220 = vadd.f32 %v2829, %v3134
      %v3221 = vadd.f32 %v2830, %v3139
      %v3222 = vadd.f32 %v2831, %v3144
      %v3223 = vadd.f32 %v2832, %v3149
      %v3224 = vadd.f32 %v2833, %v3154
      %v3225 = vadd.f32 %v2834, %v3159
      %v3226 = vadd.f32 %v2835, %v3164
      %v3227 = vadd.f32 %v2836, %v3169
      %v3228 = vadd.f32 %v2837, %v3174
      %v3229 = vadd.f32 %v2838, %v3179
      %v3230 = vadd.f32 %v2839, %v3184
      %v3231 = vadd.f32 %v2840, %v3189
      %v3232 = vadd.f32 %v2841, %v3194
      %v3233 = vadd.f32 %v2842, %v3199
      %v3234 = vld [vmem:[#allocation2 + $0x70] sm:$0xff]
      %v3235 = vld [vmem:[#allocation2 + $0x78] sm:$0xff]
      %v3236 = vld [vmem:[#allocation2 + $0x80] sm:$0xff]
      %v3237 = vld [vmem:[#allocation2 + $0x88] sm:$0xff]
      %v3238 = vld [vmem:[#allocation2 + $0x90] sm:$0xff]
      %v3239 = vld [vmem:[#allocation2 + $0x98] sm:$0xff]
      %v3240 = vld [vmem:[#allocation2 + $0xa0] sm:$0xff]
      %v3241 = vld [vmem:[#allocation2 + $0xa8] sm:$0xff]
      %v3242 = vld [vmem:[#allocation2 + $0xb0] sm:$0xff]
      %v3243 = vld [vmem:[#allocation2 + $0xb8] sm:$0xff]
      %v3244 = vld [vmem:[#allocation2 + $0xc0] sm:$0xff]
      %v3245 = vld [vmem:[#allocation2 + $0xc8] sm:$0xff]
      %v3246 = vld [vmem:[#allocation2 + $0xd0] sm:$0xff]
      %v3247 = vld [vmem:[#allocation2 + $0xd8] sm:$0xff]
      %v3248 = vld [vmem:[#allocation2 + $0xe0] sm:$0xff]
      %v3249 = vld [vmem:[#allocation2 + $0xe8] sm:$0xff]
      %v3250 = vld [vmem:[#allocation2 + $0xf0] sm:$0xff]
      %v3251 = vld [vmem:[#allocation2 + $0xf8] sm:$0xff]
      %v3252 = vld [vmem:[#allocation2 + $0x100] sm:$0xff]
      %v3253 = vld [vmem:[#allocation2 + $0x108] sm:$0xff]
      %v3254 = vld [vmem:[#allocation2 + $0x110] sm:$0xff]
      %v3255 = vld [vmem:[#allocation2 + $0x118] sm:$0xff]
      %v3256 = vld [vmem:[#allocation2 + $0x120] sm:$0xff]
      %v3257 = vld [vmem:[#allocation2 + $0x128] sm:$0xff]
      %v3258 = vld [vmem:[#allocation2 + $0x130] sm:$0xff]
      %v3259 = vld [vmem:[#allocation2 + $0x138] sm:$0xff]
      %v3260 = vld [vmem:[#allocation2 + $0x140] sm:$0xff]
      %v3261 = vld [vmem:[#allocation2 + $0x148] sm:$0xff]
      %v3262 = vld [vmem:[#allocation2 + $0x150] sm:$0xff]
      %v3263 = vld [vmem:[#allocation2 + $0x158] sm:$0xff]
      %v3264 = vld [vmem:[#allocation2 + $0x160] sm:$0xff]
      %v3265 = vld [vmem:[#allocation2 + $0x168] sm:$0xff]
      %s3266 = scalar_lea.vmem %s3, 112
      %v3267 = vld [vmem:[%s3266] sm:$0xff]
      %v3268 = vld [vmem:[%s3266 + $0x8] sm:$0xf]
      %v3270 = vsel %vm665, %v3234, 0
      %v3273 = vsel %vm665, %v3235, 0
      %v3276 = vsel %vm665, %v3236, 0
      %v3279 = vsel %vm665, %v3237, 0
      %v3282 = vsel %vm665, %v3238, 0
      %v3285 = vsel %vm665, %v3239, 0
      %v3288 = vsel %vm665, %v3240, 0
      %v3291 = vsel %vm665, %v3241, 0
      %v3294 = vsel %vm665, %v3242, 0
      %v3297 = vsel %vm665, %v3243, 0
      %v3300 = vsel %vm665, %v3244, 0
      %v3303 = vsel %vm665, %v3245, 0
      %v3306 = vsel %vm665, %v3246, 0
      %v3309 = vsel %vm665, %v3247, 0
      %v3312 = vsel %vm665, %v3248, 0
      %v3315 = vsel %vm665, %v3249, 0
      %v3318 = vsel %vm665, %v3250, 0
      %v3321 = vsel %vm665, %v3251, 0
      %v3324 = vsel %vm665, %v3252, 0
      %v3327 = vsel %vm665, %v3253, 0
      %v3330 = vsel %vm665, %v3254, 0
      %v3333 = vsel %vm665, %v3255, 0
      %v3336 = vsel %vm665, %v3256, 0
      %v3339 = vsel %vm665, %v3257, 0
      %v3342 = vsel %vm665, %v3258, 0
      %v3345 = vsel %vm665, %v3259, 0
      %v3348 = vsel %vm665, %v3260, 0
      %v3351 = vsel %vm665, %v3261, 0
      %v3354 = vsel %vm665, %v3262, 0
      %v3357 = vsel %vm665, %v3263, 0
      %v3360 = vsel %vm665, %v3264, 0
      %v3363 = vsel %vm665, %v3265, 0
      %v3366 = vsel %vm336, %v3268, 0
      %3368 = vmatprep.subr.mxu0 0.0
      %3369 = vmatpush1.msra.mxu0 %v3267
      %3370 = vmatprep.subr.mxu0 0.0
      %3371 = vmatpush1.msra.mxu0 %v3366
      %3372 = vmatprep.subr.mxu0 0.0
      %3373 = vmatpush1.msra.mxu0 0.0
      %3374 = vmatprep.subr.mxu0 0.0
      %3375 = vmatpush1.msra.mxu0 0.0
      %3376 = vmatprep.subr.mxu0 0.0
      %3377 = vmatpush1.msra.mxu0 0.0
      %3378 = vmatprep.subr.mxu0 0.0
      %3379 = vmatpush1.msra.mxu0 0.0
      %3380 = vmatprep.subr.mxu0 0.0
      %3381 = vmatpush1.msra.mxu0 0.0
      %3382 = vmatprep.subr.mxu0 0.0
      %3383 = vmatpush1.msra.mxu0 0.0
      %3384 = vmatprep.subr.mxu0 0.0
      %3385 = vmatpush1.msra.mxu0 0.0
      %3386 = vmatprep.subr.mxu0 0.0
      %3387 = vmatpush1.msra.mxu0 0.0
      %3388 = vmatprep.subr.mxu0 0.0
      %3389 = vmatpush1.msra.mxu0 0.0
      %3390 = vmatprep.subr.mxu0 0.0
      %3391 = vmatpush1.msra.mxu0 0.0
      %3392 = vmatprep.subr.mxu0 0.0
      %3393 = vmatpush1.msra.mxu0 0.0
      %3394 = vmatprep.subr.mxu0 0.0
      %3395 = vmatpush1.msra.mxu0 0.0
      %3396 = vmatprep.subr.mxu0 0.0
      %3397 = vmatpush1.msra.mxu0 0.0
      %3398 = vmatprep.subr.mxu0 0.0
      %3399 = vmatpush1.msra.mxu0 0.0
      %3400 = vmatprep.subr.mxu0 0.0
      %3401 = vmatpush1.msra.mxu0 0.0
      %3402 = vmatprep.subr.mxu0 0.0
      %3403 = vmatpush1.msra.mxu0 0.0
      %3404 = vmatprep.subr.mxu0 0.0
      %3405 = vmatpush1.msra.mxu0 0.0
      %3406 = vmatprep.subr.mxu0 0.0
      %3407 = vmatpush1.msra.mxu0 0.0
      %3408 = vmatprep.subr.mxu0 0.0
      %3409 = vmatpush1.msra.mxu0 0.0
      %3410 = vmatprep.subr.mxu0 0.0
      %3411 = vmatpush1.msra.mxu0 0.0
      %3412 = vmatprep.subr.mxu0 0.0
      %3413 = vmatpush1.msra.mxu0 0.0
      %3414 = vmatprep.subr.mxu0 0.0
      %3415 = vmatpush1.msra.mxu0 0.0
      %3416 = vmatprep.subr.mxu0 0.0
      %3417 = vmatpush1.msra.mxu0 0.0
      %3418 = vmatprep.subr.mxu0 0.0
      %3419 = vmatpush1.msra.mxu0 0.0
      %3420 = vmatprep.subr.mxu0 0.0
      %3421 = vmatpush1.msra.mxu0 0.0
      %3422 = vmatprep.subr.mxu0 0.0
      %3423 = vmatpush1.msra.mxu0 0.0
      %3424 = vmatprep.subr.mxu0 0.0
      %3425 = vmatpush1.msra.mxu0 0.0
      %3426 = vmatprep.subr.mxu0 0.0
      %3427 = vmatpush1.msra.mxu0 0.0
      %3428 = vmatprep.subr.mxu0 0.0
      %3429 = vmatpush1.msra.mxu0 0.0
      %3430 = vmatprep.subr.mxu0 0.0
      %3431 = vmatpush1.msra.mxu0 0.0
      %3432 = vmatprep.mubr.f32.mxu0 0.0
      %3433 = vmatmul.mubr.f32.gmra.mrb[0].mxu0 %v3270
      %v3434 = vpop.f32.mrb[0].mxu0
      %v3435 = vadd.f32 0.0, %v3434
      %v3436 = vpop.f32.mrb[0].mxu0
      %3437 = vmatprep.mubr.f32.mxu0 0.0
      %3438 = vmatmul.mubr.f32.gmra.mrb[0].mxu0 %v3273
      %v3439 = vpop.f32.mrb[0].mxu0
      %v3440 = vadd.f32 0.0, %v3439
      %v3441 = vpop.f32.mrb[0].mxu0
      %3442 = vmatprep.mubr.f32.mxu0 0.0
      %3443 = vmatmul.mubr.f32.gmra.mrb[0].mxu0 %v3276
      %v3444 = vpop.f32.mrb[0].mxu0
      %v3445 = vadd.f32 0.0, %v3444
      %v3446 = vpop.f32.mrb[0].mxu0
      %3447 = vmatprep.mubr.f32.mxu0 0.0
      %3448 = vmatmul.mubr.f32.gmra.mrb[0].mxu0 %v3279
      %v3449 = vpop.f32.mrb[0].mxu0
      %v3450 = vadd.f32 0.0, %v3449
      %v3451 = vpop.f32.mrb[0].mxu0
      %3452 = vmatprep.mubr.f32.mxu0 0.0
      %3453 = vmatmul.mubr.f32.gmra.mrb[0].mxu0 %v3282
      %v3454 = vpop.f32.mrb[0].mxu0
      %v3455 = vadd.f32 0.0, %v3454
      %v3456 = vpop.f32.mrb[0].mxu0
      %3457 = vmatprep.mubr.f32.mxu0 0.0
      %3458 = vmatmul.mubr.f32.gmra.mrb[0].mxu0 %v3285
      %v3459 = vpop.f32.mrb[0].mxu0
      %v3460 = vadd.f32 0.0, %v3459
      %v3461 = vpop.f32.mrb[0].mxu0
      %3462 = vmatprep.mubr.f32.mxu0 0.0
      %3463 = vmatmul.mubr.f32.gmra.mrb[0].mxu0 %v3288
      %v3464 = vpop.f32.mrb[0].mxu0
      %v3465 = vadd.f32 0.0, %v3464
      %v3466 = vpop.f32.mrb[0].mxu0
      %3467 = vmatprep.mubr.f32.mxu0 0.0
      %3468 = vmatmul.mubr.f32.gmra.mrb[0].mxu0 %v3291
      %v3469 = vpop.f32.mrb[0].mxu0
      %v3470 = vadd.f32 0.0, %v3469
      %v3471 = vpop.f32.mrb[0].mxu0
      %3472 = vmatprep.mubr.f32.mxu0 0.0
      %3473 = vmatmul.mubr.f32.gmra.mrb[0].mxu0 %v3294
      %v3474 = vpop.f32.mrb[0].mxu0
      %v3475 = vadd.f32 0.0, %v3474
      %v3476 = vpop.f32.mrb[0].mxu0
      %3477 = vmatprep.mubr.f32.mxu0 0.0
      %3478 = vmatmul.mubr.f32.gmra.mrb[0].mxu0 %v3297
      %v3479 = vpop.f32.mrb[0].mxu0
      %v3480 = vadd.f32 0.0, %v3479
      %v3481 = vpop.f32.mrb[0].mxu0
      %3482 = vmatprep.mubr.f32.mxu0 0.0
      %3483 = vmatmul.mubr.f32.gmra.mrb[0].mxu0 %v3300
      %v3484 = vpop.f32.mrb[0].mxu0
      %v3485 = vadd.f32 0.0, %v3484
      %v3486 = vpop.f32.mrb[0].mxu0
      %3487 = vmatprep.mubr.f32.mxu0 0.0
      %3488 = vmatmul.mubr.f32.gmra.mrb[0].mxu0 %v3303
      %v3489 = vpop.f32.mrb[0].mxu0
      %v3490 = vadd.f32 0.0, %v3489
      %v3491 = vpop.f32.mrb[0].mxu0
      %3492 = vmatprep.mubr.f32.mxu0 0.0
      %3493 = vmatmul.mubr.f32.gmra.mrb[0].mxu0 %v3306
      %v3494 = vpop.f32.mrb[0].mxu0
      %v3495 = vadd.f32 0.0, %v3494
      %v3496 = vpop.f32.mrb[0].mxu0
      %3497 = vmatprep.mubr.f32.mxu0 0.0
      %3498 = vmatmul.mubr.f32.gmra.mrb[0].mxu0 %v3309
      %v3499 = vpop.f32.mrb[0].mxu0
      %v3500 = vadd.f32 0.0, %v3499
      %v3501 = vpop.f32.mrb[0].mxu0
      %3502 = vmatprep.mubr.f32.mxu0 0.0
      %3503 = vmatmul.mubr.f32.gmra.mrb[0].mxu0 %v3312
      %v3504 = vpop.f32.mrb[0].mxu0
      %v3505 = vadd.f32 0.0, %v3504
      %v3506 = vpop.f32.mrb[0].mxu0
      %3507 = vmatprep.mubr.f32.mxu0 0.0
      %3508 = vmatmul.mubr.f32.gmra.mrb[0].mxu0 %v3315
      %v3509 = vpop.f32.mrb[0].mxu0
      %v3510 = vadd.f32 0.0, %v3509
      %v3511 = vpop.f32.mrb[0].mxu0
      %3512 = vmatprep.mubr.f32.mxu0 0.0
      %3513 = vmatmul.mubr.f32.gmra.mrb[0].mxu0 %v3318
      %v3514 = vpop.f32.mrb[0].mxu0
      %v3515 = vadd.f32 0.0, %v3514
      %v3516 = vpop.f32.mrb[0].mxu0
      %3517 = vmatprep.mubr.f32.mxu0 0.0
      %3518 = vmatmul.mubr.f32.gmra.mrb[0].mxu0 %v3321
      %v3519 = vpop.f32.mrb[0].mxu0
      %v3520 = vadd.f32 0.0, %v3519
      %v3521 = vpop.f32.mrb[0].mxu0
      %3522 = vmatprep.mubr.f32.mxu0 0.0
      %3523 = vmatmul.mubr.f32.gmra.mrb[0].mxu0 %v3324
      %v3524 = vpop.f32.mrb[0].mxu0
      %v3525 = vadd.f32 0.0, %v3524
      %v3526 = vpop.f32.mrb[0].mxu0
      %3527 = vmatprep.mubr.f32.mxu0 0.0
      %3528 = vmatmul.mubr.f32.gmra.mrb[0].mxu0 %v3327
      %v3529 = vpop.f32.mrb[0].mxu0
      %v3530 = vadd.f32 0.0, %v3529
      %v3531 = vpop.f32.mrb[0].mxu0
      %3532 = vmatprep.mubr.f32.mxu0 0.0
      %3533 = vmatmul.mubr.f32.gmra.mrb[0].mxu0 %v3330
      %v3534 = vpop.f32.mrb[0].mxu0
      %v3535 = vadd.f32 0.0, %v3534
      %v3536 = vpop.f32.mrb[0].mxu0
      %3537 = vmatprep.mubr.f32.mxu0 0.0
      %3538 = vmatmul.mubr.f32.gmra.mrb[0].mxu0 %v3333
      %v3539 = vpop.f32.mrb[0].mxu0
      %v3540 = vadd.f32 0.0, %v3539
      %v3541 = vpop.f32.mrb[0].mxu0
      %3542 = vmatprep.mubr.f32.mxu0 0.0
      %3543 = vmatmul.mubr.f32.gmra.mrb[0].mxu0 %v3336
      %v3544 = vpop.f32.mrb[0].mxu0
      %v3545 = vadd.f32 0.0, %v3544
      %v3546 = vpop.f32.mrb[0].mxu0
      %3547 = vmatprep.mubr.f32.mxu0 0.0
      %3548 = vmatmul.mubr.f32.gmra.mrb[0].mxu0 %v3339
      %v3549 = vpop.f32.mrb[0].mxu0
      %v3550 = vadd.f32 0.0, %v3549
      %v3551 = vpop.f32.mrb[0].mxu0
      %3552 = vmatprep.mubr.f32.mxu0 0.0
      %3553 = vmatmul.mubr.f32.gmra.mrb[0].mxu0 %v3342
      %v3554 = vpop.f32.mrb[0].mxu0
      %v3555 = vadd.f32 0.0, %v3554
      %v3556 = vpop.f32.mrb[0].mxu0
      %3557 = vmatprep.mubr.f32.mxu0 0.0
      %3558 = vmatmul.mubr.f32.gmra.mrb[0].mxu0 %v3345
      %v3559 = vpop.f32.mrb[0].mxu0
      %v3560 = vadd.f32 0.0, %v3559
      %v3561 = vpop.f32.mrb[0].mxu0
      %3562 = vmatprep.mubr.f32.mxu0 0.0
      %3563 = vmatmul.mubr.f32.gmra.mrb[0].mxu0 %v3348
      %v3564 = vpop.f32.mrb[0].mxu0
      %v3565 = vadd.f32 0.0, %v3564
      %v3566 = vpop.f32.mrb[0].mxu0
      %3567 = vmatprep.mubr.f32.mxu0 0.0
      %3568 = vmatmul.mubr.f32.gmra.mrb[0].mxu0 %v3351
      %v3569 = vpop.f32.mrb[0].mxu0
      %v3570 = vadd.f32 0.0, %v3569
      %v3571 = vpop.f32.mrb[0].mxu0
      %3572 = vmatprep.mubr.f32.mxu0 0.0
      %3573 = vmatmul.mubr.f32.gmra.mrb[0].mxu0 %v3354
      %v3574 = vpop.f32.mrb[0].mxu0
      %v3575 = vadd.f32 0.0, %v3574
      %v3576 = vpop.f32.mrb[0].mxu0
      %3577 = vmatprep.mubr.f32.mxu0 0.0
      %3578 = vmatmul.mubr.f32.gmra.mrb[0].mxu0 %v3357
      %v3579 = vpop.f32.mrb[0].mxu0
      %v3580 = vadd.f32 0.0, %v3579
      %v3581 = vpop.f32.mrb[0].mxu0
      %3582 = vmatprep.mubr.f32.mxu0 0.0
      %3583 = vmatmul.mubr.f32.gmra.mrb[0].mxu0 %v3360
      %v3584 = vpop.f32.mrb[0].mxu0
      %v3585 = vadd.f32 0.0, %v3584
      %v3586 = vpop.f32.mrb[0].mxu0
      %3587 = vmatprep.mubr.f32.mxu0 0.0
      %3588 = vmatmul.mubr.f32.gmra.mrb[0].mxu0 %v3363
      %v3589 = vpop.f32.mrb[0].mxu0
      %v3590 = vadd.f32 0.0, %v3589
      %v3591 = vpop.f32.mrb[0].mxu0
      %3592 = vdwg.mxu0
      %v3593 = vadd.f32 %v3202, %v3435
      %v3594 = vadd.f32 %v3203, %v3440
      %v3595 = vadd.f32 %v3204, %v3445
      %v3596 = vadd.f32 %v3205, %v3450
      %v3597 = vadd.f32 %v3206, %v3455
      %v3598 = vadd.f32 %v3207, %v3460
      %v3599 = vadd.f32 %v3208, %v3465
      %v3600 = vadd.f32 %v3209, %v3470
      %v3601 = vadd.f32 %v3210, %v3475
      %v3602 = vadd.f32 %v3211, %v3480
      %v3603 = vadd.f32 %v3212, %v3485
      %v3604 = vadd.f32 %v3213, %v3490
      %v3605 = vadd.f32 %v3214, %v3495
      %v3606 = vadd.f32 %v3215, %v3500
      %v3607 = vadd.f32 %v3216, %v3505
      %v3608 = vadd.f32 %v3217, %v3510
      %v3609 = vadd.f32 %v3218, %v3515
      %v3610 = vadd.f32 %v3219, %v3520
      %v3611 = vadd.f32 %v3220, %v3525
      %v3612 = vadd.f32 %v3221, %v3530
      %v3613 = vadd.f32 %v3222, %v3535
      %v3614 = vadd.f32 %v3223, %v3540
      %v3615 = vadd.f32 %v3224, %v3545
      %v3616 = vadd.f32 %v3225, %v3550
      %v3617 = vadd.f32 %v3226, %v3555
      %v3618 = vadd.f32 %v3227, %v3560
      %v3619 = vadd.f32 %v3228, %v3565
      %v3620 = vadd.f32 %v3229, %v3570
      %v3621 = vadd.f32 %v3230, %v3575
      %v3622 = vadd.f32 %v3231, %v3580
      %v3623 = vadd.f32 %v3232, %v3585
      %v3624 = vadd.f32 %v3233, %v3590
      %v3625 = vld [vmem:[#allocation2 + $0x80] sm:$0xff]
      %v3626 = vld [vmem:[#allocation2 + $0x88] sm:$0xff]
      %v3627 = vld [vmem:[#allocation2 + $0x90] sm:$0xff]
      %v3628 = vld [vmem:[#allocation2 + $0x98] sm:$0xff]
      %v3629 = vld [vmem:[#allocation2 + $0xa0] sm:$0xff]
      %v3630 = vld [vmem:[#allocation2 + $0xa8] sm:$0xff]
      %v3631 = vld [vmem:[#allocation2 + $0xb0] sm:$0xff]
      %v3632 = vld [vmem:[#allocation2 + $0xb8] sm:$0xff]
      %v3633 = vld [vmem:[#allocation2 + $0xc0] sm:$0xff]
      %v3634 = vld [vmem:[#allocation2 + $0xc8] sm:$0xff]
      %v3635 = vld [vmem:[#allocation2 + $0xd0] sm:$0xff]
      %v3636 = vld [vmem:[#allocation2 + $0xd8] sm:$0xff]
      %v3637 = vld [vmem:[#allocation2 + $0xe0] sm:$0xff]
      %v3638 = vld [vmem:[#allocation2 + $0xe8] sm:$0xff]
      %v3639 = vld [vmem:[#allocation2 + $0xf0] sm:$0xff]
      %v3640 = vld [vmem:[#allocation2 + $0xf8] sm:$0xff]
      %v3641 = vld [vmem:[#allocation2 + $0x100] sm:$0xff]
      %v3642 = vld [vmem:[#allocation2 + $0x108] sm:$0xff]
      %v3643 = vld [vmem:[#allocation2 + $0x110] sm:$0xff]
      %v3644 = vld [vmem:[#allocation2 + $0x118] sm:$0xff]
      %v3645 = vld [vmem:[#allocation2 + $0x120] sm:$0xff]
      %v3646 = vld [vmem:[#allocation2 + $0x128] sm:$0xff]
      %v3647 = vld [vmem:[#allocation2 + $0x130] sm:$0xff]
      %v3648 = vld [vmem:[#allocation2 + $0x138] sm:$0xff]
      %v3649 = vld [vmem:[#allocation2 + $0x140] sm:$0xff]
      %v3650 = vld [vmem:[#allocation2 + $0x148] sm:$0xff]
      %v3651 = vld [vmem:[#allocation2 + $0x150] sm:$0xff]
      %v3652 = vld [vmem:[#allocation2 + $0x158] sm:$0xff]
      %v3653 = vld [vmem:[#allocation2 + $0x160] sm:$0xff]
      %v3654 = vld [vmem:[#allocation2 + $0x168] sm:$0xff]
      %v3655 = vld [vmem:[#allocation2 + $0x170] sm:$0xff]
      %v3656 = vld [vmem:[#allocation2 + $0x178] sm:$0xff]
      %s3657 = scalar_lea.vmem %s3, 128
      %v3658 = vld [vmem:[%s3657] sm:$0xff]
      %v3659 = vld [vmem:[%s3657 + $0x8] sm:$0xf]
      %v3661 = vsel %vm665, %v3625, 0
      %v3664 = vsel %vm665, %v3626, 0
      %v3667 = vsel %vm665, %v3627, 0
      %v3670 = vsel %vm665, %v3628, 0
      %v3673 = vsel %vm665, %v3629, 0
      %v3676 = vsel %vm665, %v3630, 0
      %v3679 = vsel %vm665, %v3631, 0
      %v3682 = vsel %vm665, %v3632, 0
      %v3685 = vsel %vm665, %v3633, 0
      %v3688 = vsel %vm665, %v3634, 0
      %v3691 = vsel %vm665, %v3635, 0
      %v3694 = vsel %vm665, %v3636, 0
      %v3697 = vsel %vm665, %v3637, 0
      %v3700 = vsel %vm665, %v3638, 0
      %v3703 = vsel %vm665, %v3639, 0
      %v3706 = vsel %vm665, %v3640, 0
      %v3709 = vsel %vm665, %v3641, 0
      %v3712 = vsel %vm665, %v3642, 0
      %v3715 = vsel %vm665, %v3643, 0
      %v3718 = vsel %vm665, %v3644, 0
      %v3721 = vsel %vm665, %v3645, 0
      %v3724 = vsel %vm665, %v3646, 0
      %v3727 = vsel %vm665, %v3647, 0
      %v3730 = vsel %vm665, %v3648, 0
      %v3733 = vsel %vm665, %v3649, 0
      %v3736 = vsel %vm665, %v3650, 0
      %v3739 = vsel %vm665, %v3651, 0
      %v3742 = vsel %vm665, %v3652, 0
      %v3745 = vsel %vm665, %v3653, 0
      %v3748 = vsel %vm665, %v3654, 0
      %v3751 = vsel %vm665, %v3655, 0
      %v3754 = vsel %vm665, %v3656, 0
      %v3757 = vsel %vm336, %v3659, 0
      %3759 = vmatprep.subr.mxu0 0.0
      %3760 = vmatpush1.msra.mxu0 %v3658
      %3761 = vmatprep.subr.mxu0 0.0
      %3762 = vmatpush1.msra.mxu0 %v3757
      %3763 = vmatprep.subr.mxu0 0.0
      %3764 = vmatpush1.msra.mxu0 0.0
      %3765 = vmatprep.subr.mxu0 0.0
      %3766 = vmatpush1.msra.mxu0 0.0
      %3767 = vmatprep.subr.mxu0 0.0
      %3768 = vmatpush1.msra.mxu0 0.0
      %3769 = vmatprep.subr.mxu0 0.0
      %3770 = vmatpush1.msra.mxu0 0.0
      %3771 = vmatprep.subr.mxu0 0.0
      %3772 = vmatpush1.msra.mxu0 0.0
      %3773 = vmatprep.subr.mxu0 0.0
      %3774 = vmatpush1.msra.mxu0 0.0
      %3775 = vmatprep.subr.mxu0 0.0
      %3776 = vmatpush1.msra.mxu0 0.0
      %3777 = vmatprep.subr.mxu0 0.0
      %3778 = vmatpush1.msra.mxu0 0.0
      %3779 = vmatprep.subr.mxu0 0.0
      %3780 = vmatpush1.msra.mxu0 0.0
      %3781 = vmatprep.subr.mxu0 0.0
      %3782 = vmatpush1.msra.mxu0 0.0
      %3783 = vmatprep.subr.mxu0 0.0
      %3784 = vmatpush1.msra.mxu0 0.0
      %3785 = vmatprep.subr.mxu0 0.0
      %3786 = vmatpush1.msra.mxu0 0.0
      %3787 = vmatprep.subr.mxu0 0.0
      %3788 = vmatpush1.msra.mxu0 0.0
      %3789 = vmatprep.subr.mxu0 0.0
      %3790 = vmatpush1.msra.mxu0 0.0
      %3791 = vmatprep.subr.mxu0 0.0
      %3792 = vmatpush1.msra.mxu0 0.0
      %3793 = vmatprep.subr.mxu0 0.0
      %3794 = vmatpush1.msra.mxu0 0.0
      %3795 = vmatprep.subr.mxu0 0.0
      %3796 = vmatpush1.msra.mxu0 0.0
      %3797 = vmatprep.subr.mxu0 0.0
      %3798 = vmatpush1.msra.mxu0 0.0
      %3799 = vmatprep.subr.mxu0 0.0
      %3800 = vmatpush1.msra.mxu0 0.0
      %3801 = vmatprep.subr.mxu0 0.0
      %3802 = vmatpush1.msra.mxu0 0.0
      %3803 = vmatprep.subr.mxu0 0.0
      %3804 = vmatpush1.msra.mxu0 0.0
      %3805 = vmatprep.subr.mxu0 0.0
      %3806 = vmatpush1.msra.mxu0 0.0
      %3807 = vmatprep.subr.mxu0 0.0
      %3808 = vmatpush1.msra.mxu0 0.0
      %3809 = vmatprep.subr.mxu0 0.0
      %3810 = vmatpush1.msra.mxu0 0.0
      %3811 = vmatprep.subr.mxu0 0.0
      %3812 = vmatpush1.msra.mxu0 0.0
      %3813 = vmatprep.subr.mxu0 0.0
      %3814 = vmatpush1.msra.mxu0 0.0
      %3815 = vmatprep.subr.mxu0 0.0
      %3816 = vmatpush1.msra.mxu0 0.0
      %3817 = vmatprep.subr.mxu0 0.0
      %3818 = vmatpush1.msra.mxu0 0.0
      %3819 = vmatprep.subr.mxu0 0.0
      %3820 = vmatpush1.msra.mxu0 0.0
      %3821 = vmatprep.subr.mxu0 0.0
      %3822 = vmatpush1.msra.mxu0 0.0
      %3823 = vmatprep.mubr.f32.mxu0 0.0
      %3824 = vmatmul.mubr.f32.gmra.mrb[0].mxu0 %v3661
      %v3825 = vpop.f32.mrb[0].mxu0
      %v3826 = vadd.f32 0.0, %v3825
      %v3827 = vpop.f32.mrb[0].mxu0
      %3828 = vmatprep.mubr.f32.mxu0 0.0
      %3829 = vmatmul.mubr.f32.gmra.mrb[0].mxu0 %v3664
      %v3830 = vpop.f32.mrb[0].mxu0
      %v3831 = vadd.f32 0.0, %v3830
      %v3832 = vpop.f32.mrb[0].mxu0
      %3833 = vmatprep.mubr.f32.mxu0 0.0
      %3834 = vmatmul.mubr.f32.gmra.mrb[0].mxu0 %v3667
      %v3835 = vpop.f32.mrb[0].mxu0
      %v3836 = vadd.f32 0.0, %v3835
      %v3837 = vpop.f32.mrb[0].mxu0
      %3838 = vmatprep.mubr.f32.mxu0 0.0
      %3839 = vmatmul.mubr.f32.gmra.mrb[0].mxu0 %v3670
      %v3840 = vpop.f32.mrb[0].mxu0
      %v3841 = vadd.f32 0.0, %v3840
      %v3842 = vpop.f32.mrb[0].mxu0
      %3843 = vmatprep.mubr.f32.mxu0 0.0
      %3844 = vmatmul.mubr.f32.gmra.mrb[0].mxu0 %v3673
      %v3845 = vpop.f32.mrb[0].mxu0
      %v3846 = vadd.f32 0.0, %v3845
      %v3847 = vpop.f32.mrb[0].mxu0
      %3848 = vmatprep.mubr.f32.mxu0 0.0
      %3849 = vmatmul.mubr.f32.gmra.mrb[0].mxu0 %v3676
      %v3850 = vpop.f32.mrb[0].mxu0
      %v3851 = vadd.f32 0.0, %v3850
      %v3852 = vpop.f32.mrb[0].mxu0
      %3853 = vmatprep.mubr.f32.mxu0 0.0
      %3854 = vmatmul.mubr.f32.gmra.mrb[0].mxu0 %v3679
      %v3855 = vpop.f32.mrb[0].mxu0
      %v3856 = vadd.f32 0.0, %v3855
      %v3857 = vpop.f32.mrb[0].mxu0
      %3858 = vmatprep.mubr.f32.mxu0 0.0
      %3859 = vmatmul.mubr.f32.gmra.mrb[0].mxu0 %v3682
      %v3860 = vpop.f32.mrb[0].mxu0
      %v3861 = vadd.f32 0.0, %v3860
      %v3862 = vpop.f32.mrb[0].mxu0
      %3863 = vmatprep.mubr.f32.mxu0 0.0
      %3864 = vmatmul.mubr.f32.gmra.mrb[0].mxu0 %v3685
      %v3865 = vpop.f32.mrb[0].mxu0
      %v3866 = vadd.f32 0.0, %v3865
      %v3867 = vpop.f32.mrb[0].mxu0
      %3868 = vmatprep.mubr.f32.mxu0 0.0
      %3869 = vmatmul.mubr.f32.gmra.mrb[0].mxu0 %v3688
      %v3870 = vpop.f32.mrb[0].mxu0
      %v3871 = vadd.f32 0.0, %v3870
      %v3872 = vpop.f32.mrb[0].mxu0
      %3873 = vmatprep.mubr.f32.mxu0 0.0
      %3874 = vmatmul.mubr.f32.gmra.mrb[0].mxu0 %v3691
      %v3875 = vpop.f32.mrb[0].mxu0
      %v3876 = vadd.f32 0.0, %v3875
      %v3877 = vpop.f32.mrb[0].mxu0
      %3878 = vmatprep.mubr.f32.mxu0 0.0
      %3879 = vmatmul.mubr.f32.gmra.mrb[0].mxu0 %v3694
      %v3880 = vpop.f32.mrb[0].mxu0
      %v3881 = vadd.f32 0.0, %v3880
      %v3882 = vpop.f32.mrb[0].mxu0
      %3883 = vmatprep.mubr.f32.mxu0 0.0
      %3884 = vmatmul.mubr.f32.gmra.mrb[0].mxu0 %v3697
      %v3885 = vpop.f32.mrb[0].mxu0
      %v3886 = vadd.f32 0.0, %v3885
      %v3887 = vpop.f32.mrb[0].mxu0
      %3888 = vmatprep.mubr.f32.mxu0 0.0
      %3889 = vmatmul.mubr.f32.gmra.mrb[0].mxu0 %v3700
      %v3890 = vpop.f32.mrb[0].mxu0
      %v3891 = vadd.f32 0.0, %v3890
      %v3892 = vpop.f32.mrb[0].mxu0
      %3893 = vmatprep.mubr.f32.mxu0 0.0
      %3894 = vmatmul.mubr.f32.gmra.mrb[0].mxu0 %v3703
      %v3895 = vpop.f32.mrb[0].mxu0
      %v3896 = vadd.f32 0.0, %v3895
      %v3897 = vpop.f32.mrb[0].mxu0
      %3898 = vmatprep.mubr.f32.mxu0 0.0
      %3899 = vmatmul.mubr.f32.gmra.mrb[0].mxu0 %v3706
      %v3900 = vpop.f32.mrb[0].mxu0
      %v3901 = vadd.f32 0.0, %v3900
      %v3902 = vpop.f32.mrb[0].mxu0
      %3903 = vmatprep.mubr.f32.mxu0 0.0
      %3904 = vmatmul.mubr.f32.gmra.mrb[0].mxu0 %v3709
      %v3905 = vpop.f32.mrb[0].mxu0
      %v3906 = vadd.f32 0.0, %v3905
      %v3907 = vpop.f32.mrb[0].mxu0
      %3908 = vmatprep.mubr.f32.mxu0 0.0
      %3909 = vmatmul.mubr.f32.gmra.mrb[0].mxu0 %v3712
      %v3910 = vpop.f32.mrb[0].mxu0
      %v3911 = vadd.f32 0.0, %v3910
      %v3912 = vpop.f32.mrb[0].mxu0
      %3913 = vmatprep.mubr.f32.mxu0 0.0
      %3914 = vmatmul.mubr.f32.gmra.mrb[0].mxu0 %v3715
      %v3915 = vpop.f32.mrb[0].mxu0
      %v3916 = vadd.f32 0.0, %v3915
      %v3917 = vpop.f32.mrb[0].mxu0
      %3918 = vmatprep.mubr.f32.mxu0 0.0
      %3919 = vmatmul.mubr.f32.gmra.mrb[0].mxu0 %v3718
      %v3920 = vpop.f32.mrb[0].mxu0
      %v3921 = vadd.f32 0.0, %v3920
      %v3922 = vpop.f32.mrb[0].mxu0
      %3923 = vmatprep.mubr.f32.mxu0 0.0
      %3924 = vmatmul.mubr.f32.gmra.mrb[0].mxu0 %v3721
      %v3925 = vpop.f32.mrb[0].mxu0
      %v3926 = vadd.f32 0.0, %v3925
      %v3927 = vpop.f32.mrb[0].mxu0
      %3928 = vmatprep.mubr.f32.mxu0 0.0
      %3929 = vmatmul.mubr.f32.gmra.mrb[0].mxu0 %v3724
      %v3930 = vpop.f32.mrb[0].mxu0
      %v3931 = vadd.f32 0.0, %v3930
      %v3932 = vpop.f32.mrb[0].mxu0
      %3933 = vmatprep.mubr.f32.mxu0 0.0
      %3934 = vmatmul.mubr.f32.gmra.mrb[0].mxu0 %v3727
      %v3935 = vpop.f32.mrb[0].mxu0
      %v3936 = vadd.f32 0.0, %v3935
      %v3937 = vpop.f32.mrb[0].mxu0
      %3938 = vmatprep.mubr.f32.mxu0 0.0
      %3939 = vmatmul.mubr.f32.gmra.mrb[0].mxu0 %v3730
      %v3940 = vpop.f32.mrb[0].mxu0
      %v3941 = vadd.f32 0.0, %v3940
      %v3942 = vpop.f32.mrb[0].mxu0
      %3943 = vmatprep.mubr.f32.mxu0 0.0
      %3944 = vmatmul.mubr.f32.gmra.mrb[0].mxu0 %v3733
      %v3945 = vpop.f32.mrb[0].mxu0
      %v3946 = vadd.f32 0.0, %v3945
      %v3947 = vpop.f32.mrb[0].mxu0
      %3948 = vmatprep.mubr.f32.mxu0 0.0
      %3949 = vmatmul.mubr.f32.gmra.mrb[0].mxu0 %v3736
      %v3950 = vpop.f32.mrb[0].mxu0
      %v3951 = vadd.f32 0.0, %v3950
      %v3952 = vpop.f32.mrb[0].mxu0
      %3953 = vmatprep.mubr.f32.mxu0 0.0
      %3954 = vmatmul.mubr.f32.gmra.mrb[0].mxu0 %v3739
      %v3955 = vpop.f32.mrb[0].mxu0
      %v3956 = vadd.f32 0.0, %v3955
      %v3957 = vpop.f32.mrb[0].mxu0
      %3958 = vmatprep.mubr.f32.mxu0 0.0
      %3959 = vmatmul.mubr.f32.gmra.mrb[0].mxu0 %v3742
      %v3960 = vpop.f32.mrb[0].mxu0
      %v3961 = vadd.f32 0.0, %v3960
      %v3962 = vpop.f32.mrb[0].mxu0
      %3963 = vmatprep.mubr.f32.mxu0 0.0
      %3964 = vmatmul.mubr.f32.gmra.mrb[0].mxu0 %v3745
      %v3965 = vpop.f32.mrb[0].mxu0
      %v3966 = vadd.f32 0.0, %v3965
      %v3967 = vpop.f32.mrb[0].mxu0
      %3968 = vmatprep.mubr.f32.mxu0 0.0
      %3969 = vmatmul.mubr.f32.gmra.mrb[0].mxu0 %v3748
      %v3970 = vpop.f32.mrb[0].mxu0
      %v3971 = vadd.f32 0.0, %v3970
      %v3972 = vpop.f32.mrb[0].mxu0
      %3973 = vmatprep.mubr.f32.mxu0 0.0
      %3974 = vmatmul.mubr.f32.gmra.mrb[0].mxu0 %v3751
      %v3975 = vpop.f32.mrb[0].mxu0
      %v3976 = vadd.f32 0.0, %v3975
      %v3977 = vpop.f32.mrb[0].mxu0
      %3978 = vmatprep.mubr.f32.mxu0 0.0
      %3979 = vmatmul.mubr.f32.gmra.mrb[0].mxu0 %v3754
      %v3980 = vpop.f32.mrb[0].mxu0
      %v3981 = vadd.f32 0.0, %v3980
      %v3982 = vpop.f32.mrb[0].mxu0
      %3983 = vdwg.mxu0
      %v3984 = vadd.f32 %v3593, %v3826
      %v3985 = vadd.f32 %v3594, %v3831
      %v3986 = vadd.f32 %v3595, %v3836
      %v3987 = vadd.f32 %v3596, %v3841
      %v3988 = vadd.f32 %v3597, %v3846
      %v3989 = vadd.f32 %v3598, %v3851
      %v3990 = vadd.f32 %v3599, %v3856
      %v3991 = vadd.f32 %v3600, %v3861
      %v3992 = vadd.f32 %v3601, %v3866
      %v3993 = vadd.f32 %v3602, %v3871
      %v3994 = vadd.f32 %v3603, %v3876
      %v3995 = vadd.f32 %v3604, %v3881
      %v3996 = vadd.f32 %v3605, %v3886
      %v3997 = vadd.f32 %v3606, %v3891
      %v3998 = vadd.f32 %v3607, %v3896
      %v3999 = vadd.f32 %v3608, %v3901
      %v4000 = vadd.f32 %v3609, %v3906
      %v4001 = vadd.f32 %v3610, %v3911
      %v4002 = vadd.f32 %v3611, %v3916
      %v4003 = vadd.f32 %v3612, %v3921
      %v4004 = vadd.f32 %v3613, %v3926
      %v4005 = vadd.f32 %v3614, %v3931
      %v4006 = vadd.f32 %v3615, %v3936
      %v4007 = vadd.f32 %v3616, %v3941
      %v4008 = vadd.f32 %v3617, %v3946
      %v4009 = vadd.f32 %v3618, %v3951
      %v4010 = vadd.f32 %v3619, %v3956
      %v4011 = vadd.f32 %v3620, %v3961
      %v4012 = vadd.f32 %v3621, %v3966
      %v4013 = vadd.f32 %v3622, %v3971
      %v4014 = vadd.f32 %v3623, %v3976
      %v4015 = vadd.f32 %v3624, %v3981
      %v4016 = vmax.f32 %v1702, %v633
      %v4017 = vmax.f32 %v1703, %v634
      %v4018 = vmax.f32 %v1704, %v635
      %v4019 = vmax.f32 %v1705, %v636
      %v4020 = vmax.f32 %v1706, %v637
      %v4021 = vmax.f32 %v1707, %v638
      %v4022 = vmax.f32 %v1708, %v639
      %v4023 = vmax.f32 %v1709, %v640
      %v4024 = vmax.f32 %v1710, %v641
      %v4025 = vmax.f32 %v1711, %v642
      %v4026 = vmax.f32 %v1712, %v643
      %v4027 = vmax.f32 %v1713, %v644
      %v4028 = vmax.f32 %v1714, %v645
      %v4029 = vmax.f32 %v1715, %v646
      %v4030 = vmax.f32 %v1716, %v647
      %v4031 = vmax.f32 %v1717, %v648
      %v4032 = vmax.f32 %v1718, %v649
      %v4033 = vmax.f32 %v1719, %v650
      %v4034 = vmax.f32 %v1720, %v651
      %v4035 = vmax.f32 %v1721, %v652
      %v4036 = vmax.f32 %v1722, %v653
      %v4037 = vmax.f32 %v1723, %v654
      %v4038 = vmax.f32 %v1724, %v655
      %v4039 = vmax.f32 %v1725, %v656
      %v4040 = vmax.f32 %v1726, %v657
      %v4041 = vmax.f32 %v1727, %v658
      %v4042 = vmax.f32 %v1728, %v659
      %v4043 = vmax.f32 %v1729, %v660
      %v4044 = vmax.f32 %v1730, %v661
      %v4045 = vmax.f32 %v1731, %v662
      %v4046 = vmax.f32 %v1732, %v663
      %v4047 = vmax.f32 %v1733, %v664
      %v4048 = vmax.f32 %v4016, %v2452
      %v4049 = vmax.f32 %v4017, %v2453
      %v4050 = vmax.f32 %v4018, %v2454
      %v4051 = vmax.f32 %v4019, %v2455
      %v4052 = vmax.f32 %v4020, %v2456
      %v4053 = vmax.f32 %v4021, %v2457
      %v4054 = vmax.f32 %v4022, %v2458
      %v4055 = vmax.f32 %v4023, %v2459
      %v4056 = vmax.f32 %v4024, %v2460
      %v4057 = vmax.f32 %v4025, %v2461
      %v4058 = vmax.f32 %v4026, %v2462
      %v4059 = vmax.f32 %v4027, %v2463
      %v4060 = vmax.f32 %v4028, %v2464
      %v4061 = vmax.f32 %v4029, %v2465
      %v4062 = vmax.f32 %v4030, %v2466
      %v4063 = vmax.f32 %v4031, %v2467
      %v4064 = vmax.f32 %v4032, %v2468
      %v4065 = vmax.f32 %v4033, %v2469
      %v4066 = vmax.f32 %v4034, %v2470
      %v4067 = vmax.f32 %v4035, %v2471
      %v4068 = vmax.f32 %v4036, %v2472
      %v4069 = vmax.f32 %v4037, %v2473
      %v4070 = vmax.f32 %v4038, %v2474
      %v4071 = vmax.f32 %v4039, %v2475
      %v4072 = vmax.f32 %v4040, %v2476
      %v4073 = vmax.f32 %v4041, %v2477
      %v4074 = vmax.f32 %v4042, %v2478
      %v4075 = vmax.f32 %v4043, %v2479
      %v4076 = vmax.f32 %v4044, %v2480
      %v4077 = vmax.f32 %v4045, %v2481
      %v4078 = vmax.f32 %v4046, %v2482
      %v4079 = vmax.f32 %v4047, %v2483
      %v4080 = vlaneseq
      %v4081 = vshrl.u32 %v4080, 7
      %v4082 = vsub.s32 2, %v4081
      %v4083 = vrot.slane %v201, %v4082
      %v4084 = vadd.f32 %v3984, %v4083
      %v4085 = vadd.f32 %v3985, %v4083
      %v4086 = vadd.f32 %v3986, %v4083
      %v4087 = vadd.f32 %v3987, %v4083
      %v4088 = vadd.f32 %v3988, %v4083
      %v4089 = vadd.f32 %v3989, %v4083
      %v4090 = vadd.f32 %v3990, %v4083
      %v4091 = vadd.f32 %v3991, %v4083
      %v4092 = vadd.f32 %v3992, %v4083
      %v4093 = vadd.f32 %v3993, %v4083
      %v4094 = vadd.f32 %v3994, %v4083
      %v4095 = vadd.f32 %v3995, %v4083
      %v4096 = vadd.f32 %v3996, %v4083
      %v4097 = vadd.f32 %v3997, %v4083
      %v4098 = vadd.f32 %v3998, %v4083
      %v4099 = vadd.f32 %v3999, %v4083
      %v4100 = vadd.f32 %v4000, %v4083
      %v4101 = vadd.f32 %v4001, %v4083
      %v4102 = vadd.f32 %v4002, %v4083
      %v4103 = vadd.f32 %v4003, %v4083
      %v4104 = vadd.f32 %v4004, %v4083
      %v4105 = vadd.f32 %v4005, %v4083
      %v4106 = vadd.f32 %v4006, %v4083
      %v4107 = vadd.f32 %v4007, %v4083
      %v4108 = vadd.f32 %v4008, %v4083
      %v4109 = vadd.f32 %v4009, %v4083
      %v4110 = vadd.f32 %v4010, %v4083
      %v4111 = vadd.f32 %v4011, %v4083
      %v4112 = vadd.f32 %v4012, %v4083
      %v4113 = vadd.f32 %v4013, %v4083
      %v4114 = vadd.f32 %v4014, %v4083
      %v4115 = vadd.f32 %v4015, %v4083
      %v4116 = vlaneseq
      %v4117 = vshrl.u32 %v4116, 7
      %v4118 = vsub.s32 3, %v4117
      %v4119 = vrot.slane %v201, %v4118
      %v4120 = vmul.f32 %v4048, %v4119
      %v4121 = vmul.f32 %v4049, %v4119
      %v4122 = vmul.f32 %v4050, %v4119
      %v4123 = vmul.f32 %v4051, %v4119
      %v4124 = vmul.f32 %v4052, %v4119
      %v4125 = vmul.f32 %v4053, %v4119
      %v4126 = vmul.f32 %v4054, %v4119
      %v4127 = vmul.f32 %v4055, %v4119
      %v4128 = vmul.f32 %v4056, %v4119
      %v4129 = vmul.f32 %v4057, %v4119
      %v4130 = vmul.f32 %v4058, %v4119
      %v4131 = vmul.f32 %v4059, %v4119
      %v4132 = vmul.f32 %v4060, %v4119
      %v4133 = vmul.f32 %v4061, %v4119
      %v4134 = vmul.f32 %v4062, %v4119
      %v4135 = vmul.f32 %v4063, %v4119
      %v4136 = vmul.f32 %v4064, %v4119
      %v4137 = vmul.f32 %v4065, %v4119
      %v4138 = vmul.f32 %v4066, %v4119
      %v4139 = vmul.f32 %v4067, %v4119
      %v4140 = vmul.f32 %v4068, %v4119
      %v4141 = vmul.f32 %v4069, %v4119
      %v4142 = vmul.f32 %v4070, %v4119
      %v4143 = vmul.f32 %v4071, %v4119
      %v4144 = vmul.f32 %v4072, %v4119
      %v4145 = vmul.f32 %v4073, %v4119
      %v4146 = vmul.f32 %v4074, %v4119
      %v4147 = vmul.f32 %v4075, %v4119
      %v4148 = vmul.f32 %v4076, %v4119
      %v4149 = vmul.f32 %v4077, %v4119
      %v4150 = vmul.f32 %v4078, %v4119
      %v4151 = vmul.f32 %v4079, %v4119
      %v4152 = vadd.f32 %v4084, %v4120
      %v4153 = vadd.f32 %v4085, %v4121
      %v4154 = vadd.f32 %v4086, %v4122
      %v4155 = vadd.f32 %v4087, %v4123
      %v4156 = vadd.f32 %v4088, %v4124
      %v4157 = vadd.f32 %v4089, %v4125
      %v4158 = vadd.f32 %v4090, %v4126
      %v4159 = vadd.f32 %v4091, %v4127
      %v4160 = vadd.f32 %v4092, %v4128
      %v4161 = vadd.f32 %v4093, %v4129
      %v4162 = vadd.f32 %v4094, %v4130
      %v4163 = vadd.f32 %v4095, %v4131
      %v4164 = vadd.f32 %v4096, %v4132
      %v4165 = vadd.f32 %v4097, %v4133
      %v4166 = vadd.f32 %v4098, %v4134
      %v4167 = vadd.f32 %v4099, %v4135
      %v4168 = vadd.f32 %v4100, %v4136
      %v4169 = vadd.f32 %v4101, %v4137
      %v4170 = vadd.f32 %v4102, %v4138
      %v4171 = vadd.f32 %v4103, %v4139
      %v4172 = vadd.f32 %v4104, %v4140
      %v4173 = vadd.f32 %v4105, %v4141
      %v4174 = vadd.f32 %v4106, %v4142
      %v4175 = vadd.f32 %v4107, %v4143
      %v4176 = vadd.f32 %v4108, %v4144
      %v4177 = vadd.f32 %v4109, %v4145
      %v4178 = vadd.f32 %v4110, %v4146
      %v4179 = vadd.f32 %v4111, %v4147
      %v4180 = vadd.f32 %v4112, %v4148
      %v4181 = vadd.f32 %v4113, %v4149
      %v4182 = vadd.f32 %v4114, %v4150
      %v4183 = vadd.f32 %v4115, %v4151
      %v4184 = vlaneseq
      %v4185 = vshrl.u32 %v4184, 7
      %v4186 = vsub.s32 4, %v4185
      %v4187 = vrot.slane %v201, %v4186
      %v4188 = vadd.f32 %v4152, %v4187
      %v4189 = vadd.f32 %v4153, %v4187
      %v4190 = vadd.f32 %v4154, %v4187
      %v4191 = vadd.f32 %v4155, %v4187
      %v4192 = vadd.f32 %v4156, %v4187
      %v4193 = vadd.f32 %v4157, %v4187
      %v4194 = vadd.f32 %v4158, %v4187
      %v4195 = vadd.f32 %v4159, %v4187
      %v4196 = vadd.f32 %v4160, %v4187
      %v4197 = vadd.f32 %v4161, %v4187
      %v4198 = vadd.f32 %v4162, %v4187
      %v4199 = vadd.f32 %v4163, %v4187
      %v4200 = vadd.f32 %v4164, %v4187
      %v4201 = vadd.f32 %v4165, %v4187
      %v4202 = vadd.f32 %v4166, %v4187
      %v4203 = vadd.f32 %v4167, %v4187
      %v4204 = vadd.f32 %v4168, %v4187
      %v4205 = vadd.f32 %v4169, %v4187
      %v4206 = vadd.f32 %v4170, %v4187
      %v4207 = vadd.f32 %v4171, %v4187
      %v4208 = vadd.f32 %v4172, %v4187
      %v4209 = vadd.f32 %v4173, %v4187
      %v4210 = vadd.f32 %v4174, %v4187
      %v4211 = vadd.f32 %v4175, %v4187
      %v4212 = vadd.f32 %v4176, %v4187
      %v4213 = vadd.f32 %v4177, %v4187
      %v4214 = vadd.f32 %v4178, %v4187
      %v4215 = vadd.f32 %v4179, %v4187
      %v4216 = vadd.f32 %v4180, %v4187
      %v4217 = vadd.f32 %v4181, %v4187
      %v4218 = vadd.f32 %v4182, %v4187
      %v4219 = vadd.f32 %v4183, %v4187
      %v4220 = vlaneseq
      %v4221 = vshrl.u32 %v4220, 7
      %v4222 = vsub.s32 5, %v4221
      %v4223 = vrot.slane %v201, %v4222
      %v4224 = vmul.f32 %v633, %v4223
      %v4225 = vmul.f32 %v634, %v4223
      %v4226 = vmul.f32 %v635, %v4223
      %v4227 = vmul.f32 %v636, %v4223
      %v4228 = vmul.f32 %v637, %v4223
      %v4229 = vmul.f32 %v638, %v4223
      %v4230 = vmul.f32 %v639, %v4223
      %v4231 = vmul.f32 %v640, %v4223
      %v4232 = vmul.f32 %v641, %v4223
      %v4233 = vmul.f32 %v642, %v4223
      %v4234 = vmul.f32 %v643, %v4223
      %v4235 = vmul.f32 %v644, %v4223
      %v4236 = vmul.f32 %v645, %v4223
      %v4237 = vmul.f32 %v646, %v4223
      %v4238 = vmul.f32 %v647, %v4223
      %v4239 = vmul.f32 %v648, %v4223
      %v4240 = vmul.f32 %v649, %v4223
      %v4241 = vmul.f32 %v650, %v4223
      %v4242 = vmul.f32 %v651, %v4223
      %v4243 = vmul.f32 %v652, %v4223
      %v4244 = vmul.f32 %v653, %v4223
      %v4245 = vmul.f32 %v654, %v4223
      %v4246 = vmul.f32 %v655, %v4223
      %v4247 = vmul.f32 %v656, %v4223
      %v4248 = vmul.f32 %v657, %v4223
      %v4249 = vmul.f32 %v658, %v4223
      %v4250 = vmul.f32 %v659, %v4223
      %v4251 = vmul.f32 %v660, %v4223
      %v4252 = vmul.f32 %v661, %v4223
      %v4253 = vmul.f32 %v662, %v4223
      %v4254 = vmul.f32 %v663, %v4223
      %v4255 = vmul.f32 %v664, %v4223
      %v4256 = vadd.f32 %v4188, %v4224
      %v4257 = vadd.f32 %v4189, %v4225
      %v4258 = vadd.f32 %v4190, %v4226
      %v4259 = vadd.f32 %v4191, %v4227
      %v4260 = vadd.f32 %v4192, %v4228
      %v4261 = vadd.f32 %v4193, %v4229
      %v4262 = vadd.f32 %v4194, %v4230
      %v4263 = vadd.f32 %v4195, %v4231
      %v4264 = vadd.f32 %v4196, %v4232
      %v4265 = vadd.f32 %v4197, %v4233
      %v4266 = vadd.f32 %v4198, %v4234
      %v4267 = vadd.f32 %v4199, %v4235
      %v4268 = vadd.f32 %v4200, %v4236
      %v4269 = vadd.f32 %v4201, %v4237
      %v4270 = vadd.f32 %v4202, %v4238
      %v4271 = vadd.f32 %v4203, %v4239
      %v4272 = vadd.f32 %v4204, %v4240
      %v4273 = vadd.f32 %v4205, %v4241
      %v4274 = vadd.f32 %v4206, %v4242
      %v4275 = vadd.f32 %v4207, %v4243
      %v4276 = vadd.f32 %v4208, %v4244
      %v4277 = vadd.f32 %v4209, %v4245
      %v4278 = vadd.f32 %v4210, %v4246
      %v4279 = vadd.f32 %v4211, %v4247
      %v4280 = vadd.f32 %v4212, %v4248
      %v4281 = vadd.f32 %v4213, %v4249
      %v4282 = vadd.f32 %v4214, %v4250
      %v4283 = vadd.f32 %v4215, %v4251
      %v4284 = vadd.f32 %v4216, %v4252
      %v4285 = vadd.f32 %v4217, %v4253
      %v4286 = vadd.f32 %v4218, %v4254
      %v4287 = vadd.f32 %v4219, %v4255
      %4288 = vst.msk [vmem:[%s199] sm:$0xff] %vm665, %v4256
      %4289 = vst.msk [vmem:[%s199 + $0x8] sm:$0xff] %vm665, %v4257
      %4290 = vst.msk [vmem:[%s199 + $0x10] sm:$0xff] %vm665, %v4258
      %4291 = vst.msk [vmem:[%s199 + $0x18] sm:$0xff] %vm665, %v4259
      %4292 = vst.msk [vmem:[%s199 + $0x20] sm:$0xff] %vm665, %v4260
      %4293 = vst.msk [vmem:[%s199 + $0x28] sm:$0xff] %vm665, %v4261
      %4294 = vst.msk [vmem:[%s199 + $0x30] sm:$0xff] %vm665, %v4262
      %4295 = vst.msk [vmem:[%s199 + $0x38] sm:$0xff] %vm665, %v4263
      %4296 = vst.msk [vmem:[%s199 + $0x40] sm:$0xff] %vm665, %v4264
      %4297 = vst.msk [vmem:[%s199 + $0x48] sm:$0xff] %vm665, %v4265
      %4298 = vst.msk [vmem:[%s199 + $0x50] sm:$0xff] %vm665, %v4266
      %4299 = vst.msk [vmem:[%s199 + $0x58] sm:$0xff] %vm665, %v4267
      %4300 = vst.msk [vmem:[%s199 + $0x60] sm:$0xff] %vm665, %v4268
      %4301 = vst.msk [vmem:[%s199 + $0x68] sm:$0xff] %vm665, %v4269
      %4302 = vst.msk [vmem:[%s199 + $0x70] sm:$0xff] %vm665, %v4270
      %4303 = vst.msk [vmem:[%s199 + $0x78] sm:$0xff] %vm665, %v4271
      %4304 = vst.msk [vmem:[%s199 + $0x80] sm:$0xff] %vm665, %v4272
      %4305 = vst.msk [vmem:[%s199 + $0x88] sm:$0xff] %vm665, %v4273
      %4306 = vst.msk [vmem:[%s199 + $0x90] sm:$0xff] %vm665, %v4274
      %4307 = vst.msk [vmem:[%s199 + $0x98] sm:$0xff] %vm665, %v4275
      %4308 = vst.msk [vmem:[%s199 + $0xa0] sm:$0xff] %vm665, %v4276
      %4309 = vst.msk [vmem:[%s199 + $0xa8] sm:$0xff] %vm665, %v4277
      %4310 = vst.msk [vmem:[%s199 + $0xb0] sm:$0xff] %vm665, %v4278
      %4311 = vst.msk [vmem:[%s199 + $0xb8] sm:$0xff] %vm665, %v4279
      %4312 = vst.msk [vmem:[%s199 + $0xc0] sm:$0xff] %vm665, %v4280
      %4313 = vst.msk [vmem:[%s199 + $0xc8] sm:$0xff] %vm665, %v4281
      %4314 = vst.msk [vmem:[%s199 + $0xd0] sm:$0xff] %vm665, %v4282
      %4315 = vst.msk [vmem:[%s199 + $0xd8] sm:$0xff] %vm665, %v4283
      %4316 = vst.msk [vmem:[%s199 + $0xe0] sm:$0xff] %vm665, %v4284
      %4317 = vst.msk [vmem:[%s199 + $0xe8] sm:$0xff] %vm665, %v4285
      %4318 = vst.msk [vmem:[%s199 + $0xf0] sm:$0xff] %vm665, %v4286
      %4319 = vst.msk [vmem:[%s199 + $0xf8] sm:$0xff] %vm665, %v4287
      %s4320 = smul.u32 32, %s15
      %p4321 = scmp.lt.s32.totalorder %s4320, 63
      %s4322 = scalar_select %p4321, %s4320, 63
      %s4323 = smul.addr %s4322, 8
      %s4324 = scalar_lea.vmem %s4, %s4323
      // Predicated region
      $region37: #{tpu_custom_call.1} parent=35 // pred_check
        %p4325 = pneg %p122
      $region38: #{tpu_custom_call.1} parent=35 // pred_check_branch
        %4327 = sbr.rel (%p4325) target = $region40
      $region39: #{tpu_custom_call.1} parent=35 // pred_region
        %s4328 = smul.u32 32, %s15
      $region40: #{tpu_custom_call.1} parent=35 // pred_fallthru
        _
    $region36: #{tpu_custom_call.1} parent=5 // pred_fallthru
      _
    %p4329 = scmp.le.s32.totalorder 2, %s10
    // Predicated region
    $region41: #{tpu_custom_call.1} parent=5 // pred_check
      %p4330 = pneg %p4329
    $region42: #{tpu_custom_call.1} parent=5 // pred_check_branch
      %4332 = sbr.rel (%p4330) target = $region44
    $region43: #{tpu_custom_call.1} parent=5 // pred_region
      %s4333 = ssub.s32 %s10, 2
      // Predicated region
      $region45: #{tpu_custom_call.1} parent=43 // pred_check
        %p4334 = pneg %p128
      $region46: #{tpu_custom_call.1} parent=43 // pred_check_branch
        %4336 = sbr.rel (%p4334) target = $region48
      $region47: #{tpu_custom_call.1} parent=43 // pred_region
        %s4337 = smul.u32 32, %s16
        %p4338 = scmp.lt.s32.totalorder %s4337, 63
        %s4339 = scalar_select %p4338, %s4337, 63
        %s4340 = smul.addr %s4339, 8
        %s4341 = scalar_lea.vmem %s4, %s4340
      $region48: #{tpu_custom_call.1} parent=43 // pred_fallthru
        _
    $region44: #{tpu_custom_call.1} parent=5 // pred_fallthru
      _
  $region6: #{tpu_custom_call.1} parent=0 // loop_footer
    %s14 = sadd.s32 1, %s10
  $region7: #{tpu_custom_call.1} parent=0 // loop_footer_branch
    %9 = sbr.rel target = $region3
  $region8: #{tpu_custom_call.1} parent=0 // loop_exit
    _

</llo_original>
